<compile_context>
chip_gen: v7x
topology: tpu7x:2x2x1
jax: 0.10.0
libtpu: 0.0.40
codegen_flags: <defaults>
</compile_context>

<pallas_src>
import functools

import numpy as np
import jax
import jax.numpy as jnp
from jax.experimental import pallas as pl
from jax.experimental.pallas import tpu as pltpu


def _round_up(x, m):
    return (x + m - 1) // m * m


def _pick_tm(m_pad):
    """Largest row tile (<=512) that still leaves >=2 tiles for v7x's 2 TCs."""
    for tm in (512, 256, 128):
        if m_pad % tm == 0 and m_pad // tm >= 2:
            return tm
    return 128  # single-tile fallback (m_pad == 128)


def _pick_tn(n_pad):
    if n_pad <= 512:
        return n_pad
    for tn in (512, 256, 128):
        if n_pad % tn == 0:
            return tn
    return 128


# ----------------------------------------------------------------------------
# Pallas kernel: whole-K matmul (bf16 -> f32) + bias + optional residual + ReLU
# ----------------------------------------------------------------------------
def _fused_matmul_bias_kernel(*refs, relu, has_residual):
    if has_residual:
        x_ref, w_ref, b_ref, r_ref, o_ref = refs
    else:
        x_ref, w_ref, b_ref, o_ref = refs
        r_ref = None

    y = jnp.dot(x_ref[...], w_ref[...], preferred_element_type=jnp.float32)
    y = y + b_ref[...]
    if has_residual:
        y = y + r_ref[...].astype(jnp.float32)
    if relu:
        y = jnp.maximum(y, 0.0)
    o_ref[...] = y.astype(o_ref.dtype)


def fused_matmul_bias(x_mat, wb, residual=None, relu=False,
                      out_dtype=jnp.bfloat16):
    """out = maybe_relu(x_mat @ w_packed + bias [+ residual]).

    `wb` is a pre-packed dict: bf16 weight (K_pad, N_pad) with BN scale folded,
    f32 bias (1, N_pad), plus the logical K / Cout sizes.
    """
    M, K = x_mat.shape
    assert K == wb["k"], (K, wb["k"])
    w_pad, bias_pad, cout = wb["w"], wb["b"], wb["cout"]
    K_pad, N_pad = w_pad.shape

    M_pad = _round_up(M, 128)
    TM = _pick_tm(M_pad)
    TN = _pick_tn(N_pad)
    assert M_pad % TM == 0 and N_pad % TN == 0 and K_pad % 128 == 0

    xp = jnp.pad(x_mat.astype(jnp.bfloat16), ((0, M_pad - M), (0, K_pad - K)))

    in_specs = [
        pl.BlockSpec((TM, K_pad), lambda i, j: (i, 0)),   # whole-K row panel
        pl.BlockSpec((K_pad, TN), lambda i, j: (0, j)),   # whole-K weight panel
        pl.BlockSpec((1, TN), lambda i, j: (0, j)),       # bias
    ]
    args = [xp, w_pad, bias_pad]

    has_residual = residual is not None
    if has_residual:
        rp = jnp.pad(residual.astype(jnp.bfloat16),
                     ((0, M_pad - M), (0, N_pad - cout)))
        in_specs.append(pl.BlockSpec((TM, TN), lambda i, j: (i, j)))
        args.append(rp)

    kernel = functools.partial(_fused_matmul_bias_kernel, relu=relu,
                               has_residual=has_residual)
    out = pl.pallas_call(
        kernel,
        out_shape=jax.ShapeDtypeStruct((M_pad, N_pad), out_dtype),
        grid=(M_pad // TM, N_pad // TN),
        in_specs=in_specs,
        out_specs=pl.BlockSpec((TM, TN), lambda i, j: (i, j)),
        compiler_params=pltpu.CompilerParams(
            dimension_semantics=("parallel", "parallel"),
            vmem_limit_bytes=32 * 1024 * 1024),
    )(*args)
    return out[:M, :cout]


# ----------------------------------------------------------------------------
# Plain-JAX glue: im2col (TODO: fuse into kernel DMA)
# ----------------------------------------------------------------------------
def im2col_3x3(x, stride):
    """x: (N, H, W, C) NHWC, 3x3 conv, padding=1. Returns (N*Ho*Wo, 9*C)."""
    N, H, W, C = x.shape
    xp = jnp.pad(x, ((0, 0), (1, 1), (1, 1), (0, 0)))
    Ho = (H + 2 - 3) // stride + 1
    Wo = (W + 2 - 3) // stride + 1
    cols = []
    for kh in range(3):
        for kw in range(3):
            cols.append(xp[:, kh:kh + stride * (Ho - 1) + 1:stride,
                              kw:kw + stride * (Wo - 1) + 1:stride, :])
    patches = jnp.concatenate(cols, axis=-1)  # (N, Ho, Wo, 9*C), (kh,kw,c)
    return patches.reshape(N * Ho * Wo, 9 * C), (N, Ho, Wo)


# ----------------------------------------------------------------------------
# One-time weight packing: fold BN scale into weights, transpose, pad, cast
# ----------------------------------------------------------------------------
def _fold_conv_bn(w_oihw, bn_p, eps=1e-5):
    """Fold eval-mode BN into conv weights -> ((K, Cout) f32 mat, (Cout,) bias)."""
    g, b, m, v = bn_p
    scale = (g / jnp.sqrt(v + eps)).astype(jnp.float32)
    bias = (b - m * scale).astype(jnp.float32)
    cout, cin, kh, kw = w_oihw.shape
    w_mat = jnp.transpose(w_oihw, (2, 3, 1, 0)).reshape(kh * kw * cin, cout)
    return (w_mat.astype(jnp.float32) * scale[None, :]), bias


def _pack(w_mat_f32, bias_f32):
    K, cout = w_mat_f32.shape
    K_pad = _round_up(K, 128)
    N_pad = _round_up(cout, 128)
    w = jnp.pad(w_mat_f32, ((0, K_pad - K), (0, N_pad - cout))).astype(jnp.bfloat16)
    b = jnp.pad(bias_f32.reshape(1, -1).astype(jnp.float32),
                ((0, 0), (0, N_pad - cout)))
    return {"w": w, "b": b, "cout": int(cout), "k": int(K)}


def prepare_packed_params(params, eps=1e-5):
    """Run once: fold/transpose/pad/cast every conv+BN into MXU-ready matrices."""
    packed = {"stem": _pack(*_fold_conv_bn(params["conv1_w"], params["bn1"], eps)),
              "blocks": []}
    for bp in params["blocks"]:
        cin, cout, s = bp["w1"].shape[1], bp["w1"].shape[0], bp["stride"]
        pb = {"stride": s,
              "conv1": _pack(*_fold_conv_bn(bp["w1"], bp["bn1"], eps))}
        w2, b2 = _fold_conv_bn(bp["w2"], bp["bn2"], eps)
        if s != 1 or cin != cout:
            # Fold the 1x1 shortcut into conv2 along K: [w2 ; ws], bias b2+bs.
            ws, bs = _fold_conv_bn(bp["ws"], bp["bns"], eps)       # (Cin, Cout)
            pb["conv2"] = _pack(jnp.concatenate([w2, ws], axis=0), b2 + bs)
            pb["fold_shortcut"] = True
        else:
            pb["conv2"] = _pack(w2, b2)
            pb["fold_shortcut"] = False
        packed["blocks"].append(pb)
    packed["fc_w"] = params["fc_w"].astype(jnp.float32)
    packed["fc_b"] = params["fc_b"].astype(jnp.float32)
    return packed


# ----------------------------------------------------------------------------
# Forward pass (Pallas-backed convolutions)
# ----------------------------------------------------------------------------
def conv_bn_packed(x_nhwc, wb, stride, relu, residual=None, extra_cols=None):
    x_mat, (n, ho, wo) = im2col_3x3(x_nhwc, stride)
    if extra_cols is not None:
        x_mat = jnp.concatenate([x_mat, extra_cols.astype(x_mat.dtype)], axis=1)
    out = fused_matmul_bias(x_mat, wb, residual=residual, relu=relu)
    return out.reshape(n, ho, wo, wb["cout"])


def basic_block_forward(x_nhwc, pb):
    """BasicBlock: conv3x3-bn-relu -> conv3x3-bn (+shortcut) -> relu."""
    N, H, W, Cin = x_nhwc.shape
    stride = pb["stride"]

    out1 = conv_bn_packed(x_nhwc, pb["conv1"], stride, relu=True)
    _, Ho, Wo, Cout = out1.shape

    if pb["fold_shortcut"]:
        # Downsample path folded into the conv2 matmul via K-concatenation.
        xs = x_nhwc[:, ::stride, ::stride, :].reshape(N * Ho * Wo, Cin)
        out = conv_bn_packed(out1, pb["conv2"], 1, relu=True, extra_cols=xs)
    else:
        # Identity shortcut: stream it as the fused residual input.
        res = x_nhwc.reshape(N * Ho * Wo, Cout)
        out = conv_bn_packed(out1, pb["conv2"], 1, relu=True, residual=res)
    return out


def resnet_forward(x_nchw, packed):
    """Full ResNet forward (Pallas-backed). x_nchw: (N, 3, H, W) f32."""
    x = jnp.transpose(x_nchw, (0, 2, 3, 1)).astype(jnp.bfloat16)  # NCHW -> NHWC
    out = conv_bn_packed(x, packed["stem"], stride=1, relu=True)  # stem
    for pb in packed["blocks"]:
        out = basic_block_forward(out, pb)
    pooled = out.astype(jnp.float32).mean(axis=(1, 2))            # global avg pool
    # FC layer is pure overhead as a padded Pallas call at (N<=128, 64, 10);
    # plain jnp.dot is faster and exact.
    return jnp.dot(pooled, packed["fc_w"].T) + packed["fc_b"]


# ----------------------------------------------------------------------------
# Pure-JAX reference (same fold / bf16 quantization points, lax.conv path)
# ----------------------------------------------------------------------------
def ref_forward(x_nchw, params, eps=1e-5):
    bf16 = jnp.bfloat16
    x = jnp.transpose(x_nchw, (0, 2, 3, 1)).astype(bf16)

    def conv_folded(x, w_oihw, bn_p, stride, pad):
        g, b, m, v = bn_p
        scale = g / jnp.sqrt(v + eps)
        bias = b - m * scale
        w = jnp.transpose(w_oihw, (2, 3, 1, 0)) * scale       # HWIO, scale on O
        y = jax.lax.conv_general_dilated(
            x, w.astype(bf16), (stride, stride), [(pad, pad), (pad, pad)],
            dimension_numbers=("NHWC", "HWIO", "NHWC"),
            preferred_element_type=jnp.float32)
        return y + bias

    out = jax.nn.relu(conv_folded(x, params["conv1_w"], params["bn1"], 1, 1)
                      ).astype(bf16)
    for bp in params["blocks"]:
        cin, cout, s = bp["w1"].shape[1], bp["w1"].shape[0], bp["stride"]
        h = jax.nn.relu(conv_folded(out, bp["w1"], bp["bn1"], s, 1)).astype(bf16)
        y = conv_folded(h, bp["w2"], bp["bn2"], 1, 1)
        if s != 1 or cin != cout:
            y = y + conv_folded(out, bp["ws"], bp["bns"], s, 0)
        else:
            y = y + out.astype(jnp.float32)
        out = jax.nn.relu(y).astype(bf16)
    pooled = out.astype(jnp.float32).mean(axis=(1, 2))
    return jnp.dot(pooled, params["fc_w"].T.astype(jnp.float32)) + params["fc_b"]


# ----------------------------------------------------------------------------
# Deterministic parameter construction (eval-mode BN running stats)
# ----------------------------------------------------------------------------
def init_params(key, layers=(1, 1, 1), num_classes=10):
    keys = iter(jax.random.split(key, 128))

    def conv_w(cout, cin, k):
        return 0.1 * jax.random.normal(next(keys), (cout, cin, k, k), jnp.float32)

    def bn_p(c):
        g = 1.0 + 0.1 * jax.random.normal(next(keys), (c,), jnp.float32)
        b = 0.1 * jax.random.normal(next(keys), (c,), jnp.float32)
        m = 0.1 * jax.random.normal(next(keys), (c,), jnp.float32)
        v = 1.0 + 0.5 * jax.random.uniform(next(keys), (c,), jnp.float32)
        return (g, b, m, v)

    params = {"conv1_w": conv_w(16, 3, 3), "bn1": bn_p(16), "blocks": []}
    in_planes = 16
    for planes, nblocks, stride in zip((16, 32, 64), layers, (1, 2, 2)):
        for s in [stride] + [1] * (nblocks - 1):
            bp = {"stride": s,
                  "w1": conv_w(planes, in_planes, 3), "bn1": bn_p(planes),
                  "w2": conv_w(planes, planes, 3), "bn2": bn_p(planes)}
            if s != 1 or in_planes != planes:
                bp["ws"] = conv_w(planes, in_planes, 1)
                bp["bns"] = bn_p(planes)
            params["blocks"].append(bp)
            in_planes = planes
    params["fc_w"] = 0.1 * jax.random.normal(next(keys), (num_classes, 64),
                                             jnp.float32)
    params["fc_b"] = 0.1 * jax.random.normal(next(keys), (num_classes,),
                                             jnp.float32)
    return params


# ----------------------------------------------------------------------------
if __name__ == "__main__":
    key = jax.random.PRNGKey(0)
    k_x, k_p = jax.random.split(key)

    N, C, H, W = 2, 3, 16, 16          # small CIFAR-like input
    x = jax.random.normal(k_x, (N, C, H, W), jnp.float32)
    params = init_params(k_p, layers=(1, 1, 1), num_classes=10)

    # One-time weight fold / transpose / pad / bf16 cast (not per forward call).
    packed = prepare_packed_params(params)

    fwd = jax.jit(lambda inp: resnet_forward(inp, packed))
    out = jax.block_until_ready(fwd(x))

    ref = ref_forward(x, params)
    np.testing.assert_allclose(np.asarray(out, np.float32),
                               np.asarray(ref, np.float32),
                               rtol=2e-2, atol=2e-2)

    print("KERNEL_OK")
</pallas_src>

<mosaic_0001>
module attributes {stable_mosaic.version = 11 : i64} {
  func.func @_fused_matmul_bias_kernel(%arg0: i32, %arg1: i32, %arg2: memref<256x128xbf16, #tpu.memory_space<vmem>>, %arg3: memref<128x128xbf16, #tpu.memory_space<vmem>>, %arg4: memref<1x128xf32, #tpu.memory_space<vmem>>, %arg5: memref<256x128xbf16, #tpu.memory_space<vmem>>) attributes {dimension_semantics = [#tpu.dimension_semantics<parallel>, #tpu.dimension_semantics<parallel>], iteration_bounds = array<i64: 2, 1>, scalar_prefetch = 0 : i64, scratch_operands = 0 : i64, tpu.core_type = #tpu.core_type<tc>, window_params = [{transform_indices = @transform_0, window_bounds = array<i64: 256, 128>}, {transform_indices = @transform_1, window_bounds = array<i64: 128, 128>}, {transform_indices = @transform_2, window_bounds = array<i64: 1, 128>}, {transform_indices = @transform_3, window_bounds = array<i64: 256, 128>}]} {
    %c0 = arith.constant 0 : index
    %c0_0 = arith.constant 0 : index
    %0 = vector.load %arg2[%c0, %c0_0] : memref<256x128xbf16, #tpu.memory_space<vmem>>, vector<256x128xbf16>
    %c0_1 = arith.constant 0 : index
    %c0_2 = arith.constant 0 : index
    %1 = vector.load %arg3[%c0_1, %c0_2] : memref<128x128xbf16, #tpu.memory_space<vmem>>, vector<128x128xbf16>
    %cst = arith.constant dense<0.000000e+00> : vector<256x128xf32>
    %2 = tpu.matmul %0, %1, %cst {dimension_numbers = #tpu.dot_dimension_numbers<[1], [0], [0], [1], [0, 0, 1, 1], [], []>} : vector<256x128xbf16>, vector<128x128xbf16>, vector<256x128xf32> -> vector<256x128xf32>
    %c0_3 = arith.constant 0 : index
    %c0_4 = arith.constant 0 : index
    %3 = vector.load %arg4[%c0_3, %c0_4] : memref<1x128xf32, #tpu.memory_space<vmem>>, vector<1x128xf32>
    %4 = vector.broadcast %3 : vector<1x128xf32> to vector<256x128xf32>
    %5 = arith.addf %2, %4 : vector<256x128xf32>
    %cst_5 = arith.constant 0.000000e+00 : f32
    %6 = vector.broadcast %cst_5 : f32 to vector<256x128xf32>
    %7 = arith.maximumf %5, %6 : vector<256x128xf32>
    %8 = arith.truncf %7 : vector<256x128xf32> to vector<256x128xbf16>
    %c0_6 = arith.constant 0 : index
    %c0_7 = arith.constant 0 : index
    %9 = vector.load %arg5[%c0_6, %c0_7] : memref<256x128xbf16, #tpu.memory_space<vmem>>, vector<256x128xbf16>
    tpu.vector_store %arg5[%c0_6, %c0_7], %8 {strides = array<i32>} : memref<256x128xbf16, #tpu.memory_space<vmem>>, vector<256x128xbf16>,
    return
  }
  func.func @transform_0(%arg0: i32, %arg1: i32) -> (i32, i32) {
    %c0_i32 = arith.constant 0 : i32
    %c0_i32_0 = arith.constant 0 : i32
    return %arg0, %c0_i32 : i32, i32
  }
  func.func @transform_1(%arg0: i32, %arg1: i32) -> (i32, i32) {
    %c0_i32 = arith.constant 0 : i32
    %c0_i32_0 = arith.constant 0 : i32
    return %c0_i32, %arg1 : i32, i32
  }
  func.func @transform_2(%arg0: i32, %arg1: i32) -> (i32, i32) {
    %c0_i32 = arith.constant 0 : i32
    %c0_i32_0 = arith.constant 0 : i32
    return %c0_i32, %arg1 : i32, i32
  }
  func.func @transform_3(%arg0: i32, %arg1: i32) -> (i32, i32) {
    %c0_i32 = arith.constant 0 : i32
    return %arg0, %arg1 : i32, i32
  }
}

module attributes {stable_mosaic.version = 11 : i64} {
  func.func @_fused_matmul_bias_kernel(%arg0: i32, %arg1: i32, %arg2: memref<256x256xbf16, #tpu.memory_space<vmem>>, %arg3: memref<256x128xbf16, #tpu.memory_space<vmem>>, %arg4: memref<1x128xf32, #tpu.memory_space<vmem>>, %arg5: memref<256x128xbf16, #tpu.memory_space<vmem>>) attributes {dimension_semantics = [#tpu.dimension_semantics<parallel>, #tpu.dimension_semantics<parallel>], iteration_bounds = array<i64: 2, 1>, scalar_prefetch = 0 : i64, scratch_operands = 0 : i64, tpu.core_type = #tpu.core_type<tc>, window_params = [{transform_indices = @transform_0, window_bounds = array<i64: 256, 256>}, {transform_indices = @transform_1, window_bounds = array<i64: 256, 128>}, {transform_indices = @transform_2, window_bounds = array<i64: 1, 128>}, {transform_indices = @transform_3, window_bounds = array<i64: 256, 128>}]} {
    %c0 = arith.constant 0 : index
    %c0_0 = arith.constant 0 : index
    %0 = vector.load %arg2[%c0, %c0_0] : memref<256x256xbf16, #tpu.memory_space<vmem>>, vector<256x256xbf16>
    %c0_1 = arith.constant 0 : index
    %c0_2 = arith.constant 0 : index
    %1 = vector.load %arg3[%c0_1, %c0_2] : memref<256x128xbf16, #tpu.memory_space<vmem>>, vector<256x128xbf16>
    %cst = arith.constant dense<0.000000e+00> : vector<256x128xf32>
    %2 = tpu.matmul %0, %1, %cst {dimension_numbers = #tpu.dot_dimension_numbers<[1], [0], [0], [1], [0, 0, 1, 1], [], []>} : vector<256x256xbf16>, vector<256x128xbf16>, vector<256x128xf32> -> vector<256x128xf32>
    %c0_3 = arith.constant 0 : index
    %c0_4 = arith.constant 0 : index
    %3 = vector.load %arg4[%c0_3, %c0_4] : memref<1x128xf32, #tpu.memory_space<vmem>>, vector<1x128xf32>
    %4 = vector.broadcast %3 : vector<1x128xf32> to vector<256x128xf32>
    %5 = arith.addf %2, %4 : vector<256x128xf32>
    %cst_5 = arith.constant 0.000000e+00 : f32
    %6 = vector.broadcast %cst_5 : f32 to vector<256x128xf32>
    %7 = arith.maximumf %5, %6 : vector<256x128xf32>
    %8 = arith.truncf %7 : vector<256x128xf32> to vector<256x128xbf16>
    %c0_6 = arith.constant 0 : index
    %c0_7 = arith.constant 0 : index
    %9 = vector.load %arg5[%c0_6, %c0_7] : memref<256x128xbf16, #tpu.memory_space<vmem>>, vector<256x128xbf16>
    tpu.vector_store %arg5[%c0_6, %c0_7], %8 {strides = array<i32>} : memref<256x128xbf16, #tpu.memory_space<vmem>>, vector<256x128xbf16>,
    return
  }
  func.func @transform_0(%arg0: i32, %arg1: i32) -> (i32, i32) {
    %c0_i32 = arith.constant 0 : i32
    %c0_i32_0 = arith.constant 0 : i32
    return %arg0, %c0_i32 : i32, i32
  }
  func.func @transform_1(%arg0: i32, %arg1: i32) -> (i32, i32) {
    %c0_i32 = arith.constant 0 : i32
    %c0_i32_0 = arith.constant 0 : i32
    return %c0_i32, %arg1 : i32, i32
  }
  func.func @transform_2(%arg0: i32, %arg1: i32) -> (i32, i32) {
    %c0_i32 = arith.constant 0 : i32
    %c0_i32_0 = arith.constant 0 : i32
    return %c0_i32, %arg1 : i32, i32
  }
  func.func @transform_3(%arg0: i32, %arg1: i32) -> (i32, i32) {
    %c0_i32 = arith.constant 0 : i32
    return %arg0, %arg1 : i32, i32
  }
}

module attributes {stable_mosaic.version = 11 : i64} {
  func.func @_fused_matmul_bias_kernel(%arg0: i32, %arg1: i32, %arg2: memref<256x256xbf16, #tpu.memory_space<vmem>>, %arg3: memref<256x128xbf16, #tpu.memory_space<vmem>>, %arg4: memref<1x128xf32, #tpu.memory_space<vmem>>, %arg5: memref<256x128xbf16, #tpu.memory_space<vmem>>, %arg6: memref<256x128xbf16, #tpu.memory_space<vmem>>) attributes {dimension_semantics = [#tpu.dimension_semantics<parallel>, #tpu.dimension_semantics<parallel>], iteration_bounds = array<i64: 2, 1>, scalar_prefetch = 0 : i64, scratch_operands = 0 : i64, tpu.core_type = #tpu.core_type<tc>, window_params = [{transform_indices = @transform_0, window_bounds = array<i64: 256, 256>}, {transform_indices = @transform_1, window_bounds = array<i64: 256, 128>}, {transform_indices = @transform_2, window_bounds = array<i64: 1, 128>}, {transform_indices = @transform_3, window_bounds = array<i64: 256, 128>}, {transform_indices = @transform_4, window_bounds = array<i64: 256, 128>}]} {
    %c0 = arith.constant 0 : index
    %c0_0 = arith.constant 0 : index
    %0 = vector.load %arg2[%c0, %c0_0] : memref<256x256xbf16, #tpu.memory_space<vmem>>, vector<256x256xbf16>
    %c0_1 = arith.constant 0 : index
    %c0_2 = arith.constant 0 : index
    %1 = vector.load %arg3[%c0_1, %c0_2] : memref<256x128xbf16, #tpu.memory_space<vmem>>, vector<256x128xbf16>
    %cst = arith.constant dense<0.000000e+00> : vector<256x128xf32>
    %2 = tpu.matmul %0, %1, %cst {dimension_numbers = #tpu.dot_dimension_numbers<[1], [0], [0], [1], [0, 0, 1, 1], [], []>} : vector<256x256xbf16>, vector<256x128xbf16>, vector<256x128xf32> -> vector<256x128xf32>
    %c0_3 = arith.constant 0 : index
    %c0_4 = arith.constant 0 : index
    %3 = vector.load %arg4[%c0_3, %c0_4] : memref<1x128xf32, #tpu.memory_space<vmem>>, vector<1x128xf32>
    %4 = vector.broadcast %3 : vector<1x128xf32> to vector<256x128xf32>
    %5 = arith.addf %2, %4 : vector<256x128xf32>
    %c0_5 = arith.constant 0 : index
    %c0_6 = arith.constant 0 : index
    %6 = vector.load %arg5[%c0_5, %c0_6] : memref<256x128xbf16, #tpu.memory_space<vmem>>, vector<256x128xbf16>
    %7 = arith.extf %6 : vector<256x128xbf16> to vector<256x128xf32>
    %8 = arith.addf %5, %7 : vector<256x128xf32>
    %cst_7 = arith.constant 0.000000e+00 : f32
    %9 = vector.broadcast %cst_7 : f32 to vector<256x128xf32>
    %10 = arith.maximumf %8, %9 : vector<256x128xf32>
    %11 = arith.truncf %10 : vector<256x128xf32> to vector<256x128xbf16>
    %c0_8 = arith.constant 0 : index
    %c0_9 = arith.constant 0 : index
    %12 = vector.load %arg6[%c0_8, %c0_9] : memref<256x128xbf16, #tpu.memory_space<vmem>>, vector<256x128xbf16>
    tpu.vector_store %arg6[%c0_8, %c0_9], %11 {strides = array<i32>} : memref<256x128xbf16, #tpu.memory_space<vmem>>, vector<256x128xbf16>,
    return
  }
  func.func @transform_0(%arg0: i32, %arg1: i32) -> (i32, i32) {
    %c0_i32 = arith.constant 0 : i32
    %c0_i32_0 = arith.constant 0 : i32
    return %arg0, %c0_i32 : i32, i32
  }
  func.func @transform_1(%arg0: i32, %arg1: i32) -> (i32, i32) {
    %c0_i32 = arith.constant 0 : i32
    %c0_i32_0 = arith.constant 0 : i32
    return %c0_i32, %arg1 : i32, i32
  }
  func.func @transform_2(%arg0: i32, %arg1: i32) -> (i32, i32) {
    %c0_i32 = arith.constant 0 : i32
    %c0_i32_0 = arith.constant 0 : i32
    return %c0_i32, %arg1 : i32, i32
  }
  func.func @transform_3(%arg0: i32, %arg1: i32) -> (i32, i32) {
    %c0_i32 = arith.constant 0 : i32
    return %arg0, %arg1 : i32, i32
  }
  func.func @transform_4(%arg0: i32, %arg1: i32) -> (i32, i32) {
    %c0_i32 = arith.constant 0 : i32
    return %arg0, %arg1 : i32, i32
  }
}

module attributes {stable_mosaic.version = 11 : i64} {
  func.func @_fused_matmul_bias_kernel(%arg0: i32, %arg1: i32, %arg2: memref<128x256xbf16, #tpu.memory_space<vmem>>, %arg3: memref<256x128xbf16, #tpu.memory_space<vmem>>, %arg4: memref<1x128xf32, #tpu.memory_space<vmem>>, %arg5: memref<128x128xbf16, #tpu.memory_space<vmem>>) attributes {dimension_semantics = [#tpu.dimension_semantics<parallel>, #tpu.dimension_semantics<parallel>], iteration_bounds = array<i64: 1, 1>, scalar_prefetch = 0 : i64, scratch_operands = 0 : i64, tpu.core_type = #tpu.core_type<tc>, window_params = [{transform_indices = @transform_0, window_bounds = array<i64: 128, 256>}, {transform_indices = @transform_1, window_bounds = array<i64: 256, 128>}, {transform_indices = @transform_2, window_bounds = array<i64: 1, 128>}, {transform_indices = @transform_3, window_bounds = array<i64: 128, 128>}]} {
    %c0 = arith.constant 0 : index
    %c0_0 = arith.constant 0 : index
    %0 = vector.load %arg2[%c0, %c0_0] : memref<128x256xbf16, #tpu.memory_space<vmem>>, vector<128x256xbf16>
    %c0_1 = arith.constant 0 : index
    %c0_2 = arith.constant 0 : index
    %1 = vector.load %arg3[%c0_1, %c0_2] : memref<256x128xbf16, #tpu.memory_space<vmem>>, vector<256x128xbf16>
    %cst = arith.constant dense<0.000000e+00> : vector<128x128xf32>
    %2 = tpu.matmul %0, %1, %cst {dimension_numbers = #tpu.dot_dimension_numbers<[1], [0], [0], [1], [0, 0, 1, 1], [], []>} : vector<128x256xbf16>, vector<256x128xbf16>, vector<128x128xf32> -> vector<128x128xf32>
    %c0_3 = arith.constant 0 : index
    %c0_4 = arith.constant 0 : index
    %3 = vector.load %arg4[%c0_3, %c0_4] : memref<1x128xf32, #tpu.memory_space<vmem>>, vector<1x128xf32>
    %4 = vector.broadcast %3 : vector<1x128xf32> to vector<128x128xf32>
    %5 = arith.addf %2, %4 : vector<128x128xf32>
    %cst_5 = arith.constant 0.000000e+00 : f32
    %6 = vector.broadcast %cst_5 : f32 to vector<128x128xf32>
    %7 = arith.maximumf %5, %6 : vector<128x128xf32>
    %8 = arith.truncf %7 : vector<128x128xf32> to vector<128x128xbf16>
    %c0_6 = arith.constant 0 : index
    %c0_7 = arith.constant 0 : index
    %9 = vector.load %arg5[%c0_6, %c0_7] : memref<128x128xbf16, #tpu.memory_space<vmem>>, vector<128x128xbf16>
    tpu.vector_store %arg5[%c0_6, %c0_7], %8 {strides = array<i32>} : memref<128x128xbf16, #tpu.memory_space<vmem>>, vector<128x128xbf16>,
    return
  }
  func.func @transform_0(%arg0: i32, %arg1: i32) -> (i32, i32) {
    %c0_i32 = arith.constant 0 : i32
    %c0_i32_0 = arith.constant 0 : i32
    return %arg0, %c0_i32 : i32, i32
  }
  func.func @transform_1(%arg0: i32, %arg1: i32) -> (i32, i32) {
    %c0_i32 = arith.constant 0 : i32
    %c0_i32_0 = arith.constant 0 : i32
    return %c0_i32, %arg1 : i32, i32
  }
  func.func @transform_2(%arg0: i32, %arg1: i32) -> (i32, i32) {
    %c0_i32 = arith.constant 0 : i32
    %c0_i32_0 = arith.constant 0 : i32
    return %c0_i32, %arg1 : i32, i32
  }
  func.func @transform_3(%arg0: i32, %arg1: i32) -> (i32, i32) {
    %c0_i32 = arith.constant 0 : i32
    return %arg0, %arg1 : i32, i32
  }
}

module attributes {stable_mosaic.version = 11 : i64} {
  func.func @_fused_matmul_bias_kernel(%arg0: i32, %arg1: i32, %arg2: memref<128x384xbf16, #tpu.memory_space<vmem>>, %arg3: memref<384x128xbf16, #tpu.memory_space<vmem>>, %arg4: memref<1x128xf32, #tpu.memory_space<vmem>>, %arg5: memref<128x128xbf16, #tpu.memory_space<vmem>>) attributes {dimension_semantics = [#tpu.dimension_semantics<parallel>, #tpu.dimension_semantics<parallel>], iteration_bounds = array<i64: 1, 1>, scalar_prefetch = 0 : i64, scratch_operands = 0 : i64, tpu.core_type = #tpu.core_type<tc>, window_params = [{transform_indices = @transform_0, window_bounds = array<i64: 128, 384>}, {transform_indices = @transform_1, window_bounds = array<i64: 384, 128>}, {transform_indices = @transform_2, window_bounds = array<i64: 1, 128>}, {transform_indices = @transform_3, window_bounds = array<i64: 128, 128>}]} {
    %c0 = arith.constant 0 : index
    %c0_0 = arith.constant 0 : index
    %0 = vector.load %arg2[%c0, %c0_0] : memref<128x384xbf16, #tpu.memory_space<vmem>>, vector<128x384xbf16>
    %c0_1 = arith.constant 0 : index
    %c0_2 = arith.constant 0 : index
    %1 = vector.load %arg3[%c0_1, %c0_2] : memref<384x128xbf16, #tpu.memory_space<vmem>>, vector<384x128xbf16>
    %cst = arith.constant dense<0.000000e+00> : vector<128x128xf32>
    %2 = tpu.matmul %0, %1, %cst {dimension_numbers = #tpu.dot_dimension_numbers<[1], [0], [0], [1], [0, 0, 1, 1], [], []>} : vector<128x384xbf16>, vector<384x128xbf16>, vector<128x128xf32> -> vector<128x128xf32>
    %c0_3 = arith.constant 0 : index
    %c0_4 = arith.constant 0 : index
    %3 = vector.load %arg4[%c0_3, %c0_4] : memref<1x128xf32, #tpu.memory_space<vmem>>, vector<1x128xf32>
    %4 = vector.broadcast %3 : vector<1x128xf32> to vector<128x128xf32>
    %5 = arith.addf %2, %4 : vector<128x128xf32>
    %cst_5 = arith.constant 0.000000e+00 : f32
    %6 = vector.broadcast %cst_5 : f32 to vector<128x128xf32>
    %7 = arith.maximumf %5, %6 : vector<128x128xf32>
    %8 = arith.truncf %7 : vector<128x128xf32> to vector<128x128xbf16>
    %c0_6 = arith.constant 0 : index
    %c0_7 = arith.constant 0 : index
    %9 = vector.load %arg5[%c0_6, %c0_7] : memref<128x128xbf16, #tpu.memory_space<vmem>>, vector<128x128xbf16>
    tpu.vector_store %arg5[%c0_6, %c0_7], %8 {strides = array<i32>} : memref<128x128xbf16, #tpu.memory_space<vmem>>, vector<128x128xbf16>,
    return
  }
  func.func @transform_0(%arg0: i32, %arg1: i32) -> (i32, i32) {
    %c0_i32 = arith.constant 0 : i32
    %c0_i32_0 = arith.constant 0 : i32
    return %arg0, %c0_i32 : i32, i32
  }
  func.func @transform_1(%arg0: i32, %arg1: i32) -> (i32, i32) {
    %c0_i32 = arith.constant 0 : i32
    %c0_i32_0 = arith.constant 0 : i32
    return %c0_i32, %arg1 : i32, i32
  }
  func.func @transform_2(%arg0: i32, %arg1: i32) -> (i32, i32) {
    %c0_i32 = arith.constant 0 : i32
    %c0_i32_0 = arith.constant 0 : i32
    return %c0_i32, %arg1 : i32, i32
  }
  func.func @transform_3(%arg0: i32, %arg1: i32) -> (i32, i32) {
    %c0_i32 = arith.constant 0 : i32
    return %arg0, %arg1 : i32, i32
  }
}

module attributes {stable_mosaic.version = 11 : i64} {
  func.func @_fused_matmul_bias_kernel(%arg0: i32, %arg1: i32, %arg2: memref<128x640xbf16, #tpu.memory_space<vmem>>, %arg3: memref<640x128xbf16, #tpu.memory_space<vmem>>, %arg4: memref<1x128xf32, #tpu.memory_space<vmem>>, %arg5: memref<128x128xbf16, #tpu.memory_space<vmem>>) attributes {dimension_semantics = [#tpu.dimension_semantics<parallel>, #tpu.dimension_semantics<parallel>], iteration_bounds = array<i64: 1, 1>, scalar_prefetch = 0 : i64, scratch_operands = 0 : i64, tpu.core_type = #tpu.core_type<tc>, window_params = [{transform_indices = @transform_0, window_bounds = array<i64: 128, 640>}, {transform_indices = @transform_1, window_bounds = array<i64: 640, 128>}, {transform_indices = @transform_2, window_bounds = array<i64: 1, 128>}, {transform_indices = @transform_3, window_bounds = array<i64: 128, 128>}]} {
    %c0 = arith.constant 0 : index
    %c0_0 = arith.constant 0 : index
    %0 = vector.load %arg2[%c0, %c0_0] : memref<128x640xbf16, #tpu.memory_space<vmem>>, vector<128x640xbf16>
    %c0_1 = arith.constant 0 : index
    %c0_2 = arith.constant 0 : index
    %1 = vector.load %arg3[%c0_1, %c0_2] : memref<640x128xbf16, #tpu.memory_space<vmem>>, vector<640x128xbf16>
    %cst = arith.constant dense<0.000000e+00> : vector<128x128xf32>
    %2 = tpu.matmul %0, %1, %cst {dimension_numbers = #tpu.dot_dimension_numbers<[1], [0], [0], [1], [0, 0, 1, 1], [], []>} : vector<128x640xbf16>, vector<640x128xbf16>, vector<128x128xf32> -> vector<128x128xf32>
    %c0_3 = arith.constant 0 : index
    %c0_4 = arith.constant 0 : index
    %3 = vector.load %arg4[%c0_3, %c0_4] : memref<1x128xf32, #tpu.memory_space<vmem>>, vector<1x128xf32>
    %4 = vector.broadcast %3 : vector<1x128xf32> to vector<128x128xf32>
    %5 = arith.addf %2, %4 : vector<128x128xf32>
    %cst_5 = arith.constant 0.000000e+00 : f32
    %6 = vector.broadcast %cst_5 : f32 to vector<128x128xf32>
    %7 = arith.maximumf %5, %6 : vector<128x128xf32>
    %8 = arith.truncf %7 : vector<128x128xf32> to vector<128x128xbf16>
    %c0_6 = arith.constant 0 : index
    %c0_7 = arith.constant 0 : index
    %9 = vector.load %arg5[%c0_6, %c0_7] : memref<128x128xbf16, #tpu.memory_space<vmem>>, vector<128x128xbf16>
    tpu.vector_store %arg5[%c0_6, %c0_7], %8 {strides = array<i32>} : memref<128x128xbf16, #tpu.memory_space<vmem>>, vector<128x128xbf16>,
    return
  }
  func.func @transform_0(%arg0: i32, %arg1: i32) -> (i32, i32) {
    %c0_i32 = arith.constant 0 : i32
    %c0_i32_0 = arith.constant 0 : i32
    return %arg0, %c0_i32 : i32, i32
  }
  func.func @transform_1(%arg0: i32, %arg1: i32) -> (i32, i32) {
    %c0_i32 = arith.constant 0 : i32
    %c0_i32_0 = arith.constant 0 : i32
    return %c0_i32, %arg1 : i32, i32
  }
  func.func @transform_2(%arg0: i32, %arg1: i32) -> (i32, i32) {
    %c0_i32 = arith.constant 0 : i32
    %c0_i32_0 = arith.constant 0 : i32
    return %c0_i32, %arg1 : i32, i32
  }
  func.func @transform_3(%arg0: i32, %arg1: i32) -> (i32, i32) {
    %c0_i32 = arith.constant 0 : i32
    return %arg0, %arg1 : i32, i32
  }
}

</mosaic_0001>

<llo_original>
// kernel: _lambda_.7
$region0: #{_lambda_.7}
  #allocation0 [shape = 'u32[]', space=smem, size = 0x4, offset = 0x4, fixed_abs, tag = 'smem constant byte address 0x4 - core index']
  #allocation1 [shape = 'u32[144,128]{1,0:T(1,128)}', space=vmem, size = 0x12000, scoped, tag = 'internal scratch']
  %s0 = inlined_call_operand.vmem [shape: bf16[512,128], index: 0, kind: input, shape index: {}]
  %s1 = inlined_call_operand.vmem [shape: bf16[128,128], index: 1, kind: input, shape index: {}]
  %s2 = inlined_call_operand.vmem [shape: f32[1,128], index: 2, kind: input, shape index: {}]
  %s3 = inlined_call_operand.vmem [shape: bf16[512,128], index: 3, kind: output, shape index: {}]
  %s4 = sld [smem:[#allocation0]]
  $region45: #{_lambda_.7} parent=0
    _
  %s6 = ssub.s32 1, %s4
  %s7 = scalar_select 0, %s6, %s4
  loop: start=0, step=1, limit=4
  $region2: #{_lambda_.7} parent=0 // loop_pre_header
    _
  $region3: #{_lambda_.7} parent=0 // loop_header
    %s9 = sphi 0, %s13
    %p10 = scmp.ge.s32.totalorder %s9, 4
    %s16 = sphi 0, %s28
    %s17 = sphi 0, %s24
    %s18 = sphi 0, %s16
    %s19 = sphi 0, %s17
    %s20 = sphi 0, %s18
    %s21 = sphi 0, %s19
    %s31 = sphi 0, %s33
    %s34 = sphi 0, %s31
    %s35 = sphi 0, %s34
    %s51 = sphi 0, %s35
    %s57 = sphi 0, %s59
    %s60 = sphi 0, %s57
    %s61 = sphi 0, %s60
    %s77 = sphi 0, %s61
    %s83 = sphi 0, %s85
    %s86 = sphi 0, %s83
    %s87 = sphi 0, %s86
    %s103 = sphi 0, %s87
    %s111 = sphi 0, %s113
    %s114 = sphi 0, %s111
    %s115 = sphi 0, %s114
    %s131 = sphi 0, %s115
  $region4: #{_lambda_.7} parent=0 // loop_header_branch
    %12 = sbr.rel (%p10) target = $region8
  $region5: #{_lambda_.7} parent=0 // loop_body
    %s14 = ssub.s32 %s9, 1
    %s15 = ssub.s32 %s9, 2
    %s22 = sadd.s32 1, %s17
    %p23 = scmp.ge.s32.totalorder %s22, 1
    %s24 = scalar_select %p23, 0, %s22
    %s25 = sadd.s32 1, %s16
    %s26 = scalar_select %p23, %s25, %s16
    %p27 = scmp.ge.s32.totalorder %s26, 2
    %s28 = scalar_select %p27, 0, %s26
    %s29 = ssub.s32 %s16, %s28
    %p30 = scmp.eq.s32.totalorder %s29, 0
    %s32 = sadd.s32 %s31, 1
    %s33 = scalar_select %p30, %s31, %s32
    %p36 = pneg %p30
    %p37 = scmp.eq.s32.totalorder %s9, 1
    %p38 = por %p36, %p37
    %p39 = scmp.ne.s32.totalorder %s31, %s34
    %p40 = scmp.eq.s32.totalorder %s9, 0
    %p41 = por %p39, %p40
    %p42 = scmp.ne.s32.totalorder %s31, %s34
    %p43 = scmp.eq.s32.totalorder %s14, 1
    %p44 = por %p42, %p43
    %p45 = scmp.ne.s32.totalorder %s34, %s35
    %p46 = scmp.eq.s32.totalorder %s14, 0
    %p47 = por %p45, %p46
    %p48 = scmp.ne.s32.totalorder %s34, %s35
    %p49 = scmp.eq.s32.totalorder %s15, 1
    %p50 = por %p48, %p49
    %p52 = scmp.ne.s32.totalorder %s35, %s51
    %p53 = scmp.eq.s32.totalorder %s15, 0
    %p54 = por %p52, %p53
    %s55 = ssub.s32 %s17, %s24
    %p56 = scmp.eq.s32.totalorder %s55, 0
    %s58 = sadd.s32 %s57, 1
    %s59 = scalar_select %p56, %s57, %s58
    %p62 = pneg %p56
    %p63 = scmp.eq.s32.totalorder %s9, 1
    %p64 = por %p62, %p63
    %p65 = scmp.ne.s32.totalorder %s57, %s60
    %p66 = scmp.eq.s32.totalorder %s9, 0
    %p67 = por %p65, %p66
    %p68 = scmp.ne.s32.totalorder %s57, %s60
    %p69 = scmp.eq.s32.totalorder %s14, 1
    %p70 = por %p68, %p69
    %p71 = scmp.ne.s32.totalorder %s60, %s61
    %p72 = scmp.eq.s32.totalorder %s14, 0
    %p73 = por %p71, %p72
    %p74 = scmp.ne.s32.totalorder %s60, %s61
    %p75 = scmp.eq.s32.totalorder %s15, 1
    %p76 = por %p74, %p75
    %p78 = scmp.ne.s32.totalorder %s61, %s77
    %p79 = scmp.eq.s32.totalorder %s15, 0
    %p80 = por %p78, %p79
    %s81 = ssub.s32 %s17, %s24
    %p82 = scmp.eq.s32.totalorder %s81, 0
    %s84 = sadd.s32 %s83, 1
    %s85 = scalar_select %p82, %s83, %s84
    %p88 = pneg %p82
    %p89 = scmp.eq.s32.totalorder %s9, 1
    %p90 = por %p88, %p89
    %p91 = scmp.ne.s32.totalorder %s83, %s86
    %p92 = scmp.eq.s32.totalorder %s9, 0
    %p93 = por %p91, %p92
    %p94 = scmp.ne.s32.totalorder %s83, %s86
    %p95 = scmp.eq.s32.totalorder %s14, 1
    %p96 = por %p94, %p95
    %p97 = scmp.ne.s32.totalorder %s86, %s87
    %p98 = scmp.eq.s32.totalorder %s14, 0
    %p99 = por %p97, %p98
    %p100 = scmp.ne.s32.totalorder %s86, %s87
    %p101 = scmp.eq.s32.totalorder %s15, 1
    %p102 = por %p100, %p101
    %p104 = scmp.ne.s32.totalorder %s87, %s103
    %p105 = scmp.eq.s32.totalorder %s15, 0
    %p106 = por %p104, %p105
    %s107 = ssub.s32 %s16, %s28
    %s108 = ssub.s32 %s17, %s24
    %s109 = sor.u32 %s107, %s108
    %p110 = scmp.eq.s32.totalorder %s109, 0
    %s112 = sadd.s32 %s111, 1
    %s113 = scalar_select %p110, %s111, %s112
    %p116 = pneg %p110
    %p117 = scmp.eq.s32.totalorder %s9, 1
    %p118 = por %p116, %p117
    %p119 = scmp.ne.s32.totalorder %s111, %s114
    %p120 = scmp.eq.s32.totalorder %s9, 0
    %p121 = por %p119, %p120
    %p122 = scmp.ne.s32.totalorder %s111, %s114
    %p123 = scmp.eq.s32.totalorder %s14, 1
    %p124 = por %p122, %p123
    %p125 = scmp.ne.s32.totalorder %s114, %s115
    %p126 = scmp.eq.s32.totalorder %s14, 0
    %p127 = por %p125, %p126
    %p128 = scmp.ne.s32.totalorder %s114, %s115
    %p129 = scmp.eq.s32.totalorder %s15, 1
    %p130 = por %p128, %p129
    %p132 = scmp.ne.s32.totalorder %s115, %s131
    %p133 = scmp.eq.s32.totalorder %s15, 0
    %p134 = por %p132, %p133
    %p135 = scmp.le.s32.totalorder 1, %s9
    %p136 = scmp.lt.s32.totalorder %s9, 3
    %p137 = pnand %p135, %p136
    %p138 = pneg %p137
    // Predicated region
    $region9: #{_lambda_.7} parent=5 // pred_check
      _
    $region10: #{_lambda_.7} parent=5 // pred_check_branch
      %140 = sbr.rel (%p137) target = $region12
    $region11: #{_lambda_.7} parent=5 // pred_region
      %s141 = ssub.s32 %s9, 1
      // Predicated region
      $region13: #{_lambda_.7} parent=11 // pred_check
        %p142 = pneg %p73
      $region14: #{_lambda_.7} parent=11 // pred_check_branch
        %144 = sbr.rel (%p142) target = $region16
      $region15: #{_lambda_.7} parent=11 // pred_region
        %p145 = scmp.lt.s32.totalorder %s19, 0
        %s146 = scalar_select %p145, %s19, 0
        %s147 = smul.addr %s146, 4
        %s148 = scalar_lea.vmem %s1, %s147
      $region16: #{_lambda_.7} parent=11 // pred_fallthru
        _
      // Predicated region
      $region17: #{_lambda_.7} parent=11 // pred_check
        %p149 = pneg %p99
      $region18: #{_lambda_.7} parent=11 // pred_check_branch
        %151 = sbr.rel (%p149) target = $region20
      $region19: #{_lambda_.7} parent=11 // pred_region
        %p152 = scmp.lt.s32.totalorder %s19, 0
        %s153 = scalar_select %p152, %s19, 0
        %s154 = scalar_lea.vmem %s2, %s153
      $region20: #{_lambda_.7} parent=11 // pred_fallthru
        _
    $region12: #{_lambda_.7} parent=5 // pred_fallthru
      _
    %p155 = scmp.lt.s32.totalorder %s9, 2
    // Predicated region
    $region21: #{_lambda_.7} parent=5 // pred_check
      %p156 = pneg %p155
    $region22: #{_lambda_.7} parent=5 // pred_check_branch
      %158 = sbr.rel (%p156) target = $region24
    $region23: #{_lambda_.7} parent=5 // pred_region
      // Predicated region
      $region25: #{_lambda_.7} parent=23 // pred_check
        %p159 = pneg %p41
      $region26: #{_lambda_.7} parent=23 // pred_check_branch
        %161 = sbr.rel (%p159) target = $region28
      $region27: #{_lambda_.7} parent=23 // pred_region
        %s162 = smul.u32 32, %s16
        %p163 = scmp.lt.s32.totalorder %s162, 63
        %s164 = scalar_select %p163, %s162, 63
        %s165 = smul.addr %s164, 4
        %s166 = scalar_lea.vmem %s0, %s165
        %s167 = smul.u32 32, %s16
      $region28: #{_lambda_.7} parent=23 // pred_fallthru
        _
    $region24: #{_lambda_.7} parent=5 // pred_fallthru
      _
    %p168 = scmp.le.s32.totalorder 1, %s9
    %p169 = scmp.lt.s32.totalorder %s9, 3
    %p170 = pnand %p168, %p169
    %p171 = pneg %p170
    // Predicated region
    $region29: #{_lambda_.7} parent=5 // pred_check
      _
    $region30: #{_lambda_.7} parent=5 // pred_check_branch
      %173 = sbr.rel (%p170) target = $region32
    $region31: #{_lambda_.7} parent=5 // pred_region
      %s174 = ssub.s32 %s9, 1
      %s175 = smul.u32 32, %s18
      %p176 = scmp.lt.s32.totalorder %s175, 63
      %s177 = scalar_select %p176, %s175, 63
      %s178 = smul.addr %s177, 4
      %s179 = scalar_lea.vmem %s0, %s178
      %p180 = pneg %p47
      %p181 = pneg %p44
      %p182 = scmp.lt.s32.totalorder %s19, 0
      %s183 = scalar_select %p182, %s19, 0
      %s184 = smul.addr %s183, 4
      %s185 = scalar_lea.vmem %s1, %s184
      %p186 = pneg %p73
      %p187 = pneg %p70
      %p188 = scmp.lt.s32.totalorder %s19, 0
      %s189 = scalar_select %p188, %s19, 0
      %s190 = scalar_lea.vmem %s2, %s189
      %p191 = pneg %p99
      %p192 = pneg %p96
      %p193 = pneg %p127
      %p194 = pneg %p124
      %s195 = smul.u32 32, %s18
      %p196 = scmp.lt.s32.totalorder %s195, 63
      %s197 = scalar_select %p196, %s195, 63
      %p198 = scmp.lt.s32.totalorder %s19, 0
      %s199 = scalar_select %p198, %s19, 0
      %s200 = sadd.s32 %s199, %s197
      %s201 = smul.addr %s200, 4
      %s202 = scalar_lea.vmem %s3, %s201
      %s203 = smul.u32 32, %s18
      %p204 = scmp.lt.s32.totalorder %s203, 63
      %s205 = scalar_select %p204, %s203, 63
      %s206 = smul.addr %s205, 4
      %s207 = scalar_lea.vmem %s0, %s206
      %s208 = smul.u32 32, %s18
      %p209 = scmp.lt.s32.totalorder %s19, 0
      %s210 = scalar_select %p209, %s19, 0
      %s211 = smul.addr %s210, 4
      %s212 = scalar_lea.vmem %s1, %s211
      %p213 = scmp.lt.s32.totalorder %s19, 0
      %s214 = scalar_select %p213, %s19, 0
      %s215 = scalar_lea.vmem %s2, %s214
      %s216 = smul.u32 32, %s18
      %p217 = scmp.lt.s32.totalorder %s216, 63
      %s218 = scalar_select %p217, %s216, 63
      %p219 = scmp.lt.s32.totalorder %s19, 0
      %s220 = scalar_select %p219, %s19, 0
      %s221 = sadd.s32 %s220, %s218
      %s222 = smul.addr %s221, 4
      %s223 = scalar_lea.vmem %s3, %s222
      %s224 = smul.u32 32, %s18
      %v226 = vld [vmem:[%s207] sm:$0xf]
      %v227 = vld [vmem:[%s207 + $0x4] sm:$0xf]
      %v228 = vld [vmem:[%s207 + $0x8] sm:$0xf]
      %v229 = vld [vmem:[%s207 + $0xc] sm:$0xf]
      %v230 = vld [vmem:[%s207 + $0x10] sm:$0xf]
      %v231 = vld [vmem:[%s207 + $0x14] sm:$0xf]
      %v232 = vld [vmem:[%s207 + $0x18] sm:$0xf]
      %v233 = vld [vmem:[%s207 + $0x1c] sm:$0xf]
      %v234 = vld [vmem:[%s207 + $0x20] sm:$0xf]
      %v235 = vld [vmem:[%s207 + $0x24] sm:$0xf]
      %v236 = vld [vmem:[%s207 + $0x28] sm:$0xf]
      %v237 = vld [vmem:[%s207 + $0x2c] sm:$0xf]
      %v238 = vld [vmem:[%s207 + $0x30] sm:$0xf]
      %v239 = vld [vmem:[%s207 + $0x34] sm:$0xf]
      %v240 = vld [vmem:[%s207 + $0x38] sm:$0xf]
      %v241 = vld [vmem:[%s207 + $0x3c] sm:$0xf]
      %v242 = vld [vmem:[%s207 + $0x40] sm:$0xf]
      %v243 = vld [vmem:[%s207 + $0x44] sm:$0xf]
      %v244 = vld [vmem:[%s207 + $0x48] sm:$0xf]
      %v245 = vld [vmem:[%s207 + $0x4c] sm:$0xf]
      %v246 = vld [vmem:[%s207 + $0x50] sm:$0xf]
      %v247 = vld [vmem:[%s207 + $0x54] sm:$0xf]
      %v248 = vld [vmem:[%s207 + $0x58] sm:$0xf]
      %v249 = vld [vmem:[%s207 + $0x5c] sm:$0xf]
      %v250 = vld [vmem:[%s207 + $0x60] sm:$0xf]
      %v251 = vld [vmem:[%s207 + $0x64] sm:$0xf]
      %v252 = vld [vmem:[%s207 + $0x68] sm:$0xf]
      %v253 = vld [vmem:[%s207 + $0x6c] sm:$0xf]
      %v254 = vld [vmem:[%s207 + $0x70] sm:$0xf]
      %v255 = vld [vmem:[%s207 + $0x74] sm:$0xf]
      %v256 = vld [vmem:[%s207 + $0x78] sm:$0xf]
      %v257 = vld [vmem:[%s207 + $0x7c] sm:$0xf]
      %v258 = vld [vmem:[%s212] sm:$0xf]
      %v259 = vld [vmem:[%s212 + $0x4] sm:$0xf]
      %v260 = vld [vmem:[%s212 + $0x8] sm:$0xf]
      %v261 = vld [vmem:[%s212 + $0xc] sm:$0xf]
      %v262 = vld [vmem:[%s212 + $0x10] sm:$0xf]
      %v263 = vld [vmem:[%s212 + $0x14] sm:$0xf]
      %v264 = vld [vmem:[%s212 + $0x18] sm:$0xf]
      %v265 = vld [vmem:[%s212 + $0x1c] sm:$0xf]
      %v266 = vld [vmem:[%s212 + $0x20] sm:$0xf]
      %v267 = vld [vmem:[%s212 + $0x24] sm:$0xf]
      %v268 = vld [vmem:[%s212 + $0x28] sm:$0xf]
      %v269 = vld [vmem:[%s212 + $0x2c] sm:$0xf]
      %v270 = vld [vmem:[%s212 + $0x30] sm:$0xf]
      %v271 = vld [vmem:[%s212 + $0x34] sm:$0xf]
      %v272 = vld [vmem:[%s212 + $0x38] sm:$0xf]
      %v273 = vld [vmem:[%s212 + $0x3c] sm:$0xf]
      %v274 = vld [vmem:[%s215] sm:$0x1]
      %v276 = vlaneseq
      %v277 = vshrl.u32 %v276, 7
      %v278 = vsub.s32 0, %v277
      %v279 = vrot.slane %v274, %v278
      %v313 = vunpack.c.l.b16 %v226
      %v314 = vunpack.c.l.b16 %v227
      %v315 = vunpack.c.l.b16 %v228
      %v316 = vunpack.c.l.b16 %v229
      %v317 = vunpack.c.l.b16 %v230
      %v318 = vunpack.c.l.b16 %v231
      %v319 = vunpack.c.l.b16 %v232
      %v320 = vunpack.c.l.b16 %v233
      %v321 = vunpack.c.l.b16 %v234
      %v322 = vunpack.c.l.b16 %v235
      %v323 = vunpack.c.l.b16 %v236
      %v324 = vunpack.c.l.b16 %v237
      %v325 = vunpack.c.l.b16 %v238
      %v326 = vunpack.c.l.b16 %v239
      %v327 = vunpack.c.l.b16 %v240
      %v328 = vunpack.c.l.b16 %v241
      %v329 = vunpack.c.l.b16 %v242
      %v330 = vunpack.c.l.b16 %v243
      %v331 = vunpack.c.l.b16 %v244
      %v332 = vunpack.c.l.b16 %v245
      %v333 = vunpack.c.l.b16 %v246
      %v334 = vunpack.c.l.b16 %v247
      %v335 = vunpack.c.l.b16 %v248
      %v336 = vunpack.c.l.b16 %v249
      %v337 = vunpack.c.l.b16 %v250
      %v338 = vunpack.c.l.b16 %v251
      %v339 = vunpack.c.l.b16 %v252
      %v340 = vunpack.c.l.b16 %v253
      %v341 = vunpack.c.l.b16 %v254
      %v342 = vunpack.c.l.b16 %v255
      %v343 = vunpack.c.l.b16 %v256
      %v344 = vunpack.c.l.b16 %v257
      %v345 = vpack.c.b16 %v314, %v313
      %v346 = vpack.c.b16 %v316, %v315
      %v347 = vpack.c.b16 %v318, %v317
      %v348 = vpack.c.b16 %v320, %v319
      %v349 = vpack.c.b16 %v322, %v321
      %v350 = vpack.c.b16 %v324, %v323
      %v351 = vpack.c.b16 %v326, %v325
      %v352 = vpack.c.b16 %v328, %v327
      %v353 = vpack.c.b16 %v330, %v329
      %v354 = vpack.c.b16 %v332, %v331
      %v355 = vpack.c.b16 %v334, %v333
      %v356 = vpack.c.b16 %v336, %v335
      %v357 = vpack.c.b16 %v338, %v337
      %v358 = vpack.c.b16 %v340, %v339
      %v359 = vpack.c.b16 %v342, %v341
      %v360 = vpack.c.b16 %v344, %v343
      %v393 = vunpack.c.l.b16 %v258
      %v394 = vunpack.c.l.b16 %v259
      %v395 = vunpack.c.l.b16 %v260
      %v396 = vunpack.c.l.b16 %v261
      %v397 = vunpack.c.l.b16 %v262
      %v398 = vunpack.c.l.b16 %v263
      %v399 = vunpack.c.l.b16 %v264
      %v400 = vunpack.c.l.b16 %v265
      %v401 = vunpack.c.l.b16 %v266
      %v402 = vunpack.c.l.b16 %v267
      %v403 = vunpack.c.l.b16 %v268
      %v404 = vunpack.c.l.b16 %v269
      %v405 = vunpack.c.l.b16 %v270
      %v406 = vunpack.c.l.b16 %v271
      %v407 = vunpack.c.l.b16 %v272
      %v408 = vunpack.c.l.b16 %v273
      %v409 = vpack.c.b16 %v394, %v393
      %v410 = vpack.c.b16 %v396, %v395
      %v411 = vpack.c.b16 %v398, %v397
      %v412 = vpack.c.b16 %v400, %v399
      %v413 = vpack.c.b16 %v402, %v401
      %v414 = vpack.c.b16 %v404, %v403
      %v415 = vpack.c.b16 %v406, %v405
      %v416 = vpack.c.b16 %v408, %v407
      %425 = vmatprep.subr.bf16.mxu0 0
      %426 = vmatpush1.bf16.msra.mxu0 %v409
      %427 = vmatprep.subr.bf16.mxu0 0
      %428 = vmatpush1.bf16.msra.mxu0 %v410
      %429 = vmatprep.subr.bf16.mxu0 0
      %430 = vmatpush1.bf16.msra.mxu0 %v411
      %431 = vmatprep.subr.bf16.mxu0 0
      %432 = vmatpush1.bf16.msra.mxu0 %v412
      %433 = vmatprep.subr.bf16.mxu0 0
      %434 = vmatpush1.bf16.msra.mxu0 %v413
      %435 = vmatprep.subr.bf16.mxu0 0
      %436 = vmatpush1.bf16.msra.mxu0 %v414
      %437 = vmatprep.subr.bf16.mxu0 0
      %438 = vmatpush1.bf16.msra.mxu0 %v415
      %439 = vmatprep.subr.bf16.mxu0 0
      %440 = vmatpush1.bf16.msra.mxu0 %v416
      %441 = vmatprep.subr.bf16.mxu0 0
      %442 = vmatpush1.bf16.msra.mxu0 0
      %443 = vmatprep.subr.bf16.mxu0 0
      %444 = vmatpush1.bf16.msra.mxu0 0
      %445 = vmatprep.subr.bf16.mxu0 0
      %446 = vmatpush1.bf16.msra.mxu0 0
      %447 = vmatprep.subr.bf16.mxu0 0
      %448 = vmatpush1.bf16.msra.mxu0 0
      %449 = vmatprep.subr.bf16.mxu0 0
      %450 = vmatpush1.bf16.msra.mxu0 0
      %451 = vmatprep.subr.bf16.mxu0 0
      %452 = vmatpush1.bf16.msra.mxu0 0
      %453 = vmatprep.subr.bf16.mxu0 0
      %454 = vmatpush1.bf16.msra.mxu0 0
      %455 = vmatprep.subr.bf16.mxu0 0
      %456 = vmatpush1.bf16.msra.mxu0 0
      %457 = vmatprep.mubr.bf16.mxu0 0
      %458 = vmatmul.mubr.bf16.gmra.mrb[0].mxu0 %v345
      %v459 = vpop.f32.mrb[0].mxu0
      %v460 = vadd.f32 %v279, %v459
      %v461 = vpop.f32.mrb[0].mxu0
      %v462 = vpop.f32.mrb[0].mxu0
      %v463 = vadd.f32 %v279, %v462
      %v464 = vpop.f32.mrb[0].mxu0
      %465 = vmatprep.mubr.bf16.mxu0 0
      %466 = vmatmul.mubr.bf16.gmra.mrb[0].mxu0 %v346
      %v467 = vpop.f32.mrb[0].mxu0
      %v468 = vadd.f32 %v279, %v467
      %v469 = vpop.f32.mrb[0].mxu0
      %v470 = vpop.f32.mrb[0].mxu0
      %v471 = vadd.f32 %v279, %v470
      %v472 = vpop.f32.mrb[0].mxu0
      %473 = vmatprep.mubr.bf16.mxu0 0
      %474 = vmatmul.mubr.bf16.gmra.mrb[0].mxu0 %v347
      %v475 = vpop.f32.mrb[0].mxu0
      %v476 = vadd.f32 %v279, %v475
      %v477 = vpop.f32.mrb[0].mxu0
      %v478 = vpop.f32.mrb[0].mxu0
      %v479 = vadd.f32 %v279, %v478
      %v480 = vpop.f32.mrb[0].mxu0
      %481 = vmatprep.mubr.bf16.mxu0 0
      %482 = vmatmul.mubr.bf16.gmra.mrb[0].mxu0 %v348
      %v483 = vpop.f32.mrb[0].mxu0
      %v484 = vadd.f32 %v279, %v483
      %v485 = vpop.f32.mrb[0].mxu0
      %v486 = vpop.f32.mrb[0].mxu0
      %v487 = vadd.f32 %v279, %v486
      %v488 = vpop.f32.mrb[0].mxu0
      %489 = vmatprep.mubr.bf16.mxu0 0
      %490 = vmatmul.mubr.bf16.gmra.mrb[0].mxu0 %v349
      %v491 = vpop.f32.mrb[0].mxu0
      %v492 = vadd.f32 %v279, %v491
      %v493 = vpop.f32.mrb[0].mxu0
      %v494 = vpop.f32.mrb[0].mxu0
      %v495 = vadd.f32 %v279, %v494
      %v496 = vpop.f32.mrb[0].mxu0
      %497 = vmatprep.mubr.bf16.mxu0 0
      %498 = vmatmul.mubr.bf16.gmra.mrb[0].mxu0 %v350
      %v499 = vpop.f32.mrb[0].mxu0
      %v500 = vadd.f32 %v279, %v499
      %v501 = vpop.f32.mrb[0].mxu0
      %v502 = vpop.f32.mrb[0].mxu0
      %v503 = vadd.f32 %v279, %v502
      %v504 = vpop.f32.mrb[0].mxu0
      %505 = vmatprep.mubr.bf16.mxu0 0
      %506 = vmatmul.mubr.bf16.gmra.mrb[0].mxu0 %v351
      %v507 = vpop.f32.mrb[0].mxu0
      %v508 = vadd.f32 %v279, %v507
      %v509 = vpop.f32.mrb[0].mxu0
      %v510 = vpop.f32.mrb[0].mxu0
      %v511 = vadd.f32 %v279, %v510
      %v512 = vpop.f32.mrb[0].mxu0
      %513 = vmatprep.mubr.bf16.mxu0 0
      %514 = vmatmul.mubr.bf16.gmra.mrb[0].mxu0 %v352
      %v515 = vpop.f32.mrb[0].mxu0
      %v516 = vadd.f32 %v279, %v515
      %v517 = vpop.f32.mrb[0].mxu0
      %v518 = vpop.f32.mrb[0].mxu0
      %v519 = vadd.f32 %v279, %v518
      %v520 = vpop.f32.mrb[0].mxu0
      %521 = vmatprep.mubr.bf16.mxu0 0
      %522 = vmatmul.mubr.bf16.gmra.mrb[0].mxu0 %v353
      %v523 = vpop.f32.mrb[0].mxu0
      %v524 = vadd.f32 %v279, %v523
      %v525 = vpop.f32.mrb[0].mxu0
      %v526 = vpop.f32.mrb[0].mxu0
      %v527 = vadd.f32 %v279, %v526
      %v528 = vpop.f32.mrb[0].mxu0
      %529 = vmatprep.mubr.bf16.mxu0 0
      %530 = vmatmul.mubr.bf16.gmra.mrb[0].mxu0 %v354
      %v531 = vpop.f32.mrb[0].mxu0
      %v532 = vadd.f32 %v279, %v531
      %v533 = vpop.f32.mrb[0].mxu0
      %v534 = vpop.f32.mrb[0].mxu0
      %v535 = vadd.f32 %v279, %v534
      %v536 = vpop.f32.mrb[0].mxu0
      %537 = vmatprep.mubr.bf16.mxu0 0
      %538 = vmatmul.mubr.bf16.gmra.mrb[0].mxu0 %v355
      %v539 = vpop.f32.mrb[0].mxu0
      %v540 = vadd.f32 %v279, %v539
      %v541 = vpop.f32.mrb[0].mxu0
      %v542 = vpop.f32.mrb[0].mxu0
      %v543 = vadd.f32 %v279, %v542
      %v544 = vpop.f32.mrb[0].mxu0
      %545 = vmatprep.mubr.bf16.mxu0 0
      %546 = vmatmul.mubr.bf16.gmra.mrb[0].mxu0 %v356
      %v547 = vpop.f32.mrb[0].mxu0
      %v548 = vadd.f32 %v279, %v547
      %v549 = vpop.f32.mrb[0].mxu0
      %v550 = vpop.f32.mrb[0].mxu0
      %v551 = vadd.f32 %v279, %v550
      %v552 = vpop.f32.mrb[0].mxu0
      %553 = vmatprep.mubr.bf16.mxu0 0
      %554 = vmatmul.mubr.bf16.gmra.mrb[0].mxu0 %v357
      %v555 = vpop.f32.mrb[0].mxu0
      %v556 = vadd.f32 %v279, %v555
      %v557 = vpop.f32.mrb[0].mxu0
      %v558 = vpop.f32.mrb[0].mxu0
      %v559 = vadd.f32 %v279, %v558
      %v560 = vpop.f32.mrb[0].mxu0
      %561 = vmatprep.mubr.bf16.mxu0 0
      %562 = vmatmul.mubr.bf16.gmra.mrb[0].mxu0 %v358
      %v563 = vpop.f32.mrb[0].mxu0
      %v564 = vadd.f32 %v279, %v563
      %v565 = vpop.f32.mrb[0].mxu0
      %v566 = vpop.f32.mrb[0].mxu0
      %v567 = vadd.f32 %v279, %v566
      %v568 = vpop.f32.mrb[0].mxu0
      %569 = vmatprep.mubr.bf16.mxu0 0
      %570 = vmatmul.mubr.bf16.gmra.mrb[0].mxu0 %v359
      %v571 = vpop.f32.mrb[0].mxu0
      %v572 = vadd.f32 %v279, %v571
      %v573 = vpop.f32.mrb[0].mxu0
      %v574 = vpop.f32.mrb[0].mxu0
      %v575 = vadd.f32 %v279, %v574
      %v576 = vpop.f32.mrb[0].mxu0
      %577 = vmatprep.mubr.bf16.mxu0 0
      %578 = vmatmul.mubr.bf16.gmra.mrb[0].mxu0 %v360
      %v579 = vpop.f32.mrb[0].mxu0
      %v580 = vadd.f32 %v279, %v579
      %v581 = vpop.f32.mrb[0].mxu0
      %v582 = vpop.f32.mrb[0].mxu0
      %v583 = vadd.f32 %v279, %v582
      %v584 = vpop.f32.mrb[0].mxu0
      %585 = vdwg.mxu0
      %v586 = vmax.f32 %v460, 0.0
      %v587 = vmax.f32 %v463, 0.0
      %v588 = vmax.f32 %v468, 0.0
      %v589 = vmax.f32 %v471, 0.0
      %v590 = vmax.f32 %v476, 0.0
      %v591 = vmax.f32 %v479, 0.0
      %v592 = vmax.f32 %v484, 0.0
      %v593 = vmax.f32 %v487, 0.0
      %v594 = vmax.f32 %v492, 0.0
      %v595 = vmax.f32 %v495, 0.0
      %v596 = vmax.f32 %v500, 0.0
      %v597 = vmax.f32 %v503, 0.0
      %v598 = vmax.f32 %v508, 0.0
      %v599 = vmax.f32 %v511, 0.0
      %v600 = vmax.f32 %v516, 0.0
      %v601 = vmax.f32 %v519, 0.0
      %v602 = vmax.f32 %v524, 0.0
      %v603 = vmax.f32 %v527, 0.0
      %v604 = vmax.f32 %v532, 0.0
      %v605 = vmax.f32 %v535, 0.0
      %v606 = vmax.f32 %v540, 0.0
      %v607 = vmax.f32 %v543, 0.0
      %v608 = vmax.f32 %v548, 0.0
      %v609 = vmax.f32 %v551, 0.0
      %v610 = vmax.f32 %v556, 0.0
      %v611 = vmax.f32 %v559, 0.0
      %v612 = vmax.f32 %v564, 0.0
      %v613 = vmax.f32 %v567, 0.0
      %v614 = vmax.f32 %v572, 0.0
      %v615 = vmax.f32 %v575, 0.0
      %v616 = vmax.f32 %v580, 0.0
      %v617 = vmax.f32 %v583, 0.0
      %v618 = vpack.c.bf16 %v587, %v586
      %v619 = vpack.c.bf16 %v589, %v588
      %v620 = vpack.c.bf16 %v591, %v590
      %v621 = vpack.c.bf16 %v593, %v592
      %v622 = vpack.c.bf16 %v595, %v594
      %v623 = vpack.c.bf16 %v597, %v596
      %v624 = vpack.c.bf16 %v599, %v598
      %v625 = vpack.c.bf16 %v601, %v600
      %v626 = vpack.c.bf16 %v603, %v602
      %v627 = vpack.c.bf16 %v605, %v604
      %v628 = vpack.c.bf16 %v607, %v606
      %v629 = vpack.c.bf16 %v609, %v608
      %v630 = vpack.c.bf16 %v611, %v610
      %v631 = vpack.c.bf16 %v613, %v612
      %v632 = vpack.c.bf16 %v615, %v614
      %v633 = vpack.c.bf16 %v617, %v616
      %v650 = vunpack.c.l.b16 %v618
      %v651 = vunpack.c.h.b16 %v618
      %v652 = vunpack.c.l.b16 %v619
      %v653 = vunpack.c.h.b16 %v619
      %v654 = vunpack.c.l.b16 %v620
      %v655 = vunpack.c.h.b16 %v620
      %v656 = vunpack.c.l.b16 %v621
      %v657 = vunpack.c.h.b16 %v621
      %v658 = vunpack.c.l.b16 %v622
      %v659 = vunpack.c.h.b16 %v622
      %v660 = vunpack.c.l.b16 %v623
      %v661 = vunpack.c.h.b16 %v623
      %v662 = vunpack.c.l.b16 %v624
      %v663 = vunpack.c.h.b16 %v624
      %v664 = vunpack.c.l.b16 %v625
      %v665 = vunpack.c.h.b16 %v625
      %v666 = vunpack.c.l.b16 %v626
      %v667 = vunpack.c.h.b16 %v626
      %v668 = vunpack.c.l.b16 %v627
      %v669 = vunpack.c.h.b16 %v627
      %v670 = vunpack.c.l.b16 %v628
      %v671 = vunpack.c.h.b16 %v628
      %v672 = vunpack.c.l.b16 %v629
      %v673 = vunpack.c.h.b16 %v629
      %v674 = vunpack.c.l.b16 %v630
      %v675 = vunpack.c.h.b16 %v630
      %v676 = vunpack.c.l.b16 %v631
      %v677 = vunpack.c.h.b16 %v631
      %v678 = vunpack.c.l.b16 %v632
      %v679 = vunpack.c.h.b16 %v632
      %v680 = vunpack.c.l.b16 %v633
      %v681 = vunpack.c.h.b16 %v633
      %v682 = vpack.c.b16 %v650, %v650
      %v683 = vpack.c.b16 %v651, %v651
      %v684 = vpack.c.b16 %v652, %v652
      %v685 = vpack.c.b16 %v653, %v653
      %v686 = vpack.c.b16 %v654, %v654
      %v687 = vpack.c.b16 %v655, %v655
      %v688 = vpack.c.b16 %v656, %v656
      %v689 = vpack.c.b16 %v657, %v657
      %v690 = vpack.c.b16 %v658, %v658
      %v691 = vpack.c.b16 %v659, %v659
      %v692 = vpack.c.b16 %v660, %v660
      %v693 = vpack.c.b16 %v661, %v661
      %v694 = vpack.c.b16 %v662, %v662
      %v695 = vpack.c.b16 %v663, %v663
      %v696 = vpack.c.b16 %v664, %v664
      %v697 = vpack.c.b16 %v665, %v665
      %v698 = vpack.c.b16 %v666, %v666
      %v699 = vpack.c.b16 %v667, %v667
      %v700 = vpack.c.b16 %v668, %v668
      %v701 = vpack.c.b16 %v669, %v669
      %v702 = vpack.c.b16 %v670, %v670
      %v703 = vpack.c.b16 %v671, %v671
      %v704 = vpack.c.b16 %v672, %v672
      %v705 = vpack.c.b16 %v673, %v673
      %v706 = vpack.c.b16 %v674, %v674
      %v707 = vpack.c.b16 %v675, %v675
      %v708 = vpack.c.b16 %v676, %v676
      %v709 = vpack.c.b16 %v677, %v677
      %v710 = vpack.c.b16 %v678, %v678
      %v711 = vpack.c.b16 %v679, %v679
      %v712 = vpack.c.b16 %v680, %v680
      %v713 = vpack.c.b16 %v681, %v681
      %746 = vst [vmem:[%s223] sm:$0xf] %v682
      %747 = vst [vmem:[%s223 + $0x4] sm:$0xf] %v683
      %748 = vst [vmem:[%s223 + $0x8] sm:$0xf] %v684
      %749 = vst [vmem:[%s223 + $0xc] sm:$0xf] %v685
      %750 = vst [vmem:[%s223 + $0x10] sm:$0xf] %v686
      %751 = vst [vmem:[%s223 + $0x14] sm:$0xf] %v687
      %752 = vst [vmem:[%s223 + $0x18] sm:$0xf] %v688
      %753 = vst [vmem:[%s223 + $0x1c] sm:$0xf] %v689
      %754 = vst [vmem:[%s223 + $0x20] sm:$0xf] %v690
      %755 = vst [vmem:[%s223 + $0x24] sm:$0xf] %v691
      %756 = vst [vmem:[%s223 + $0x28] sm:$0xf] %v692
      %757 = vst [vmem:[%s223 + $0x2c] sm:$0xf] %v693
      %758 = vst [vmem:[%s223 + $0x30] sm:$0xf] %v694
      %759 = vst [vmem:[%s223 + $0x34] sm:$0xf] %v695
      %760 = vst [vmem:[%s223 + $0x38] sm:$0xf] %v696
      %761 = vst [vmem:[%s223 + $0x3c] sm:$0xf] %v697
      %762 = vst [vmem:[%s223 + $0x40] sm:$0xf] %v698
      %763 = vst [vmem:[%s223 + $0x44] sm:$0xf] %v699
      %764 = vst [vmem:[%s223 + $0x48] sm:$0xf] %v700
      %765 = vst [vmem:[%s223 + $0x4c] sm:$0xf] %v701
      %766 = vst [vmem:[%s223 + $0x50] sm:$0xf] %v702
      %767 = vst [vmem:[%s223 + $0x54] sm:$0xf] %v703
      %768 = vst [vmem:[%s223 + $0x58] sm:$0xf] %v704
      %769 = vst [vmem:[%s223 + $0x5c] sm:$0xf] %v705
      %770 = vst [vmem:[%s223 + $0x60] sm:$0xf] %v706
      %771 = vst [vmem:[%s223 + $0x64] sm:$0xf] %v707
      %772 = vst [vmem:[%s223 + $0x68] sm:$0xf] %v708
      %773 = vst [vmem:[%s223 + $0x6c] sm:$0xf] %v709
      %774 = vst [vmem:[%s223 + $0x70] sm:$0xf] %v710
      %775 = vst [vmem:[%s223 + $0x74] sm:$0xf] %v711
      %776 = vst [vmem:[%s223 + $0x78] sm:$0xf] %v712
      %777 = vst [vmem:[%s223 + $0x7c] sm:$0xf] %v713
      %s778 = smul.u32 32, %s18
      %p779 = scmp.lt.s32.totalorder %s778, 63
      %s780 = scalar_select %p779, %s778, 63
      %p781 = scmp.lt.s32.totalorder %s19, 0
      %s782 = scalar_select %p781, %s19, 0
      %s783 = sadd.s32 %s782, %s780
      %s784 = smul.addr %s783, 4
      %s785 = scalar_lea.vmem %s3, %s784
      // Predicated region
      $region33: #{_lambda_.7} parent=31 // pred_check
        %p786 = pneg %p124
      $region34: #{_lambda_.7} parent=31 // pred_check_branch
        %788 = sbr.rel (%p786) target = $region36
      $region35: #{_lambda_.7} parent=31 // pred_region
        %s789 = smul.u32 32, %s18
      $region36: #{_lambda_.7} parent=31 // pred_fallthru
        _
    $region32: #{_lambda_.7} parent=5 // pred_fallthru
      _
    %p790 = scmp.le.s32.totalorder 2, %s9
    // Predicated region
    $region37: #{_lambda_.7} parent=5 // pred_check
      %p791 = pneg %p790
    $region38: #{_lambda_.7} parent=5 // pred_check_branch
      %793 = sbr.rel (%p791) target = $region40
    $region39: #{_lambda_.7} parent=5 // pred_region
      %s794 = ssub.s32 %s9, 2
      // Predicated region
      $region41: #{_lambda_.7} parent=39 // pred_check
        %p795 = pneg %p130
      $region42: #{_lambda_.7} parent=39 // pred_check_branch
        %797 = sbr.rel (%p795) target = $region44
      $region43: #{_lambda_.7} parent=39 // pred_region
        %s798 = smul.u32 32, %s20
        %p799 = scmp.lt.s32.totalorder %s798, 63
        %s800 = scalar_select %p799, %s798, 63
        %p801 = scmp.lt.s32.totalorder %s21, 0
        %s802 = scalar_select %p801, %s21, 0
        %s803 = sadd.s32 %s802, %s800
        %s804 = smul.addr %s803, 4
        %s805 = scalar_lea.vmem %s3, %s804
      $region44: #{_lambda_.7} parent=39 // pred_fallthru
        _
    $region40: #{_lambda_.7} parent=5 // pred_fallthru
      _
  $region6: #{_lambda_.7} parent=0 // loop_footer
    %s13 = sadd.s32 1, %s9
  $region7: #{_lambda_.7} parent=0 // loop_footer_branch
    %8 = sbr.rel target = $region3
  $region8: #{_lambda_.7} parent=0 // loop_exit
    _

// kernel: _lambda_.8
$region0: #{_lambda_.8}
  #allocation0 [shape = 'u32[]', space=smem, size = 0x4, offset = 0x4, fixed_abs, tag = 'smem constant byte address 0x4 - core index']
  #allocation1 [shape = 'u32[144,128]{1,0:T(1,128)}', space=vmem, size = 0x12000, scoped, tag = 'internal scratch']
  %s0 = inlined_call_operand.vmem [shape: bf16[512,256], index: 0, kind: input, shape index: {}]
  %s1 = inlined_call_operand.vmem [shape: bf16[256,128], index: 1, kind: input, shape index: {}]
  %s2 = inlined_call_operand.vmem [shape: f32[1,128], index: 2, kind: input, shape index: {}]
  %s3 = inlined_call_operand.vmem [shape: bf16[512,128], index: 3, kind: output, shape index: {}]
  %s4 = sld [smem:[#allocation0]]
  $region45: #{_lambda_.8} parent=0
    _
  %s6 = ssub.s32 1, %s4
  %s7 = scalar_select 0, %s6, %s4
  loop: start=0, step=1, limit=4
  $region2: #{_lambda_.8} parent=0 // loop_pre_header
    _
  $region3: #{_lambda_.8} parent=0 // loop_header
    %s9 = sphi 0, %s13
    %p10 = scmp.ge.s32.totalorder %s9, 4
    %s16 = sphi 0, %s28
    %s17 = sphi 0, %s24
    %s18 = sphi 0, %s16
    %s19 = sphi 0, %s17
    %s20 = sphi 0, %s18
    %s21 = sphi 0, %s19
    %s31 = sphi 0, %s33
    %s34 = sphi 0, %s31
    %s35 = sphi 0, %s34
    %s51 = sphi 0, %s35
    %s57 = sphi 0, %s59
    %s60 = sphi 0, %s57
    %s61 = sphi 0, %s60
    %s77 = sphi 0, %s61
    %s83 = sphi 0, %s85
    %s86 = sphi 0, %s83
    %s87 = sphi 0, %s86
    %s103 = sphi 0, %s87
    %s111 = sphi 0, %s113
    %s114 = sphi 0, %s111
    %s115 = sphi 0, %s114
    %s131 = sphi 0, %s115
  $region4: #{_lambda_.8} parent=0 // loop_header_branch
    %12 = sbr.rel (%p10) target = $region8
  $region5: #{_lambda_.8} parent=0 // loop_body
    %s14 = ssub.s32 %s9, 1
    %s15 = ssub.s32 %s9, 2
    %s22 = sadd.s32 1, %s17
    %p23 = scmp.ge.s32.totalorder %s22, 1
    %s24 = scalar_select %p23, 0, %s22
    %s25 = sadd.s32 1, %s16
    %s26 = scalar_select %p23, %s25, %s16
    %p27 = scmp.ge.s32.totalorder %s26, 2
    %s28 = scalar_select %p27, 0, %s26
    %s29 = ssub.s32 %s16, %s28
    %p30 = scmp.eq.s32.totalorder %s29, 0
    %s32 = sadd.s32 %s31, 1
    %s33 = scalar_select %p30, %s31, %s32
    %p36 = pneg %p30
    %p37 = scmp.eq.s32.totalorder %s9, 1
    %p38 = por %p36, %p37
    %p39 = scmp.ne.s32.totalorder %s31, %s34
    %p40 = scmp.eq.s32.totalorder %s9, 0
    %p41 = por %p39, %p40
    %p42 = scmp.ne.s32.totalorder %s31, %s34
    %p43 = scmp.eq.s32.totalorder %s14, 1
    %p44 = por %p42, %p43
    %p45 = scmp.ne.s32.totalorder %s34, %s35
    %p46 = scmp.eq.s32.totalorder %s14, 0
    %p47 = por %p45, %p46
    %p48 = scmp.ne.s32.totalorder %s34, %s35
    %p49 = scmp.eq.s32.totalorder %s15, 1
    %p50 = por %p48, %p49
    %p52 = scmp.ne.s32.totalorder %s35, %s51
    %p53 = scmp.eq.s32.totalorder %s15, 0
    %p54 = por %p52, %p53
    %s55 = ssub.s32 %s17, %s24
    %p56 = scmp.eq.s32.totalorder %s55, 0
    %s58 = sadd.s32 %s57, 1
    %s59 = scalar_select %p56, %s57, %s58
    %p62 = pneg %p56
    %p63 = scmp.eq.s32.totalorder %s9, 1
    %p64 = por %p62, %p63
    %p65 = scmp.ne.s32.totalorder %s57, %s60
    %p66 = scmp.eq.s32.totalorder %s9, 0
    %p67 = por %p65, %p66
    %p68 = scmp.ne.s32.totalorder %s57, %s60
    %p69 = scmp.eq.s32.totalorder %s14, 1
    %p70 = por %p68, %p69
    %p71 = scmp.ne.s32.totalorder %s60, %s61
    %p72 = scmp.eq.s32.totalorder %s14, 0
    %p73 = por %p71, %p72
    %p74 = scmp.ne.s32.totalorder %s60, %s61
    %p75 = scmp.eq.s32.totalorder %s15, 1
    %p76 = por %p74, %p75
    %p78 = scmp.ne.s32.totalorder %s61, %s77
    %p79 = scmp.eq.s32.totalorder %s15, 0
    %p80 = por %p78, %p79
    %s81 = ssub.s32 %s17, %s24
    %p82 = scmp.eq.s32.totalorder %s81, 0
    %s84 = sadd.s32 %s83, 1
    %s85 = scalar_select %p82, %s83, %s84
    %p88 = pneg %p82
    %p89 = scmp.eq.s32.totalorder %s9, 1
    %p90 = por %p88, %p89
    %p91 = scmp.ne.s32.totalorder %s83, %s86
    %p92 = scmp.eq.s32.totalorder %s9, 0
    %p93 = por %p91, %p92
    %p94 = scmp.ne.s32.totalorder %s83, %s86
    %p95 = scmp.eq.s32.totalorder %s14, 1
    %p96 = por %p94, %p95
    %p97 = scmp.ne.s32.totalorder %s86, %s87
    %p98 = scmp.eq.s32.totalorder %s14, 0
    %p99 = por %p97, %p98
    %p100 = scmp.ne.s32.totalorder %s86, %s87
    %p101 = scmp.eq.s32.totalorder %s15, 1
    %p102 = por %p100, %p101
    %p104 = scmp.ne.s32.totalorder %s87, %s103
    %p105 = scmp.eq.s32.totalorder %s15, 0
    %p106 = por %p104, %p105
    %s107 = ssub.s32 %s16, %s28
    %s108 = ssub.s32 %s17, %s24
    %s109 = sor.u32 %s107, %s108
    %p110 = scmp.eq.s32.totalorder %s109, 0
    %s112 = sadd.s32 %s111, 1
    %s113 = scalar_select %p110, %s111, %s112
    %p116 = pneg %p110
    %p117 = scmp.eq.s32.totalorder %s9, 1
    %p118 = por %p116, %p117
    %p119 = scmp.ne.s32.totalorder %s111, %s114
    %p120 = scmp.eq.s32.totalorder %s9, 0
    %p121 = por %p119, %p120
    %p122 = scmp.ne.s32.totalorder %s111, %s114
    %p123 = scmp.eq.s32.totalorder %s14, 1
    %p124 = por %p122, %p123
    %p125 = scmp.ne.s32.totalorder %s114, %s115
    %p126 = scmp.eq.s32.totalorder %s14, 0
    %p127 = por %p125, %p126
    %p128 = scmp.ne.s32.totalorder %s114, %s115
    %p129 = scmp.eq.s32.totalorder %s15, 1
    %p130 = por %p128, %p129
    %p132 = scmp.ne.s32.totalorder %s115, %s131
    %p133 = scmp.eq.s32.totalorder %s15, 0
    %p134 = por %p132, %p133
    %p135 = scmp.le.s32.totalorder 1, %s9
    %p136 = scmp.lt.s32.totalorder %s9, 3
    %p137 = pnand %p135, %p136
    %p138 = pneg %p137
    // Predicated region
    $region9: #{_lambda_.8} parent=5 // pred_check
      _
    $region10: #{_lambda_.8} parent=5 // pred_check_branch
      %140 = sbr.rel (%p137) target = $region12
    $region11: #{_lambda_.8} parent=5 // pred_region
      %s141 = ssub.s32 %s9, 1
      // Predicated region
      $region13: #{_lambda_.8} parent=11 // pred_check
        %p142 = pneg %p73
      $region14: #{_lambda_.8} parent=11 // pred_check_branch
        %144 = sbr.rel (%p142) target = $region16
      $region15: #{_lambda_.8} parent=11 // pred_region
        %p145 = scmp.lt.s32.totalorder %s19, 0
        %s146 = scalar_select %p145, %s19, 0
        %s147 = smul.addr %s146, 4
        %s148 = scalar_lea.vmem %s1, %s147
      $region16: #{_lambda_.8} parent=11 // pred_fallthru
        _
      // Predicated region
      $region17: #{_lambda_.8} parent=11 // pred_check
        %p149 = pneg %p99
      $region18: #{_lambda_.8} parent=11 // pred_check_branch
        %151 = sbr.rel (%p149) target = $region20
      $region19: #{_lambda_.8} parent=11 // pred_region
        %p152 = scmp.lt.s32.totalorder %s19, 0
        %s153 = scalar_select %p152, %s19, 0
        %s154 = scalar_lea.vmem %s2, %s153
      $region20: #{_lambda_.8} parent=11 // pred_fallthru
        _
    $region12: #{_lambda_.8} parent=5 // pred_fallthru
      _
    %p155 = scmp.lt.s32.totalorder %s9, 2
    // Predicated region
    $region21: #{_lambda_.8} parent=5 // pred_check
      %p156 = pneg %p155
    $region22: #{_lambda_.8} parent=5 // pred_check_branch
      %158 = sbr.rel (%p156) target = $region24
    $region23: #{_lambda_.8} parent=5 // pred_region
      // Predicated region
      $region25: #{_lambda_.8} parent=23 // pred_check
        %p159 = pneg %p41
      $region26: #{_lambda_.8} parent=23 // pred_check_branch
        %161 = sbr.rel (%p159) target = $region28
      $region27: #{_lambda_.8} parent=23 // pred_region
        %s162 = smul.u32 32, %s16
        %p163 = scmp.lt.s32.totalorder %s162, 63
        %s164 = scalar_select %p163, %s162, 63
        %s165 = smul.addr %s164, 2
        %s166 = smul.addr %s165, 4
        %s167 = scalar_lea.vmem %s0, %s166
        %s168 = smul.u32 32, %s16
      $region28: #{_lambda_.8} parent=23 // pred_fallthru
        _
    $region24: #{_lambda_.8} parent=5 // pred_fallthru
      _
    %p169 = scmp.le.s32.totalorder 1, %s9
    %p170 = scmp.lt.s32.totalorder %s9, 3
    %p171 = pnand %p169, %p170
    %p172 = pneg %p171
    // Predicated region
    $region29: #{_lambda_.8} parent=5 // pred_check
      _
    $region30: #{_lambda_.8} parent=5 // pred_check_branch
      %174 = sbr.rel (%p171) target = $region32
    $region31: #{_lambda_.8} parent=5 // pred_region
      %s175 = ssub.s32 %s9, 1
      %s176 = smul.u32 32, %s18
      %p177 = scmp.lt.s32.totalorder %s176, 63
      %s178 = scalar_select %p177, %s176, 63
      %s179 = smul.addr %s178, 2
      %s180 = smul.addr %s179, 4
      %s181 = scalar_lea.vmem %s0, %s180
      %p182 = pneg %p47
      %p183 = pneg %p44
      %p184 = scmp.lt.s32.totalorder %s19, 0
      %s185 = scalar_select %p184, %s19, 0
      %s186 = smul.addr %s185, 4
      %s187 = scalar_lea.vmem %s1, %s186
      %p188 = pneg %p73
      %p189 = pneg %p70
      %p190 = scmp.lt.s32.totalorder %s19, 0
      %s191 = scalar_select %p190, %s19, 0
      %s192 = scalar_lea.vmem %s2, %s191
      %p193 = pneg %p99
      %p194 = pneg %p96
      %p195 = pneg %p127
      %p196 = pneg %p124
      %s197 = smul.u32 32, %s18
      %p198 = scmp.lt.s32.totalorder %s197, 63
      %s199 = scalar_select %p198, %s197, 63
      %p200 = scmp.lt.s32.totalorder %s19, 0
      %s201 = scalar_select %p200, %s19, 0
      %s202 = sadd.s32 %s201, %s199
      %s203 = smul.addr %s202, 4
      %s204 = scalar_lea.vmem %s3, %s203
      %s205 = smul.u32 32, %s18
      %p206 = scmp.lt.s32.totalorder %s205, 63
      %s207 = scalar_select %p206, %s205, 63
      %s208 = smul.addr %s207, 2
      %s209 = smul.addr %s208, 4
      %s210 = scalar_lea.vmem %s0, %s209
      %s211 = smul.u32 32, %s18
      %p212 = scmp.lt.s32.totalorder %s19, 0
      %s213 = scalar_select %p212, %s19, 0
      %s214 = smul.addr %s213, 4
      %s215 = scalar_lea.vmem %s1, %s214
      %p216 = scmp.lt.s32.totalorder %s19, 0
      %s217 = scalar_select %p216, %s19, 0
      %s218 = scalar_lea.vmem %s2, %s217
      %s219 = smul.u32 32, %s18
      %p220 = scmp.lt.s32.totalorder %s219, 63
      %s221 = scalar_select %p220, %s219, 63
      %p222 = scmp.lt.s32.totalorder %s19, 0
      %s223 = scalar_select %p222, %s19, 0
      %s224 = sadd.s32 %s223, %s221
      %s225 = smul.addr %s224, 4
      %s226 = scalar_lea.vmem %s3, %s225
      %s227 = smul.u32 32, %s18
      %v229 = vld [vmem:[%s210] sm:$0xff]
      %v230 = vld [vmem:[%s210 + $0x8] sm:$0xff]
      %v231 = vld [vmem:[%s210 + $0x10] sm:$0xff]
      %v232 = vld [vmem:[%s210 + $0x18] sm:$0xff]
      %v233 = vld [vmem:[%s210 + $0x20] sm:$0xff]
      %v234 = vld [vmem:[%s210 + $0x28] sm:$0xff]
      %v235 = vld [vmem:[%s210 + $0x30] sm:$0xff]
      %v236 = vld [vmem:[%s210 + $0x38] sm:$0xff]
      %v237 = vld [vmem:[%s210 + $0x40] sm:$0xff]
      %v238 = vld [vmem:[%s210 + $0x48] sm:$0xff]
      %v239 = vld [vmem:[%s210 + $0x50] sm:$0xff]
      %v240 = vld [vmem:[%s210 + $0x58] sm:$0xff]
      %v241 = vld [vmem:[%s210 + $0x60] sm:$0xff]
      %v242 = vld [vmem:[%s210 + $0x68] sm:$0xff]
      %v243 = vld [vmem:[%s210 + $0x70] sm:$0xff]
      %v244 = vld [vmem:[%s210 + $0x78] sm:$0xff]
      %v245 = vld [vmem:[%s210 + $0x80] sm:$0xff]
      %v246 = vld [vmem:[%s210 + $0x88] sm:$0xff]
      %v247 = vld [vmem:[%s210 + $0x90] sm:$0xff]
      %v248 = vld [vmem:[%s210 + $0x98] sm:$0xff]
      %v249 = vld [vmem:[%s210 + $0xa0] sm:$0xff]
      %v250 = vld [vmem:[%s210 + $0xa8] sm:$0xff]
      %v251 = vld [vmem:[%s210 + $0xb0] sm:$0xff]
      %v252 = vld [vmem:[%s210 + $0xb8] sm:$0xff]
      %v253 = vld [vmem:[%s210 + $0xc0] sm:$0xff]
      %v254 = vld [vmem:[%s210 + $0xc8] sm:$0xff]
      %v255 = vld [vmem:[%s210 + $0xd0] sm:$0xff]
      %v256 = vld [vmem:[%s210 + $0xd8] sm:$0xff]
      %v257 = vld [vmem:[%s210 + $0xe0] sm:$0xff]
      %v258 = vld [vmem:[%s210 + $0xe8] sm:$0xff]
      %v259 = vld [vmem:[%s210 + $0xf0] sm:$0xff]
      %v260 = vld [vmem:[%s210 + $0xf8] sm:$0xff]
      %v261 = vld [vmem:[%s215] sm:$0xf]
      %v262 = vld [vmem:[%s215 + $0x4] sm:$0xf]
      %v263 = vld [vmem:[%s215 + $0x8] sm:$0xf]
      %v264 = vld [vmem:[%s215 + $0xc] sm:$0xf]
      %v265 = vld [vmem:[%s215 + $0x10] sm:$0xf]
      %v266 = vld [vmem:[%s215 + $0x14] sm:$0xf]
      %v267 = vld [vmem:[%s215 + $0x18] sm:$0xf]
      %v268 = vld [vmem:[%s215 + $0x1c] sm:$0xf]
      %v269 = vld [vmem:[%s215 + $0x20] sm:$0xf]
      %v270 = vld [vmem:[%s215 + $0x24] sm:$0xf]
      %v271 = vld [vmem:[%s215 + $0x28] sm:$0xf]
      %v272 = vld [vmem:[%s215 + $0x2c] sm:$0xf]
      %v273 = vld [vmem:[%s215 + $0x30] sm:$0xf]
      %v274 = vld [vmem:[%s215 + $0x34] sm:$0xf]
      %v275 = vld [vmem:[%s215 + $0x38] sm:$0xf]
      %v276 = vld [vmem:[%s215 + $0x3c] sm:$0xf]
      %v277 = vld [vmem:[%s215 + $0x40] sm:$0xf]
      %v278 = vld [vmem:[%s215 + $0x44] sm:$0xf]
      %v279 = vld [vmem:[%s215 + $0x48] sm:$0xf]
      %v280 = vld [vmem:[%s215 + $0x4c] sm:$0xf]
      %v281 = vld [vmem:[%s215 + $0x50] sm:$0xf]
      %v282 = vld [vmem:[%s215 + $0x54] sm:$0xf]
      %v283 = vld [vmem:[%s215 + $0x58] sm:$0xf]
      %v284 = vld [vmem:[%s215 + $0x5c] sm:$0xf]
      %v285 = vld [vmem:[%s215 + $0x60] sm:$0xf]
      %v286 = vld [vmem:[%s215 + $0x64] sm:$0xf]
      %v287 = vld [vmem:[%s215 + $0x68] sm:$0xf]
      %v288 = vld [vmem:[%s215 + $0x6c] sm:$0xf]
      %v289 = vld [vmem:[%s215 + $0x70] sm:$0xf]
      %v290 = vld [vmem:[%s215 + $0x74] sm:$0xf]
      %v291 = vld [vmem:[%s215 + $0x78] sm:$0xf]
      %v292 = vld [vmem:[%s215 + $0x7c] sm:$0xf]
      %v293 = vld [vmem:[%s218] sm:$0x1]
      %v295 = vlaneseq
      %v296 = vshrl.u32 %v295, 7
      %v297 = vsub.s32 0, %v296
      %v298 = vrot.slane %v293, %v297
      %v332 = vunpack.c.l.b16 %v229
      %v333 = vunpack.c.h.b16 %v229
      %v334 = vunpack.c.l.b16 %v230
      %v335 = vunpack.c.h.b16 %v230
      %v336 = vunpack.c.l.b16 %v231
      %v337 = vunpack.c.h.b16 %v231
      %v338 = vunpack.c.l.b16 %v232
      %v339 = vunpack.c.h.b16 %v232
      %v340 = vunpack.c.l.b16 %v233
      %v341 = vunpack.c.h.b16 %v233
      %v342 = vunpack.c.l.b16 %v234
      %v343 = vunpack.c.h.b16 %v234
      %v344 = vunpack.c.l.b16 %v235
      %v345 = vunpack.c.h.b16 %v235
      %v346 = vunpack.c.l.b16 %v236
      %v347 = vunpack.c.h.b16 %v236
      %v348 = vunpack.c.l.b16 %v237
      %v349 = vunpack.c.h.b16 %v237
      %v350 = vunpack.c.l.b16 %v238
      %v351 = vunpack.c.h.b16 %v238
      %v352 = vunpack.c.l.b16 %v239
      %v353 = vunpack.c.h.b16 %v239
      %v354 = vunpack.c.l.b16 %v240
      %v355 = vunpack.c.h.b16 %v240
      %v356 = vunpack.c.l.b16 %v241
      %v357 = vunpack.c.h.b16 %v241
      %v358 = vunpack.c.l.b16 %v242
      %v359 = vunpack.c.h.b16 %v242
      %v360 = vunpack.c.l.b16 %v243
      %v361 = vunpack.c.h.b16 %v243
      %v362 = vunpack.c.l.b16 %v244
      %v363 = vunpack.c.h.b16 %v244
      %v364 = vunpack.c.l.b16 %v245
      %v365 = vunpack.c.h.b16 %v245
      %v366 = vunpack.c.l.b16 %v246
      %v367 = vunpack.c.h.b16 %v246
      %v368 = vunpack.c.l.b16 %v247
      %v369 = vunpack.c.h.b16 %v247
      %v370 = vunpack.c.l.b16 %v248
      %v371 = vunpack.c.h.b16 %v248
      %v372 = vunpack.c.l.b16 %v249
      %v373 = vunpack.c.h.b16 %v249
      %v374 = vunpack.c.l.b16 %v250
      %v375 = vunpack.c.h.b16 %v250
      %v376 = vunpack.c.l.b16 %v251
      %v377 = vunpack.c.h.b16 %v251
      %v378 = vunpack.c.l.b16 %v252
      %v379 = vunpack.c.h.b16 %v252
      %v380 = vunpack.c.l.b16 %v253
      %v381 = vunpack.c.h.b16 %v253
      %v382 = vunpack.c.l.b16 %v254
      %v383 = vunpack.c.h.b16 %v254
      %v384 = vunpack.c.l.b16 %v255
      %v385 = vunpack.c.h.b16 %v255
      %v386 = vunpack.c.l.b16 %v256
      %v387 = vunpack.c.h.b16 %v256
      %v388 = vunpack.c.l.b16 %v257
      %v389 = vunpack.c.h.b16 %v257
      %v390 = vunpack.c.l.b16 %v258
      %v391 = vunpack.c.h.b16 %v258
      %v392 = vunpack.c.l.b16 %v259
      %v393 = vunpack.c.h.b16 %v259
      %v394 = vunpack.c.l.b16 %v260
      %v395 = vunpack.c.h.b16 %v260
      %v396 = vpack.c.b16 %v334, %v332
      %v397 = vpack.c.b16 %v335, %v333
      %v398 = vpack.c.b16 %v338, %v336
      %v399 = vpack.c.b16 %v339, %v337
      %v400 = vpack.c.b16 %v342, %v340
      %v401 = vpack.c.b16 %v343, %v341
      %v402 = vpack.c.b16 %v346, %v344
      %v403 = vpack.c.b16 %v347, %v345
      %v404 = vpack.c.b16 %v350, %v348
      %v405 = vpack.c.b16 %v351, %v349
      %v406 = vpack.c.b16 %v354, %v352
      %v407 = vpack.c.b16 %v355, %v353
      %v408 = vpack.c.b16 %v358, %v356
      %v409 = vpack.c.b16 %v359, %v357
      %v410 = vpack.c.b16 %v362, %v360
      %v411 = vpack.c.b16 %v363, %v361
      %v412 = vpack.c.b16 %v366, %v364
      %v413 = vpack.c.b16 %v367, %v365
      %v414 = vpack.c.b16 %v370, %v368
      %v415 = vpack.c.b16 %v371, %v369
      %v416 = vpack.c.b16 %v374, %v372
      %v417 = vpack.c.b16 %v375, %v373
      %v418 = vpack.c.b16 %v378, %v376
      %v419 = vpack.c.b16 %v379, %v377
      %v420 = vpack.c.b16 %v382, %v380
      %v421 = vpack.c.b16 %v383, %v381
      %v422 = vpack.c.b16 %v386, %v384
      %v423 = vpack.c.b16 %v387, %v385
      %v424 = vpack.c.b16 %v390, %v388
      %v425 = vpack.c.b16 %v391, %v389
      %v426 = vpack.c.b16 %v394, %v392
      %v427 = vpack.c.b16 %v395, %v393
      %v492 = vunpack.c.l.b16 %v261
      %v493 = vunpack.c.l.b16 %v262
      %v494 = vunpack.c.l.b16 %v263
      %v495 = vunpack.c.l.b16 %v264
      %v496 = vunpack.c.l.b16 %v265
      %v497 = vunpack.c.l.b16 %v266
      %v498 = vunpack.c.l.b16 %v267
      %v499 = vunpack.c.l.b16 %v268
      %v500 = vunpack.c.l.b16 %v269
      %v501 = vunpack.c.l.b16 %v270
      %v502 = vunpack.c.l.b16 %v271
      %v503 = vunpack.c.l.b16 %v272
      %v504 = vunpack.c.l.b16 %v273
      %v505 = vunpack.c.l.b16 %v274
      %v506 = vunpack.c.l.b16 %v275
      %v507 = vunpack.c.l.b16 %v276
      %v508 = vunpack.c.l.b16 %v277
      %v509 = vunpack.c.l.b16 %v278
      %v510 = vunpack.c.l.b16 %v279
      %v511 = vunpack.c.l.b16 %v280
      %v512 = vunpack.c.l.b16 %v281
      %v513 = vunpack.c.l.b16 %v282
      %v514 = vunpack.c.l.b16 %v283
      %v515 = vunpack.c.l.b16 %v284
      %v516 = vunpack.c.l.b16 %v285
      %v517 = vunpack.c.l.b16 %v286
      %v518 = vunpack.c.l.b16 %v287
      %v519 = vunpack.c.l.b16 %v288
      %v520 = vunpack.c.l.b16 %v289
      %v521 = vunpack.c.l.b16 %v290
      %v522 = vunpack.c.l.b16 %v291
      %v523 = vunpack.c.l.b16 %v292
      %v524 = vpack.c.b16 %v493, %v492
      %v525 = vpack.c.b16 %v495, %v494
      %v526 = vpack.c.b16 %v497, %v496
      %v527 = vpack.c.b16 %v499, %v498
      %v528 = vpack.c.b16 %v501, %v500
      %v529 = vpack.c.b16 %v503, %v502
      %v530 = vpack.c.b16 %v505, %v504
      %v531 = vpack.c.b16 %v507, %v506
      %v532 = vpack.c.b16 %v509, %v508
      %v533 = vpack.c.b16 %v511, %v510
      %v534 = vpack.c.b16 %v513, %v512
      %v535 = vpack.c.b16 %v515, %v514
      %v536 = vpack.c.b16 %v517, %v516
      %v537 = vpack.c.b16 %v519, %v518
      %v538 = vpack.c.b16 %v521, %v520
      %v539 = vpack.c.b16 %v523, %v522
      %556 = vmatprep.subr.bf16.mxu0 0
      %557 = vmatpush1.bf16.msra.mxu0 %v524
      %558 = vmatprep.subr.bf16.mxu0 0
      %559 = vmatpush1.bf16.msra.mxu0 %v525
      %560 = vmatprep.subr.bf16.mxu0 0
      %561 = vmatpush1.bf16.msra.mxu0 %v526
      %562 = vmatprep.subr.bf16.mxu0 0
      %563 = vmatpush1.bf16.msra.mxu0 %v527
      %564 = vmatprep.subr.bf16.mxu0 0
      %565 = vmatpush1.bf16.msra.mxu0 %v528
      %566 = vmatprep.subr.bf16.mxu0 0
      %567 = vmatpush1.bf16.msra.mxu0 %v529
      %568 = vmatprep.subr.bf16.mxu0 0
      %569 = vmatpush1.bf16.msra.mxu0 %v530
      %570 = vmatprep.subr.bf16.mxu0 0
      %571 = vmatpush1.bf16.msra.mxu0 %v531
      %572 = vmatprep.subr.bf16.mxu0 0
      %573 = vmatpush1.bf16.msra.mxu0 %v532
      %574 = vmatprep.subr.bf16.mxu0 0
      %575 = vmatpush1.bf16.msra.mxu0 %v533
      %576 = vmatprep.subr.bf16.mxu0 0
      %577 = vmatpush1.bf16.msra.mxu0 %v534
      %578 = vmatprep.subr.bf16.mxu0 0
      %579 = vmatpush1.bf16.msra.mxu0 %v535
      %580 = vmatprep.subr.bf16.mxu0 0
      %581 = vmatpush1.bf16.msra.mxu0 %v536
      %582 = vmatprep.subr.bf16.mxu0 0
      %583 = vmatpush1.bf16.msra.mxu0 %v537
      %584 = vmatprep.subr.bf16.mxu0 0
      %585 = vmatpush1.bf16.msra.mxu0 %v538
      %586 = vmatprep.subr.bf16.mxu0 0
      %587 = vmatpush1.bf16.msra.mxu0 %v539
      %588 = vmatprep.mubr.bf16.mxu0 %v397
      %589 = vmatmul.mubr.bf16.gmra.mrb[0].mxu0 %v396
      %v590 = vpop.f32.mrb[0].mxu0
      %v591 = vadd.f32 %v298, %v590
      %v592 = vpop.f32.mrb[0].mxu0
      %v593 = vpop.f32.mrb[0].mxu0
      %v594 = vadd.f32 %v298, %v593
      %v595 = vpop.f32.mrb[0].mxu0
      %596 = vmatprep.mubr.bf16.mxu0 %v399
      %597 = vmatmul.mubr.bf16.gmra.mrb[0].mxu0 %v398
      %v598 = vpop.f32.mrb[0].mxu0
      %v599 = vadd.f32 %v298, %v598
      %v600 = vpop.f32.mrb[0].mxu0
      %v601 = vpop.f32.mrb[0].mxu0
      %v602 = vadd.f32 %v298, %v601
      %v603 = vpop.f32.mrb[0].mxu0
      %604 = vmatprep.mubr.bf16.mxu0 %v401
      %605 = vmatmul.mubr.bf16.gmra.mrb[0].mxu0 %v400
      %v606 = vpop.f32.mrb[0].mxu0
      %v607 = vadd.f32 %v298, %v606
      %v608 = vpop.f32.mrb[0].mxu0
      %v609 = vpop.f32.mrb[0].mxu0
      %v610 = vadd.f32 %v298, %v609
      %v611 = vpop.f32.mrb[0].mxu0
      %612 = vmatprep.mubr.bf16.mxu0 %v403
      %613 = vmatmul.mubr.bf16.gmra.mrb[0].mxu0 %v402
      %v614 = vpop.f32.mrb[0].mxu0
      %v615 = vadd.f32 %v298, %v614
      %v616 = vpop.f32.mrb[0].mxu0
      %v617 = vpop.f32.mrb[0].mxu0
      %v618 = vadd.f32 %v298, %v617
      %v619 = vpop.f32.mrb[0].mxu0
      %620 = vmatprep.mubr.bf16.mxu0 %v405
      %621 = vmatmul.mubr.bf16.gmra.mrb[0].mxu0 %v404
      %v622 = vpop.f32.mrb[0].mxu0
      %v623 = vadd.f32 %v298, %v622
      %v624 = vpop.f32.mrb[0].mxu0
      %v625 = vpop.f32.mrb[0].mxu0
      %v626 = vadd.f32 %v298, %v625
      %v627 = vpop.f32.mrb[0].mxu0
      %628 = vmatprep.mubr.bf16.mxu0 %v407
      %629 = vmatmul.mubr.bf16.gmra.mrb[0].mxu0 %v406
      %v630 = vpop.f32.mrb[0].mxu0
      %v631 = vadd.f32 %v298, %v630
      %v632 = vpop.f32.mrb[0].mxu0
      %v633 = vpop.f32.mrb[0].mxu0
      %v634 = vadd.f32 %v298, %v633
      %v635 = vpop.f32.mrb[0].mxu0
      %636 = vmatprep.mubr.bf16.mxu0 %v409
      %637 = vmatmul.mubr.bf16.gmra.mrb[0].mxu0 %v408
      %v638 = vpop.f32.mrb[0].mxu0
      %v639 = vadd.f32 %v298, %v638
      %v640 = vpop.f32.mrb[0].mxu0
      %v641 = vpop.f32.mrb[0].mxu0
      %v642 = vadd.f32 %v298, %v641
      %v643 = vpop.f32.mrb[0].mxu0
      %644 = vmatprep.mubr.bf16.mxu0 %v411
      %645 = vmatmul.mubr.bf16.gmra.mrb[0].mxu0 %v410
      %v646 = vpop.f32.mrb[0].mxu0
      %v647 = vadd.f32 %v298, %v646
      %v648 = vpop.f32.mrb[0].mxu0
      %v649 = vpop.f32.mrb[0].mxu0
      %v650 = vadd.f32 %v298, %v649
      %v651 = vpop.f32.mrb[0].mxu0
      %652 = vmatprep.mubr.bf16.mxu0 %v413
      %653 = vmatmul.mubr.bf16.gmra.mrb[0].mxu0 %v412
      %v654 = vpop.f32.mrb[0].mxu0
      %v655 = vadd.f32 %v298, %v654
      %v656 = vpop.f32.mrb[0].mxu0
      %v657 = vpop.f32.mrb[0].mxu0
      %v658 = vadd.f32 %v298, %v657
      %v659 = vpop.f32.mrb[0].mxu0
      %660 = vmatprep.mubr.bf16.mxu0 %v415
      %661 = vmatmul.mubr.bf16.gmra.mrb[0].mxu0 %v414
      %v662 = vpop.f32.mrb[0].mxu0
      %v663 = vadd.f32 %v298, %v662
      %v664 = vpop.f32.mrb[0].mxu0
      %v665 = vpop.f32.mrb[0].mxu0
      %v666 = vadd.f32 %v298, %v665
      %v667 = vpop.f32.mrb[0].mxu0
      %668 = vmatprep.mubr.bf16.mxu0 %v417
      %669 = vmatmul.mubr.bf16.gmra.mrb[0].mxu0 %v416
      %v670 = vpop.f32.mrb[0].mxu0
      %v671 = vadd.f32 %v298, %v670
      %v672 = vpop.f32.mrb[0].mxu0
      %v673 = vpop.f32.mrb[0].mxu0
      %v674 = vadd.f32 %v298, %v673
      %v675 = vpop.f32.mrb[0].mxu0
      %676 = vmatprep.mubr.bf16.mxu0 %v419
      %677 = vmatmul.mubr.bf16.gmra.mrb[0].mxu0 %v418
      %v678 = vpop.f32.mrb[0].mxu0
      %v679 = vadd.f32 %v298, %v678
      %v680 = vpop.f32.mrb[0].mxu0
      %v681 = vpop.f32.mrb[0].mxu0
      %v682 = vadd.f32 %v298, %v681
      %v683 = vpop.f32.mrb[0].mxu0
      %684 = vmatprep.mubr.bf16.mxu0 %v421
      %685 = vmatmul.mubr.bf16.gmra.mrb[0].mxu0 %v420
      %v686 = vpop.f32.mrb[0].mxu0
      %v687 = vadd.f32 %v298, %v686
      %v688 = vpop.f32.mrb[0].mxu0
      %v689 = vpop.f32.mrb[0].mxu0
      %v690 = vadd.f32 %v298, %v689
      %v691 = vpop.f32.mrb[0].mxu0
      %692 = vmatprep.mubr.bf16.mxu0 %v423
      %693 = vmatmul.mubr.bf16.gmra.mrb[0].mxu0 %v422
      %v694 = vpop.f32.mrb[0].mxu0
      %v695 = vadd.f32 %v298, %v694
      %v696 = vpop.f32.mrb[0].mxu0
      %v697 = vpop.f32.mrb[0].mxu0
      %v698 = vadd.f32 %v298, %v697
      %v699 = vpop.f32.mrb[0].mxu0
      %700 = vmatprep.mubr.bf16.mxu0 %v425
      %701 = vmatmul.mubr.bf16.gmra.mrb[0].mxu0 %v424
      %v702 = vpop.f32.mrb[0].mxu0
      %v703 = vadd.f32 %v298, %v702
      %v704 = vpop.f32.mrb[0].mxu0
      %v705 = vpop.f32.mrb[0].mxu0
      %v706 = vadd.f32 %v298, %v705
      %v707 = vpop.f32.mrb[0].mxu0
      %708 = vmatprep.mubr.bf16.mxu0 %v427
      %709 = vmatmul.mubr.bf16.gmra.mrb[0].mxu0 %v426
      %v710 = vpop.f32.mrb[0].mxu0
      %v711 = vadd.f32 %v298, %v710
      %v712 = vpop.f32.mrb[0].mxu0
      %v713 = vpop.f32.mrb[0].mxu0
      %v714 = vadd.f32 %v298, %v713
      %v715 = vpop.f32.mrb[0].mxu0
      %716 = vdwg.mxu0
      %v717 = vmax.f32 %v591, 0.0
      %v718 = vmax.f32 %v594, 0.0
      %v719 = vmax.f32 %v599, 0.0
      %v720 = vmax.f32 %v602, 0.0
      %v721 = vmax.f32 %v607, 0.0
      %v722 = vmax.f32 %v610, 0.0
      %v723 = vmax.f32 %v615, 0.0
      %v724 = vmax.f32 %v618, 0.0
      %v725 = vmax.f32 %v623, 0.0
      %v726 = vmax.f32 %v626, 0.0
      %v727 = vmax.f32 %v631, 0.0
      %v728 = vmax.f32 %v634, 0.0
      %v729 = vmax.f32 %v639, 0.0
      %v730 = vmax.f32 %v642, 0.0
      %v731 = vmax.f32 %v647, 0.0
      %v732 = vmax.f32 %v650, 0.0
      %v733 = vmax.f32 %v655, 0.0
      %v734 = vmax.f32 %v658, 0.0
      %v735 = vmax.f32 %v663, 0.0
      %v736 = vmax.f32 %v666, 0.0
      %v737 = vmax.f32 %v671, 0.0
      %v738 = vmax.f32 %v674, 0.0
      %v739 = vmax.f32 %v679, 0.0
      %v740 = vmax.f32 %v682, 0.0
      %v741 = vmax.f32 %v687, 0.0
      %v742 = vmax.f32 %v690, 0.0
      %v743 = vmax.f32 %v695, 0.0
      %v744 = vmax.f32 %v698, 0.0
      %v745 = vmax.f32 %v703, 0.0
      %v746 = vmax.f32 %v706, 0.0
      %v747 = vmax.f32 %v711, 0.0
      %v748 = vmax.f32 %v714, 0.0
      %v749 = vpack.c.bf16 %v718, %v717
      %v750 = vpack.c.bf16 %v720, %v719
      %v751 = vpack.c.bf16 %v722, %v721
      %v752 = vpack.c.bf16 %v724, %v723
      %v753 = vpack.c.bf16 %v726, %v725
      %v754 = vpack.c.bf16 %v728, %v727
      %v755 = vpack.c.bf16 %v730, %v729
      %v756 = vpack.c.bf16 %v732, %v731
      %v757 = vpack.c.bf16 %v734, %v733
      %v758 = vpack.c.bf16 %v736, %v735
      %v759 = vpack.c.bf16 %v738, %v737
      %v760 = vpack.c.bf16 %v740, %v739
      %v761 = vpack.c.bf16 %v742, %v741
      %v762 = vpack.c.bf16 %v744, %v743
      %v763 = vpack.c.bf16 %v746, %v745
      %v764 = vpack.c.bf16 %v748, %v747
      %v781 = vunpack.c.l.b16 %v749
      %v782 = vunpack.c.h.b16 %v749
      %v783 = vunpack.c.l.b16 %v750
      %v784 = vunpack.c.h.b16 %v750
      %v785 = vunpack.c.l.b16 %v751
      %v786 = vunpack.c.h.b16 %v751
      %v787 = vunpack.c.l.b16 %v752
      %v788 = vunpack.c.h.b16 %v752
      %v789 = vunpack.c.l.b16 %v753
      %v790 = vunpack.c.h.b16 %v753
      %v791 = vunpack.c.l.b16 %v754
      %v792 = vunpack.c.h.b16 %v754
      %v793 = vunpack.c.l.b16 %v755
      %v794 = vunpack.c.h.b16 %v755
      %v795 = vunpack.c.l.b16 %v756
      %v796 = vunpack.c.h.b16 %v756
      %v797 = vunpack.c.l.b16 %v757
      %v798 = vunpack.c.h.b16 %v757
      %v799 = vunpack.c.l.b16 %v758
      %v800 = vunpack.c.h.b16 %v758
      %v801 = vunpack.c.l.b16 %v759
      %v802 = vunpack.c.h.b16 %v759
      %v803 = vunpack.c.l.b16 %v760
      %v804 = vunpack.c.h.b16 %v760
      %v805 = vunpack.c.l.b16 %v761
      %v806 = vunpack.c.h.b16 %v761
      %v807 = vunpack.c.l.b16 %v762
      %v808 = vunpack.c.h.b16 %v762
      %v809 = vunpack.c.l.b16 %v763
      %v810 = vunpack.c.h.b16 %v763
      %v811 = vunpack.c.l.b16 %v764
      %v812 = vunpack.c.h.b16 %v764
      %v813 = vpack.c.b16 %v781, %v781
      %v814 = vpack.c.b16 %v782, %v782
      %v815 = vpack.c.b16 %v783, %v783
      %v816 = vpack.c.b16 %v784, %v784
      %v817 = vpack.c.b16 %v785, %v785
      %v818 = vpack.c.b16 %v786, %v786
      %v819 = vpack.c.b16 %v787, %v787
      %v820 = vpack.c.b16 %v788, %v788
      %v821 = vpack.c.b16 %v789, %v789
      %v822 = vpack.c.b16 %v790, %v790
      %v823 = vpack.c.b16 %v791, %v791
      %v824 = vpack.c.b16 %v792, %v792
      %v825 = vpack.c.b16 %v793, %v793
      %v826 = vpack.c.b16 %v794, %v794
      %v827 = vpack.c.b16 %v795, %v795
      %v828 = vpack.c.b16 %v796, %v796
      %v829 = vpack.c.b16 %v797, %v797
      %v830 = vpack.c.b16 %v798, %v798
      %v831 = vpack.c.b16 %v799, %v799
      %v832 = vpack.c.b16 %v800, %v800
      %v833 = vpack.c.b16 %v801, %v801
      %v834 = vpack.c.b16 %v802, %v802
      %v835 = vpack.c.b16 %v803, %v803
      %v836 = vpack.c.b16 %v804, %v804
      %v837 = vpack.c.b16 %v805, %v805
      %v838 = vpack.c.b16 %v806, %v806
      %v839 = vpack.c.b16 %v807, %v807
      %v840 = vpack.c.b16 %v808, %v808
      %v841 = vpack.c.b16 %v809, %v809
      %v842 = vpack.c.b16 %v810, %v810
      %v843 = vpack.c.b16 %v811, %v811
      %v844 = vpack.c.b16 %v812, %v812
      %877 = vst [vmem:[%s226] sm:$0xf] %v813
      %878 = vst [vmem:[%s226 + $0x4] sm:$0xf] %v814
      %879 = vst [vmem:[%s226 + $0x8] sm:$0xf] %v815
      %880 = vst [vmem:[%s226 + $0xc] sm:$0xf] %v816
      %881 = vst [vmem:[%s226 + $0x10] sm:$0xf] %v817
      %882 = vst [vmem:[%s226 + $0x14] sm:$0xf] %v818
      %883 = vst [vmem:[%s226 + $0x18] sm:$0xf] %v819
      %884 = vst [vmem:[%s226 + $0x1c] sm:$0xf] %v820
      %885 = vst [vmem:[%s226 + $0x20] sm:$0xf] %v821
      %886 = vst [vmem:[%s226 + $0x24] sm:$0xf] %v822
      %887 = vst [vmem:[%s226 + $0x28] sm:$0xf] %v823
      %888 = vst [vmem:[%s226 + $0x2c] sm:$0xf] %v824
      %889 = vst [vmem:[%s226 + $0x30] sm:$0xf] %v825
      %890 = vst [vmem:[%s226 + $0x34] sm:$0xf] %v826
      %891 = vst [vmem:[%s226 + $0x38] sm:$0xf] %v827
      %892 = vst [vmem:[%s226 + $0x3c] sm:$0xf] %v828
      %893 = vst [vmem:[%s226 + $0x40] sm:$0xf] %v829
      %894 = vst [vmem:[%s226 + $0x44] sm:$0xf] %v830
      %895 = vst [vmem:[%s226 + $0x48] sm:$0xf] %v831
      %896 = vst [vmem:[%s226 + $0x4c] sm:$0xf] %v832
      %897 = vst [vmem:[%s226 + $0x50] sm:$0xf] %v833
      %898 = vst [vmem:[%s226 + $0x54] sm:$0xf] %v834
      %899 = vst [vmem:[%s226 + $0x58] sm:$0xf] %v835
      %900 = vst [vmem:[%s226 + $0x5c] sm:$0xf] %v836
      %901 = vst [vmem:[%s226 + $0x60] sm:$0xf] %v837
      %902 = vst [vmem:[%s226 + $0x64] sm:$0xf] %v838
      %903 = vst [vmem:[%s226 + $0x68] sm:$0xf] %v839
      %904 = vst [vmem:[%s226 + $0x6c] sm:$0xf] %v840
      %905 = vst [vmem:[%s226 + $0x70] sm:$0xf] %v841
      %906 = vst [vmem:[%s226 + $0x74] sm:$0xf] %v842
      %907 = vst [vmem:[%s226 + $0x78] sm:$0xf] %v843
      %908 = vst [vmem:[%s226 + $0x7c] sm:$0xf] %v844
      %s909 = smul.u32 32, %s18
      %p910 = scmp.lt.s32.totalorder %s909, 63
      %s911 = scalar_select %p910, %s909, 63
      %p912 = scmp.lt.s32.totalorder %s19, 0
      %s913 = scalar_select %p912, %s19, 0
      %s914 = sadd.s32 %s913, %s911
      %s915 = smul.addr %s914, 4
      %s916 = scalar_lea.vmem %s3, %s915
      // Predicated region
      $region33: #{_lambda_.8} parent=31 // pred_check
        %p917 = pneg %p124
      $region34: #{_lambda_.8} parent=31 // pred_check_branch
        %919 = sbr.rel (%p917) target = $region36
      $region35: #{_lambda_.8} parent=31 // pred_region
        %s920 = smul.u32 32, %s18
      $region36: #{_lambda_.8} parent=31 // pred_fallthru
        _
    $region32: #{_lambda_.8} parent=5 // pred_fallthru
      _
    %p921 = scmp.le.s32.totalorder 2, %s9
    // Predicated region
    $region37: #{_lambda_.8} parent=5 // pred_check
      %p922 = pneg %p921
    $region38: #{_lambda_.8} parent=5 // pred_check_branch
      %924 = sbr.rel (%p922) target = $region40
    $region39: #{_lambda_.8} parent=5 // pred_region
      %s925 = ssub.s32 %s9, 2
      // Predicated region
      $region41: #{_lambda_.8} parent=39 // pred_check
        %p926 = pneg %p130
      $region42: #{_lambda_.8} parent=39 // pred_check_branch
        %928 = sbr.rel (%p926) target = $region44
      $region43: #{_lambda_.8} parent=39 // pred_region
        %s929 = smul.u32 32, %s20
        %p930 = scmp.lt.s32.totalorder %s929, 63
        %s931 = scalar_select %p930, %s929, 63
        %p932 = scmp.lt.s32.totalorder %s21, 0
        %s933 = scalar_select %p932, %s21, 0
        %s934 = sadd.s32 %s933, %s931
        %s935 = smul.addr %s934, 4
        %s936 = scalar_lea.vmem %s3, %s935
      $region44: #{_lambda_.8} parent=39 // pred_fallthru
        _
    $region40: #{_lambda_.8} parent=5 // pred_fallthru
      _
  $region6: #{_lambda_.8} parent=0 // loop_footer
    %s13 = sadd.s32 1, %s9
  $region7: #{_lambda_.8} parent=0 // loop_footer_branch
    %8 = sbr.rel target = $region3
  $region8: #{_lambda_.8} parent=0 // loop_exit
    _

// kernel: _lambda_.9
$region0: #{_lambda_.9}
  #allocation0 [shape = 'u32[]', space=smem, size = 0x4, offset = 0x4, fixed_abs, tag = 'smem constant byte address 0x4 - core index']
  #allocation1 [shape = 'u32[144,128]{1,0:T(1,128)}', space=vmem, size = 0x12000, scoped, tag = 'internal scratch']
  %s0 = inlined_call_operand.vmem [shape: bf16[512,256], index: 0, kind: input, shape index: {}]
  %s1 = inlined_call_operand.vmem [shape: bf16[256,128], index: 1, kind: input, shape index: {}]
  %s2 = inlined_call_operand.vmem [shape: f32[1,128], index: 2, kind: input, shape index: {}]
  %s3 = inlined_call_operand.vmem [shape: bf16[512,128], index: 3, kind: input, shape index: {}]
  %s4 = inlined_call_operand.vmem [shape: bf16[512,128], index: 4, kind: output, shape index: {}]
  %s5 = sld [smem:[#allocation0]]
  $region49: #{_lambda_.9} parent=0
    _
  %s7 = ssub.s32 1, %s5
  %s8 = scalar_select 0, %s7, %s5
  loop: start=0, step=1, limit=4
  $region2: #{_lambda_.9} parent=0 // loop_pre_header
    _
  $region3: #{_lambda_.9} parent=0 // loop_header
    %s10 = sphi 0, %s14
    %p11 = scmp.ge.s32.totalorder %s10, 4
    %s17 = sphi 0, %s29
    %s18 = sphi 0, %s25
    %s19 = sphi 0, %s17
    %s20 = sphi 0, %s18
    %s21 = sphi 0, %s19
    %s22 = sphi 0, %s20
    %s32 = sphi 0, %s34
    %s35 = sphi 0, %s32
    %s36 = sphi 0, %s35
    %s52 = sphi 0, %s36
    %s58 = sphi 0, %s60
    %s61 = sphi 0, %s58
    %s62 = sphi 0, %s61
    %s78 = sphi 0, %s62
    %s84 = sphi 0, %s86
    %s87 = sphi 0, %s84
    %s88 = sphi 0, %s87
    %s104 = sphi 0, %s88
    %s112 = sphi 0, %s114
    %s115 = sphi 0, %s112
    %s116 = sphi 0, %s115
    %s132 = sphi 0, %s116
    %s140 = sphi 0, %s142
    %s143 = sphi 0, %s140
    %s144 = sphi 0, %s143
    %s160 = sphi 0, %s144
  $region4: #{_lambda_.9} parent=0 // loop_header_branch
    %13 = sbr.rel (%p11) target = $region8
  $region5: #{_lambda_.9} parent=0 // loop_body
    %s15 = ssub.s32 %s10, 1
    %s16 = ssub.s32 %s10, 2
    %s23 = sadd.s32 1, %s18
    %p24 = scmp.ge.s32.totalorder %s23, 1
    %s25 = scalar_select %p24, 0, %s23
    %s26 = sadd.s32 1, %s17
    %s27 = scalar_select %p24, %s26, %s17
    %p28 = scmp.ge.s32.totalorder %s27, 2
    %s29 = scalar_select %p28, 0, %s27
    %s30 = ssub.s32 %s17, %s29
    %p31 = scmp.eq.s32.totalorder %s30, 0
    %s33 = sadd.s32 %s32, 1
    %s34 = scalar_select %p31, %s32, %s33
    %p37 = pneg %p31
    %p38 = scmp.eq.s32.totalorder %s10, 1
    %p39 = por %p37, %p38
    %p40 = scmp.ne.s32.totalorder %s32, %s35
    %p41 = scmp.eq.s32.totalorder %s10, 0
    %p42 = por %p40, %p41
    %p43 = scmp.ne.s32.totalorder %s32, %s35
    %p44 = scmp.eq.s32.totalorder %s15, 1
    %p45 = por %p43, %p44
    %p46 = scmp.ne.s32.totalorder %s35, %s36
    %p47 = scmp.eq.s32.totalorder %s15, 0
    %p48 = por %p46, %p47
    %p49 = scmp.ne.s32.totalorder %s35, %s36
    %p50 = scmp.eq.s32.totalorder %s16, 1
    %p51 = por %p49, %p50
    %p53 = scmp.ne.s32.totalorder %s36, %s52
    %p54 = scmp.eq.s32.totalorder %s16, 0
    %p55 = por %p53, %p54
    %s56 = ssub.s32 %s18, %s25
    %p57 = scmp.eq.s32.totalorder %s56, 0
    %s59 = sadd.s32 %s58, 1
    %s60 = scalar_select %p57, %s58, %s59
    %p63 = pneg %p57
    %p64 = scmp.eq.s32.totalorder %s10, 1
    %p65 = por %p63, %p64
    %p66 = scmp.ne.s32.totalorder %s58, %s61
    %p67 = scmp.eq.s32.totalorder %s10, 0
    %p68 = por %p66, %p67
    %p69 = scmp.ne.s32.totalorder %s58, %s61
    %p70 = scmp.eq.s32.totalorder %s15, 1
    %p71 = por %p69, %p70
    %p72 = scmp.ne.s32.totalorder %s61, %s62
    %p73 = scmp.eq.s32.totalorder %s15, 0
    %p74 = por %p72, %p73
    %p75 = scmp.ne.s32.totalorder %s61, %s62
    %p76 = scmp.eq.s32.totalorder %s16, 1
    %p77 = por %p75, %p76
    %p79 = scmp.ne.s32.totalorder %s62, %s78
    %p80 = scmp.eq.s32.totalorder %s16, 0
    %p81 = por %p79, %p80
    %s82 = ssub.s32 %s18, %s25
    %p83 = scmp.eq.s32.totalorder %s82, 0
    %s85 = sadd.s32 %s84, 1
    %s86 = scalar_select %p83, %s84, %s85
    %p89 = pneg %p83
    %p90 = scmp.eq.s32.totalorder %s10, 1
    %p91 = por %p89, %p90
    %p92 = scmp.ne.s32.totalorder %s84, %s87
    %p93 = scmp.eq.s32.totalorder %s10, 0
    %p94 = por %p92, %p93
    %p95 = scmp.ne.s32.totalorder %s84, %s87
    %p96 = scmp.eq.s32.totalorder %s15, 1
    %p97 = por %p95, %p96
    %p98 = scmp.ne.s32.totalorder %s87, %s88
    %p99 = scmp.eq.s32.totalorder %s15, 0
    %p100 = por %p98, %p99
    %p101 = scmp.ne.s32.totalorder %s87, %s88
    %p102 = scmp.eq.s32.totalorder %s16, 1
    %p103 = por %p101, %p102
    %p105 = scmp.ne.s32.totalorder %s88, %s104
    %p106 = scmp.eq.s32.totalorder %s16, 0
    %p107 = por %p105, %p106
    %s108 = ssub.s32 %s17, %s29
    %s109 = ssub.s32 %s18, %s25
    %s110 = sor.u32 %s108, %s109
    %p111 = scmp.eq.s32.totalorder %s110, 0
    %s113 = sadd.s32 %s112, 1
    %s114 = scalar_select %p111, %s112, %s113
    %p117 = pneg %p111
    %p118 = scmp.eq.s32.totalorder %s10, 1
    %p119 = por %p117, %p118
    %p120 = scmp.ne.s32.totalorder %s112, %s115
    %p121 = scmp.eq.s32.totalorder %s10, 0
    %p122 = por %p120, %p121
    %p123 = scmp.ne.s32.totalorder %s112, %s115
    %p124 = scmp.eq.s32.totalorder %s15, 1
    %p125 = por %p123, %p124
    %p126 = scmp.ne.s32.totalorder %s115, %s116
    %p127 = scmp.eq.s32.totalorder %s15, 0
    %p128 = por %p126, %p127
    %p129 = scmp.ne.s32.totalorder %s115, %s116
    %p130 = scmp.eq.s32.totalorder %s16, 1
    %p131 = por %p129, %p130
    %p133 = scmp.ne.s32.totalorder %s116, %s132
    %p134 = scmp.eq.s32.totalorder %s16, 0
    %p135 = por %p133, %p134
    %s136 = ssub.s32 %s17, %s29
    %s137 = ssub.s32 %s18, %s25
    %s138 = sor.u32 %s136, %s137
    %p139 = scmp.eq.s32.totalorder %s138, 0
    %s141 = sadd.s32 %s140, 1
    %s142 = scalar_select %p139, %s140, %s141
    %p145 = pneg %p139
    %p146 = scmp.eq.s32.totalorder %s10, 1
    %p147 = por %p145, %p146
    %p148 = scmp.ne.s32.totalorder %s140, %s143
    %p149 = scmp.eq.s32.totalorder %s10, 0
    %p150 = por %p148, %p149
    %p151 = scmp.ne.s32.totalorder %s140, %s143
    %p152 = scmp.eq.s32.totalorder %s15, 1
    %p153 = por %p151, %p152
    %p154 = scmp.ne.s32.totalorder %s143, %s144
    %p155 = scmp.eq.s32.totalorder %s15, 0
    %p156 = por %p154, %p155
    %p157 = scmp.ne.s32.totalorder %s143, %s144
    %p158 = scmp.eq.s32.totalorder %s16, 1
    %p159 = por %p157, %p158
    %p161 = scmp.ne.s32.totalorder %s144, %s160
    %p162 = scmp.eq.s32.totalorder %s16, 0
    %p163 = por %p161, %p162
    %p164 = scmp.le.s32.totalorder 1, %s10
    %p165 = scmp.lt.s32.totalorder %s10, 3
    %p166 = pnand %p164, %p165
    %p167 = pneg %p166
    // Predicated region
    $region9: #{_lambda_.9} parent=5 // pred_check
      _
    $region10: #{_lambda_.9} parent=5 // pred_check_branch
      %169 = sbr.rel (%p166) target = $region12
    $region11: #{_lambda_.9} parent=5 // pred_region
      %s170 = ssub.s32 %s10, 1
      // Predicated region
      $region13: #{_lambda_.9} parent=11 // pred_check
        %p171 = pneg %p74
      $region14: #{_lambda_.9} parent=11 // pred_check_branch
        %173 = sbr.rel (%p171) target = $region16
      $region15: #{_lambda_.9} parent=11 // pred_region
        %p174 = scmp.lt.s32.totalorder %s20, 0
        %s175 = scalar_select %p174, %s20, 0
        %s176 = smul.addr %s175, 4
        %s177 = scalar_lea.vmem %s1, %s176
      $region16: #{_lambda_.9} parent=11 // pred_fallthru
        _
      // Predicated region
      $region17: #{_lambda_.9} parent=11 // pred_check
        %p178 = pneg %p100
      $region18: #{_lambda_.9} parent=11 // pred_check_branch
        %180 = sbr.rel (%p178) target = $region20
      $region19: #{_lambda_.9} parent=11 // pred_region
        %p181 = scmp.lt.s32.totalorder %s20, 0
        %s182 = scalar_select %p181, %s20, 0
        %s183 = scalar_lea.vmem %s2, %s182
      $region20: #{_lambda_.9} parent=11 // pred_fallthru
        _
    $region12: #{_lambda_.9} parent=5 // pred_fallthru
      _
    %p184 = scmp.lt.s32.totalorder %s10, 2
    // Predicated region
    $region21: #{_lambda_.9} parent=5 // pred_check
      %p185 = pneg %p184
    $region22: #{_lambda_.9} parent=5 // pred_check_branch
      %187 = sbr.rel (%p185) target = $region24
    $region23: #{_lambda_.9} parent=5 // pred_region
      // Predicated region
      $region25: #{_lambda_.9} parent=23 // pred_check
        %p188 = pneg %p42
      $region26: #{_lambda_.9} parent=23 // pred_check_branch
        %190 = sbr.rel (%p188) target = $region28
      $region27: #{_lambda_.9} parent=23 // pred_region
        %s191 = smul.u32 32, %s17
        %p192 = scmp.lt.s32.totalorder %s191, 63
        %s193 = scalar_select %p192, %s191, 63
        %s194 = smul.addr %s193, 2
        %s195 = smul.addr %s194, 4
        %s196 = scalar_lea.vmem %s0, %s195
        %s197 = smul.u32 32, %s17
      $region28: #{_lambda_.9} parent=23 // pred_fallthru
        _
      // Predicated region
      $region29: #{_lambda_.9} parent=23 // pred_check
        %p198 = pneg %p122
      $region30: #{_lambda_.9} parent=23 // pred_check_branch
        %200 = sbr.rel (%p198) target = $region32
      $region31: #{_lambda_.9} parent=23 // pred_region
        %s201 = smul.u32 32, %s17
        %p202 = scmp.lt.s32.totalorder %s201, 63
        %s203 = scalar_select %p202, %s201, 63
        %p204 = scmp.lt.s32.totalorder %s18, 0
        %s205 = scalar_select %p204, %s18, 0
        %s206 = sadd.s32 %s205, %s203
        %s207 = smul.addr %s206, 4
        %s208 = scalar_lea.vmem %s3, %s207
        %s209 = smul.u32 32, %s17
      $region32: #{_lambda_.9} parent=23 // pred_fallthru
        _
    $region24: #{_lambda_.9} parent=5 // pred_fallthru
      _
    %p210 = scmp.le.s32.totalorder 1, %s10
    %p211 = scmp.lt.s32.totalorder %s10, 3
    %p212 = pnand %p210, %p211
    %p213 = pneg %p212
    // Predicated region
    $region33: #{_lambda_.9} parent=5 // pred_check
      _
    $region34: #{_lambda_.9} parent=5 // pred_check_branch
      %215 = sbr.rel (%p212) target = $region36
    $region35: #{_lambda_.9} parent=5 // pred_region
      %s216 = ssub.s32 %s10, 1
      %s217 = smul.u32 32, %s19
      %p218 = scmp.lt.s32.totalorder %s217, 63
      %s219 = scalar_select %p218, %s217, 63
      %s220 = smul.addr %s219, 2
      %s221 = smul.addr %s220, 4
      %s222 = scalar_lea.vmem %s0, %s221
      %p223 = pneg %p48
      %p224 = pneg %p45
      %p225 = scmp.lt.s32.totalorder %s20, 0
      %s226 = scalar_select %p225, %s20, 0
      %s227 = smul.addr %s226, 4
      %s228 = scalar_lea.vmem %s1, %s227
      %p229 = pneg %p74
      %p230 = pneg %p71
      %p231 = scmp.lt.s32.totalorder %s20, 0
      %s232 = scalar_select %p231, %s20, 0
      %s233 = scalar_lea.vmem %s2, %s232
      %p234 = pneg %p100
      %p235 = pneg %p97
      %s236 = smul.u32 32, %s19
      %p237 = scmp.lt.s32.totalorder %s236, 63
      %s238 = scalar_select %p237, %s236, 63
      %p239 = scmp.lt.s32.totalorder %s20, 0
      %s240 = scalar_select %p239, %s20, 0
      %s241 = sadd.s32 %s240, %s238
      %s242 = smul.addr %s241, 4
      %s243 = scalar_lea.vmem %s3, %s242
      %p244 = pneg %p128
      %p245 = pneg %p125
      %p246 = pneg %p156
      %p247 = pneg %p153
      %s248 = smul.u32 32, %s19
      %p249 = scmp.lt.s32.totalorder %s248, 63
      %s250 = scalar_select %p249, %s248, 63
      %p251 = scmp.lt.s32.totalorder %s20, 0
      %s252 = scalar_select %p251, %s20, 0
      %s253 = sadd.s32 %s252, %s250
      %s254 = smul.addr %s253, 4
      %s255 = scalar_lea.vmem %s4, %s254
      %s256 = smul.u32 32, %s19
      %p257 = scmp.lt.s32.totalorder %s256, 63
      %s258 = scalar_select %p257, %s256, 63
      %s259 = smul.addr %s258, 2
      %s260 = smul.addr %s259, 4
      %s261 = scalar_lea.vmem %s0, %s260
      %s262 = smul.u32 32, %s19
      %p263 = scmp.lt.s32.totalorder %s20, 0
      %s264 = scalar_select %p263, %s20, 0
      %s265 = smul.addr %s264, 4
      %s266 = scalar_lea.vmem %s1, %s265
      %p267 = scmp.lt.s32.totalorder %s20, 0
      %s268 = scalar_select %p267, %s20, 0
      %s269 = scalar_lea.vmem %s2, %s268
      %s270 = smul.u32 32, %s19
      %p271 = scmp.lt.s32.totalorder %s270, 63
      %s272 = scalar_select %p271, %s270, 63
      %p273 = scmp.lt.s32.totalorder %s20, 0
      %s274 = scalar_select %p273, %s20, 0
      %s275 = sadd.s32 %s274, %s272
      %s276 = smul.addr %s275, 4
      %s277 = scalar_lea.vmem %s3, %s276
      %s278 = smul.u32 32, %s19
      %s279 = smul.u32 32, %s19
      %p280 = scmp.lt.s32.totalorder %s279, 63
      %s281 = scalar_select %p280, %s279, 63
      %p282 = scmp.lt.s32.totalorder %s20, 0
      %s283 = scalar_select %p282, %s20, 0
      %s284 = sadd.s32 %s283, %s281
      %s285 = smul.addr %s284, 4
      %s286 = scalar_lea.vmem %s4, %s285
      %s287 = smul.u32 32, %s19
      %v289 = vld [vmem:[%s261] sm:$0xff]
      %v290 = vld [vmem:[%s261 + $0x8] sm:$0xff]
      %v291 = vld [vmem:[%s261 + $0x10] sm:$0xff]
      %v292 = vld [vmem:[%s261 + $0x18] sm:$0xff]
      %v293 = vld [vmem:[%s261 + $0x20] sm:$0xff]
      %v294 = vld [vmem:[%s261 + $0x28] sm:$0xff]
      %v295 = vld [vmem:[%s261 + $0x30] sm:$0xff]
      %v296 = vld [vmem:[%s261 + $0x38] sm:$0xff]
      %v297 = vld [vmem:[%s261 + $0x40] sm:$0xff]
      %v298 = vld [vmem:[%s261 + $0x48] sm:$0xff]
      %v299 = vld [vmem:[%s261 + $0x50] sm:$0xff]
      %v300 = vld [vmem:[%s261 + $0x58] sm:$0xff]
      %v301 = vld [vmem:[%s261 + $0x60] sm:$0xff]
      %v302 = vld [vmem:[%s261 + $0x68] sm:$0xff]
      %v303 = vld [vmem:[%s261 + $0x70] sm:$0xff]
      %v304 = vld [vmem:[%s261 + $0x78] sm:$0xff]
      %v305 = vld [vmem:[%s261 + $0x80] sm:$0xff]
      %v306 = vld [vmem:[%s261 + $0x88] sm:$0xff]
      %v307 = vld [vmem:[%s261 + $0x90] sm:$0xff]
      %v308 = vld [vmem:[%s261 + $0x98] sm:$0xff]
      %v309 = vld [vmem:[%s261 + $0xa0] sm:$0xff]
      %v310 = vld [vmem:[%s261 + $0xa8] sm:$0xff]
      %v311 = vld [vmem:[%s261 + $0xb0] sm:$0xff]
      %v312 = vld [vmem:[%s261 + $0xb8] sm:$0xff]
      %v313 = vld [vmem:[%s261 + $0xc0] sm:$0xff]
      %v314 = vld [vmem:[%s261 + $0xc8] sm:$0xff]
      %v315 = vld [vmem:[%s261 + $0xd0] sm:$0xff]
      %v316 = vld [vmem:[%s261 + $0xd8] sm:$0xff]
      %v317 = vld [vmem:[%s261 + $0xe0] sm:$0xff]
      %v318 = vld [vmem:[%s261 + $0xe8] sm:$0xff]
      %v319 = vld [vmem:[%s261 + $0xf0] sm:$0xff]
      %v320 = vld [vmem:[%s261 + $0xf8] sm:$0xff]
      %v321 = vld [vmem:[%s266] sm:$0xf]
      %v322 = vld [vmem:[%s266 + $0x4] sm:$0xf]
      %v323 = vld [vmem:[%s266 + $0x8] sm:$0xf]
      %v324 = vld [vmem:[%s266 + $0xc] sm:$0xf]
      %v325 = vld [vmem:[%s266 + $0x10] sm:$0xf]
      %v326 = vld [vmem:[%s266 + $0x14] sm:$0xf]
      %v327 = vld [vmem:[%s266 + $0x18] sm:$0xf]
      %v328 = vld [vmem:[%s266 + $0x1c] sm:$0xf]
      %v329 = vld [vmem:[%s266 + $0x20] sm:$0xf]
      %v330 = vld [vmem:[%s266 + $0x24] sm:$0xf]
      %v331 = vld [vmem:[%s266 + $0x28] sm:$0xf]
      %v332 = vld [vmem:[%s266 + $0x2c] sm:$0xf]
      %v333 = vld [vmem:[%s266 + $0x30] sm:$0xf]
      %v334 = vld [vmem:[%s266 + $0x34] sm:$0xf]
      %v335 = vld [vmem:[%s266 + $0x38] sm:$0xf]
      %v336 = vld [vmem:[%s266 + $0x3c] sm:$0xf]
      %v337 = vld [vmem:[%s266 + $0x40] sm:$0xf]
      %v338 = vld [vmem:[%s266 + $0x44] sm:$0xf]
      %v339 = vld [vmem:[%s266 + $0x48] sm:$0xf]
      %v340 = vld [vmem:[%s266 + $0x4c] sm:$0xf]
      %v341 = vld [vmem:[%s266 + $0x50] sm:$0xf]
      %v342 = vld [vmem:[%s266 + $0x54] sm:$0xf]
      %v343 = vld [vmem:[%s266 + $0x58] sm:$0xf]
      %v344 = vld [vmem:[%s266 + $0x5c] sm:$0xf]
      %v345 = vld [vmem:[%s266 + $0x60] sm:$0xf]
      %v346 = vld [vmem:[%s266 + $0x64] sm:$0xf]
      %v347 = vld [vmem:[%s266 + $0x68] sm:$0xf]
      %v348 = vld [vmem:[%s266 + $0x6c] sm:$0xf]
      %v349 = vld [vmem:[%s266 + $0x70] sm:$0xf]
      %v350 = vld [vmem:[%s266 + $0x74] sm:$0xf]
      %v351 = vld [vmem:[%s266 + $0x78] sm:$0xf]
      %v352 = vld [vmem:[%s266 + $0x7c] sm:$0xf]
      %v353 = vld [vmem:[%s269] sm:$0x1]
      %v355 = vlaneseq
      %v356 = vshrl.u32 %v355, 7
      %v357 = vsub.s32 0, %v356
      %v358 = vrot.slane %v353, %v357
      %v392 = vunpack.c.l.b16 %v289
      %v393 = vunpack.c.h.b16 %v289
      %v394 = vunpack.c.l.b16 %v290
      %v395 = vunpack.c.h.b16 %v290
      %v396 = vunpack.c.l.b16 %v291
      %v397 = vunpack.c.h.b16 %v291
      %v398 = vunpack.c.l.b16 %v292
      %v399 = vunpack.c.h.b16 %v292
      %v400 = vunpack.c.l.b16 %v293
      %v401 = vunpack.c.h.b16 %v293
      %v402 = vunpack.c.l.b16 %v294
      %v403 = vunpack.c.h.b16 %v294
      %v404 = vunpack.c.l.b16 %v295
      %v405 = vunpack.c.h.b16 %v295
      %v406 = vunpack.c.l.b16 %v296
      %v407 = vunpack.c.h.b16 %v296
      %v408 = vunpack.c.l.b16 %v297
      %v409 = vunpack.c.h.b16 %v297
      %v410 = vunpack.c.l.b16 %v298
      %v411 = vunpack.c.h.b16 %v298
      %v412 = vunpack.c.l.b16 %v299
      %v413 = vunpack.c.h.b16 %v299
      %v414 = vunpack.c.l.b16 %v300
      %v415 = vunpack.c.h.b16 %v300
      %v416 = vunpack.c.l.b16 %v301
      %v417 = vunpack.c.h.b16 %v301
      %v418 = vunpack.c.l.b16 %v302
      %v419 = vunpack.c.h.b16 %v302
      %v420 = vunpack.c.l.b16 %v303
      %v421 = vunpack.c.h.b16 %v303
      %v422 = vunpack.c.l.b16 %v304
      %v423 = vunpack.c.h.b16 %v304
      %v424 = vunpack.c.l.b16 %v305
      %v425 = vunpack.c.h.b16 %v305
      %v426 = vunpack.c.l.b16 %v306
      %v427 = vunpack.c.h.b16 %v306
      %v428 = vunpack.c.l.b16 %v307
      %v429 = vunpack.c.h.b16 %v307
      %v430 = vunpack.c.l.b16 %v308
      %v431 = vunpack.c.h.b16 %v308
      %v432 = vunpack.c.l.b16 %v309
      %v433 = vunpack.c.h.b16 %v309
      %v434 = vunpack.c.l.b16 %v310
      %v435 = vunpack.c.h.b16 %v310
      %v436 = vunpack.c.l.b16 %v311
      %v437 = vunpack.c.h.b16 %v311
      %v438 = vunpack.c.l.b16 %v312
      %v439 = vunpack.c.h.b16 %v312
      %v440 = vunpack.c.l.b16 %v313
      %v441 = vunpack.c.h.b16 %v313
      %v442 = vunpack.c.l.b16 %v314
      %v443 = vunpack.c.h.b16 %v314
      %v444 = vunpack.c.l.b16 %v315
      %v445 = vunpack.c.h.b16 %v315
      %v446 = vunpack.c.l.b16 %v316
      %v447 = vunpack.c.h.b16 %v316
      %v448 = vunpack.c.l.b16 %v317
      %v449 = vunpack.c.h.b16 %v317
      %v450 = vunpack.c.l.b16 %v318
      %v451 = vunpack.c.h.b16 %v318
      %v452 = vunpack.c.l.b16 %v319
      %v453 = vunpack.c.h.b16 %v319
      %v454 = vunpack.c.l.b16 %v320
      %v455 = vunpack.c.h.b16 %v320
      %v456 = vpack.c.b16 %v394, %v392
      %v457 = vpack.c.b16 %v395, %v393
      %v458 = vpack.c.b16 %v398, %v396
      %v459 = vpack.c.b16 %v399, %v397
      %v460 = vpack.c.b16 %v402, %v400
      %v461 = vpack.c.b16 %v403, %v401
      %v462 = vpack.c.b16 %v406, %v404
      %v463 = vpack.c.b16 %v407, %v405
      %v464 = vpack.c.b16 %v410, %v408
      %v465 = vpack.c.b16 %v411, %v409
      %v466 = vpack.c.b16 %v414, %v412
      %v467 = vpack.c.b16 %v415, %v413
      %v468 = vpack.c.b16 %v418, %v416
      %v469 = vpack.c.b16 %v419, %v417
      %v470 = vpack.c.b16 %v422, %v420
      %v471 = vpack.c.b16 %v423, %v421
      %v472 = vpack.c.b16 %v426, %v424
      %v473 = vpack.c.b16 %v427, %v425
      %v474 = vpack.c.b16 %v430, %v428
      %v475 = vpack.c.b16 %v431, %v429
      %v476 = vpack.c.b16 %v434, %v432
      %v477 = vpack.c.b16 %v435, %v433
      %v478 = vpack.c.b16 %v438, %v436
      %v479 = vpack.c.b16 %v439, %v437
      %v480 = vpack.c.b16 %v442, %v440
      %v481 = vpack.c.b16 %v443, %v441
      %v482 = vpack.c.b16 %v446, %v444
      %v483 = vpack.c.b16 %v447, %v445
      %v484 = vpack.c.b16 %v450, %v448
      %v485 = vpack.c.b16 %v451, %v449
      %v486 = vpack.c.b16 %v454, %v452
      %v487 = vpack.c.b16 %v455, %v453
      %v552 = vunpack.c.l.b16 %v321
      %v553 = vunpack.c.l.b16 %v322
      %v554 = vunpack.c.l.b16 %v323
      %v555 = vunpack.c.l.b16 %v324
      %v556 = vunpack.c.l.b16 %v325
      %v557 = vunpack.c.l.b16 %v326
      %v558 = vunpack.c.l.b16 %v327
      %v559 = vunpack.c.l.b16 %v328
      %v560 = vunpack.c.l.b16 %v329
      %v561 = vunpack.c.l.b16 %v330
      %v562 = vunpack.c.l.b16 %v331
      %v563 = vunpack.c.l.b16 %v332
      %v564 = vunpack.c.l.b16 %v333
      %v565 = vunpack.c.l.b16 %v334
      %v566 = vunpack.c.l.b16 %v335
      %v567 = vunpack.c.l.b16 %v336
      %v568 = vunpack.c.l.b16 %v337
      %v569 = vunpack.c.l.b16 %v338
      %v570 = vunpack.c.l.b16 %v339
      %v571 = vunpack.c.l.b16 %v340
      %v572 = vunpack.c.l.b16 %v341
      %v573 = vunpack.c.l.b16 %v342
      %v574 = vunpack.c.l.b16 %v343
      %v575 = vunpack.c.l.b16 %v344
      %v576 = vunpack.c.l.b16 %v345
      %v577 = vunpack.c.l.b16 %v346
      %v578 = vunpack.c.l.b16 %v347
      %v579 = vunpack.c.l.b16 %v348
      %v580 = vunpack.c.l.b16 %v349
      %v581 = vunpack.c.l.b16 %v350
      %v582 = vunpack.c.l.b16 %v351
      %v583 = vunpack.c.l.b16 %v352
      %v584 = vpack.c.b16 %v553, %v552
      %v585 = vpack.c.b16 %v555, %v554
      %v586 = vpack.c.b16 %v557, %v556
      %v587 = vpack.c.b16 %v559, %v558
      %v588 = vpack.c.b16 %v561, %v560
      %v589 = vpack.c.b16 %v563, %v562
      %v590 = vpack.c.b16 %v565, %v564
      %v591 = vpack.c.b16 %v567, %v566
      %v592 = vpack.c.b16 %v569, %v568
      %v593 = vpack.c.b16 %v571, %v570
      %v594 = vpack.c.b16 %v573, %v572
      %v595 = vpack.c.b16 %v575, %v574
      %v596 = vpack.c.b16 %v577, %v576
      %v597 = vpack.c.b16 %v579, %v578
      %v598 = vpack.c.b16 %v581, %v580
      %v599 = vpack.c.b16 %v583, %v582
      %616 = vmatprep.subr.bf16.mxu0 0
      %617 = vmatpush1.bf16.msra.mxu0 %v584
      %618 = vmatprep.subr.bf16.mxu0 0
      %619 = vmatpush1.bf16.msra.mxu0 %v585
      %620 = vmatprep.subr.bf16.mxu0 0
      %621 = vmatpush1.bf16.msra.mxu0 %v586
      %622 = vmatprep.subr.bf16.mxu0 0
      %623 = vmatpush1.bf16.msra.mxu0 %v587
      %624 = vmatprep.subr.bf16.mxu0 0
      %625 = vmatpush1.bf16.msra.mxu0 %v588
      %626 = vmatprep.subr.bf16.mxu0 0
      %627 = vmatpush1.bf16.msra.mxu0 %v589
      %628 = vmatprep.subr.bf16.mxu0 0
      %629 = vmatpush1.bf16.msra.mxu0 %v590
      %630 = vmatprep.subr.bf16.mxu0 0
      %631 = vmatpush1.bf16.msra.mxu0 %v591
      %632 = vmatprep.subr.bf16.mxu0 0
      %633 = vmatpush1.bf16.msra.mxu0 %v592
      %634 = vmatprep.subr.bf16.mxu0 0
      %635 = vmatpush1.bf16.msra.mxu0 %v593
      %636 = vmatprep.subr.bf16.mxu0 0
      %637 = vmatpush1.bf16.msra.mxu0 %v594
      %638 = vmatprep.subr.bf16.mxu0 0
      %639 = vmatpush1.bf16.msra.mxu0 %v595
      %640 = vmatprep.subr.bf16.mxu0 0
      %641 = vmatpush1.bf16.msra.mxu0 %v596
      %642 = vmatprep.subr.bf16.mxu0 0
      %643 = vmatpush1.bf16.msra.mxu0 %v597
      %644 = vmatprep.subr.bf16.mxu0 0
      %645 = vmatpush1.bf16.msra.mxu0 %v598
      %646 = vmatprep.subr.bf16.mxu0 0
      %647 = vmatpush1.bf16.msra.mxu0 %v599
      %648 = vmatprep.mubr.bf16.mxu0 %v457
      %649 = vmatmul.mubr.bf16.gmra.mrb[0].mxu0 %v456
      %v650 = vpop.f32.mrb[0].mxu0
      %v651 = vadd.f32 %v358, %v650
      %v652 = vpop.f32.mrb[0].mxu0
      %v653 = vpop.f32.mrb[0].mxu0
      %v654 = vadd.f32 %v358, %v653
      %v655 = vpop.f32.mrb[0].mxu0
      %656 = vmatprep.mubr.bf16.mxu0 %v459
      %657 = vmatmul.mubr.bf16.gmra.mrb[0].mxu0 %v458
      %v658 = vpop.f32.mrb[0].mxu0
      %v659 = vadd.f32 %v358, %v658
      %v660 = vpop.f32.mrb[0].mxu0
      %v661 = vpop.f32.mrb[0].mxu0
      %v662 = vadd.f32 %v358, %v661
      %v663 = vpop.f32.mrb[0].mxu0
      %664 = vmatprep.mubr.bf16.mxu0 %v461
      %665 = vmatmul.mubr.bf16.gmra.mrb[0].mxu0 %v460
      %v666 = vpop.f32.mrb[0].mxu0
      %v667 = vadd.f32 %v358, %v666
      %v668 = vpop.f32.mrb[0].mxu0
      %v669 = vpop.f32.mrb[0].mxu0
      %v670 = vadd.f32 %v358, %v669
      %v671 = vpop.f32.mrb[0].mxu0
      %672 = vmatprep.mubr.bf16.mxu0 %v463
      %673 = vmatmul.mubr.bf16.gmra.mrb[0].mxu0 %v462
      %v674 = vpop.f32.mrb[0].mxu0
      %v675 = vadd.f32 %v358, %v674
      %v676 = vpop.f32.mrb[0].mxu0
      %v677 = vpop.f32.mrb[0].mxu0
      %v678 = vadd.f32 %v358, %v677
      %v679 = vpop.f32.mrb[0].mxu0
      %680 = vmatprep.mubr.bf16.mxu0 %v465
      %681 = vmatmul.mubr.bf16.gmra.mrb[0].mxu0 %v464
      %v682 = vpop.f32.mrb[0].mxu0
      %v683 = vadd.f32 %v358, %v682
      %v684 = vpop.f32.mrb[0].mxu0
      %v685 = vpop.f32.mrb[0].mxu0
      %v686 = vadd.f32 %v358, %v685
      %v687 = vpop.f32.mrb[0].mxu0
      %688 = vmatprep.mubr.bf16.mxu0 %v467
      %689 = vmatmul.mubr.bf16.gmra.mrb[0].mxu0 %v466
      %v690 = vpop.f32.mrb[0].mxu0
      %v691 = vadd.f32 %v358, %v690
      %v692 = vpop.f32.mrb[0].mxu0
      %v693 = vpop.f32.mrb[0].mxu0
      %v694 = vadd.f32 %v358, %v693
      %v695 = vpop.f32.mrb[0].mxu0
      %696 = vmatprep.mubr.bf16.mxu0 %v469
      %697 = vmatmul.mubr.bf16.gmra.mrb[0].mxu0 %v468
      %v698 = vpop.f32.mrb[0].mxu0
      %v699 = vadd.f32 %v358, %v698
      %v700 = vpop.f32.mrb[0].mxu0
      %v701 = vpop.f32.mrb[0].mxu0
      %v702 = vadd.f32 %v358, %v701
      %v703 = vpop.f32.mrb[0].mxu0
      %704 = vmatprep.mubr.bf16.mxu0 %v471
      %705 = vmatmul.mubr.bf16.gmra.mrb[0].mxu0 %v470
      %v706 = vpop.f32.mrb[0].mxu0
      %v707 = vadd.f32 %v358, %v706
      %v708 = vpop.f32.mrb[0].mxu0
      %v709 = vpop.f32.mrb[0].mxu0
      %v710 = vadd.f32 %v358, %v709
      %v711 = vpop.f32.mrb[0].mxu0
      %712 = vmatprep.mubr.bf16.mxu0 %v473
      %713 = vmatmul.mubr.bf16.gmra.mrb[0].mxu0 %v472
      %v714 = vpop.f32.mrb[0].mxu0
      %v715 = vadd.f32 %v358, %v714
      %v716 = vpop.f32.mrb[0].mxu0
      %v717 = vpop.f32.mrb[0].mxu0
      %v718 = vadd.f32 %v358, %v717
      %v719 = vpop.f32.mrb[0].mxu0
      %720 = vmatprep.mubr.bf16.mxu0 %v475
      %721 = vmatmul.mubr.bf16.gmra.mrb[0].mxu0 %v474
      %v722 = vpop.f32.mrb[0].mxu0
      %v723 = vadd.f32 %v358, %v722
      %v724 = vpop.f32.mrb[0].mxu0
      %v725 = vpop.f32.mrb[0].mxu0
      %v726 = vadd.f32 %v358, %v725
      %v727 = vpop.f32.mrb[0].mxu0
      %728 = vmatprep.mubr.bf16.mxu0 %v477
      %729 = vmatmul.mubr.bf16.gmra.mrb[0].mxu0 %v476
      %v730 = vpop.f32.mrb[0].mxu0
      %v731 = vadd.f32 %v358, %v730
      %v732 = vpop.f32.mrb[0].mxu0
      %v733 = vpop.f32.mrb[0].mxu0
      %v734 = vadd.f32 %v358, %v733
      %v735 = vpop.f32.mrb[0].mxu0
      %736 = vmatprep.mubr.bf16.mxu0 %v479
      %737 = vmatmul.mubr.bf16.gmra.mrb[0].mxu0 %v478
      %v738 = vpop.f32.mrb[0].mxu0
      %v739 = vadd.f32 %v358, %v738
      %v740 = vpop.f32.mrb[0].mxu0
      %v741 = vpop.f32.mrb[0].mxu0
      %v742 = vadd.f32 %v358, %v741
      %v743 = vpop.f32.mrb[0].mxu0
      %744 = vmatprep.mubr.bf16.mxu0 %v481
      %745 = vmatmul.mubr.bf16.gmra.mrb[0].mxu0 %v480
      %v746 = vpop.f32.mrb[0].mxu0
      %v747 = vadd.f32 %v358, %v746
      %v748 = vpop.f32.mrb[0].mxu0
      %v749 = vpop.f32.mrb[0].mxu0
      %v750 = vadd.f32 %v358, %v749
      %v751 = vpop.f32.mrb[0].mxu0
      %752 = vmatprep.mubr.bf16.mxu0 %v483
      %753 = vmatmul.mubr.bf16.gmra.mrb[0].mxu0 %v482
      %v754 = vpop.f32.mrb[0].mxu0
      %v755 = vadd.f32 %v358, %v754
      %v756 = vpop.f32.mrb[0].mxu0
      %v757 = vpop.f32.mrb[0].mxu0
      %v758 = vadd.f32 %v358, %v757
      %v759 = vpop.f32.mrb[0].mxu0
      %760 = vmatprep.mubr.bf16.mxu0 %v485
      %761 = vmatmul.mubr.bf16.gmra.mrb[0].mxu0 %v484
      %v762 = vpop.f32.mrb[0].mxu0
      %v763 = vadd.f32 %v358, %v762
      %v764 = vpop.f32.mrb[0].mxu0
      %v765 = vpop.f32.mrb[0].mxu0
      %v766 = vadd.f32 %v358, %v765
      %v767 = vpop.f32.mrb[0].mxu0
      %768 = vmatprep.mubr.bf16.mxu0 %v487
      %769 = vmatmul.mubr.bf16.gmra.mrb[0].mxu0 %v486
      %v770 = vpop.f32.mrb[0].mxu0
      %v771 = vadd.f32 %v358, %v770
      %v772 = vpop.f32.mrb[0].mxu0
      %v773 = vpop.f32.mrb[0].mxu0
      %v774 = vadd.f32 %v358, %v773
      %v775 = vpop.f32.mrb[0].mxu0
      %776 = vdwg.mxu0
      %v777 = vld [vmem:[%s277] sm:$0xf]
      %v778 = vld [vmem:[%s277 + $0x4] sm:$0xf]
      %v779 = vld [vmem:[%s277 + $0x8] sm:$0xf]
      %v780 = vld [vmem:[%s277 + $0xc] sm:$0xf]
      %v781 = vld [vmem:[%s277 + $0x10] sm:$0xf]
      %v782 = vld [vmem:[%s277 + $0x14] sm:$0xf]
      %v783 = vld [vmem:[%s277 + $0x18] sm:$0xf]
      %v784 = vld [vmem:[%s277 + $0x1c] sm:$0xf]
      %v785 = vld [vmem:[%s277 + $0x20] sm:$0xf]
      %v786 = vld [vmem:[%s277 + $0x24] sm:$0xf]
      %v787 = vld [vmem:[%s277 + $0x28] sm:$0xf]
      %v788 = vld [vmem:[%s277 + $0x2c] sm:$0xf]
      %v789 = vld [vmem:[%s277 + $0x30] sm:$0xf]
      %v790 = vld [vmem:[%s277 + $0x34] sm:$0xf]
      %v791 = vld [vmem:[%s277 + $0x38] sm:$0xf]
      %v792 = vld [vmem:[%s277 + $0x3c] sm:$0xf]
      %v793 = vld [vmem:[%s277 + $0x40] sm:$0xf]
      %v794 = vld [vmem:[%s277 + $0x44] sm:$0xf]
      %v795 = vld [vmem:[%s277 + $0x48] sm:$0xf]
      %v796 = vld [vmem:[%s277 + $0x4c] sm:$0xf]
      %v797 = vld [vmem:[%s277 + $0x50] sm:$0xf]
      %v798 = vld [vmem:[%s277 + $0x54] sm:$0xf]
      %v799 = vld [vmem:[%s277 + $0x58] sm:$0xf]
      %v800 = vld [vmem:[%s277 + $0x5c] sm:$0xf]
      %v801 = vld [vmem:[%s277 + $0x60] sm:$0xf]
      %v802 = vld [vmem:[%s277 + $0x64] sm:$0xf]
      %v803 = vld [vmem:[%s277 + $0x68] sm:$0xf]
      %v804 = vld [vmem:[%s277 + $0x6c] sm:$0xf]
      %v805 = vld [vmem:[%s277 + $0x70] sm:$0xf]
      %v806 = vld [vmem:[%s277 + $0x74] sm:$0xf]
      %v807 = vld [vmem:[%s277 + $0x78] sm:$0xf]
      %v808 = vld [vmem:[%s277 + $0x7c] sm:$0xf]
      %v809 = vunpack.c.l.bf16 %v777
      %v810 = vunpack.c.l.bf16 %v778
      %v811 = vunpack.c.l.bf16 %v779
      %v812 = vunpack.c.l.bf16 %v780
      %v813 = vunpack.c.l.bf16 %v781
      %v814 = vunpack.c.l.bf16 %v782
      %v815 = vunpack.c.l.bf16 %v783
      %v816 = vunpack.c.l.bf16 %v784
      %v817 = vunpack.c.l.bf16 %v785
      %v818 = vunpack.c.l.bf16 %v786
      %v819 = vunpack.c.l.bf16 %v787
      %v820 = vunpack.c.l.bf16 %v788
      %v821 = vunpack.c.l.bf16 %v789
      %v822 = vunpack.c.l.bf16 %v790
      %v823 = vunpack.c.l.bf16 %v791
      %v824 = vunpack.c.l.bf16 %v792
      %v825 = vunpack.c.l.bf16 %v793
      %v826 = vunpack.c.l.bf16 %v794
      %v827 = vunpack.c.l.bf16 %v795
      %v828 = vunpack.c.l.bf16 %v796
      %v829 = vunpack.c.l.bf16 %v797
      %v830 = vunpack.c.l.bf16 %v798
      %v831 = vunpack.c.l.bf16 %v799
      %v832 = vunpack.c.l.bf16 %v800
      %v833 = vunpack.c.l.bf16 %v801
      %v834 = vunpack.c.l.bf16 %v802
      %v835 = vunpack.c.l.bf16 %v803
      %v836 = vunpack.c.l.bf16 %v804
      %v837 = vunpack.c.l.bf16 %v805
      %v838 = vunpack.c.l.bf16 %v806
      %v839 = vunpack.c.l.bf16 %v807
      %v840 = vunpack.c.l.bf16 %v808
      %v841 = vadd.f32 %v651, %v809
      %v842 = vadd.f32 %v654, %v810
      %v843 = vadd.f32 %v659, %v811
      %v844 = vadd.f32 %v662, %v812
      %v845 = vadd.f32 %v667, %v813
      %v846 = vadd.f32 %v670, %v814
      %v847 = vadd.f32 %v675, %v815
      %v848 = vadd.f32 %v678, %v816
      %v849 = vadd.f32 %v683, %v817
      %v850 = vadd.f32 %v686, %v818
      %v851 = vadd.f32 %v691, %v819
      %v852 = vadd.f32 %v694, %v820
      %v853 = vadd.f32 %v699, %v821
      %v854 = vadd.f32 %v702, %v822
      %v855 = vadd.f32 %v707, %v823
      %v856 = vadd.f32 %v710, %v824
      %v857 = vadd.f32 %v715, %v825
      %v858 = vadd.f32 %v718, %v826
      %v859 = vadd.f32 %v723, %v827
      %v860 = vadd.f32 %v726, %v828
      %v861 = vadd.f32 %v731, %v829
      %v862 = vadd.f32 %v734, %v830
      %v863 = vadd.f32 %v739, %v831
      %v864 = vadd.f32 %v742, %v832
      %v865 = vadd.f32 %v747, %v833
      %v866 = vadd.f32 %v750, %v834
      %v867 = vadd.f32 %v755, %v835
      %v868 = vadd.f32 %v758, %v836
      %v869 = vadd.f32 %v763, %v837
      %v870 = vadd.f32 %v766, %v838
      %v871 = vadd.f32 %v771, %v839
      %v872 = vadd.f32 %v774, %v840
      %v873 = vmax.f32 %v841, 0.0
      %v874 = vmax.f32 %v842, 0.0
      %v875 = vmax.f32 %v843, 0.0
      %v876 = vmax.f32 %v844, 0.0
      %v877 = vmax.f32 %v845, 0.0
      %v878 = vmax.f32 %v846, 0.0
      %v879 = vmax.f32 %v847, 0.0
      %v880 = vmax.f32 %v848, 0.0
      %v881 = vmax.f32 %v849, 0.0
      %v882 = vmax.f32 %v850, 0.0
      %v883 = vmax.f32 %v851, 0.0
      %v884 = vmax.f32 %v852, 0.0
      %v885 = vmax.f32 %v853, 0.0
      %v886 = vmax.f32 %v854, 0.0
      %v887 = vmax.f32 %v855, 0.0
      %v888 = vmax.f32 %v856, 0.0
      %v889 = vmax.f32 %v857, 0.0
      %v890 = vmax.f32 %v858, 0.0
      %v891 = vmax.f32 %v859, 0.0
      %v892 = vmax.f32 %v860, 0.0
      %v893 = vmax.f32 %v861, 0.0
      %v894 = vmax.f32 %v862, 0.0
      %v895 = vmax.f32 %v863, 0.0
      %v896 = vmax.f32 %v864, 0.0
      %v897 = vmax.f32 %v865, 0.0
      %v898 = vmax.f32 %v866, 0.0
      %v899 = vmax.f32 %v867, 0.0
      %v900 = vmax.f32 %v868, 0.0
      %v901 = vmax.f32 %v869, 0.0
      %v902 = vmax.f32 %v870, 0.0
      %v903 = vmax.f32 %v871, 0.0
      %v904 = vmax.f32 %v872, 0.0
      %v905 = vpack.c.bf16 %v874, %v873
      %v906 = vpack.c.bf16 %v876, %v875
      %v907 = vpack.c.bf16 %v878, %v877
      %v908 = vpack.c.bf16 %v880, %v879
      %v909 = vpack.c.bf16 %v882, %v881
      %v910 = vpack.c.bf16 %v884, %v883
      %v911 = vpack.c.bf16 %v886, %v885
      %v912 = vpack.c.bf16 %v888, %v887
      %v913 = vpack.c.bf16 %v890, %v889
      %v914 = vpack.c.bf16 %v892, %v891
      %v915 = vpack.c.bf16 %v894, %v893
      %v916 = vpack.c.bf16 %v896, %v895
      %v917 = vpack.c.bf16 %v898, %v897
      %v918 = vpack.c.bf16 %v900, %v899
      %v919 = vpack.c.bf16 %v902, %v901
      %v920 = vpack.c.bf16 %v904, %v903
      %v937 = vunpack.c.l.b16 %v905
      %v938 = vunpack.c.h.b16 %v905
      %v939 = vunpack.c.l.b16 %v906
      %v940 = vunpack.c.h.b16 %v906
      %v941 = vunpack.c.l.b16 %v907
      %v942 = vunpack.c.h.b16 %v907
      %v943 = vunpack.c.l.b16 %v908
      %v944 = vunpack.c.h.b16 %v908
      %v945 = vunpack.c.l.b16 %v909
      %v946 = vunpack.c.h.b16 %v909
      %v947 = vunpack.c.l.b16 %v910
      %v948 = vunpack.c.h.b16 %v910
      %v949 = vunpack.c.l.b16 %v911
      %v950 = vunpack.c.h.b16 %v911
      %v951 = vunpack.c.l.b16 %v912
      %v952 = vunpack.c.h.b16 %v912
      %v953 = vunpack.c.l.b16 %v913
      %v954 = vunpack.c.h.b16 %v913
      %v955 = vunpack.c.l.b16 %v914
      %v956 = vunpack.c.h.b16 %v914
      %v957 = vunpack.c.l.b16 %v915
      %v958 = vunpack.c.h.b16 %v915
      %v959 = vunpack.c.l.b16 %v916
      %v960 = vunpack.c.h.b16 %v916
      %v961 = vunpack.c.l.b16 %v917
      %v962 = vunpack.c.h.b16 %v917
      %v963 = vunpack.c.l.b16 %v918
      %v964 = vunpack.c.h.b16 %v918
      %v965 = vunpack.c.l.b16 %v919
      %v966 = vunpack.c.h.b16 %v919
      %v967 = vunpack.c.l.b16 %v920
      %v968 = vunpack.c.h.b16 %v920
      %v969 = vpack.c.b16 %v937, %v937
      %v970 = vpack.c.b16 %v938, %v938
      %v971 = vpack.c.b16 %v939, %v939
      %v972 = vpack.c.b16 %v940, %v940
      %v973 = vpack.c.b16 %v941, %v941
      %v974 = vpack.c.b16 %v942, %v942
      %v975 = vpack.c.b16 %v943, %v943
      %v976 = vpack.c.b16 %v944, %v944
      %v977 = vpack.c.b16 %v945, %v945
      %v978 = vpack.c.b16 %v946, %v946
      %v979 = vpack.c.b16 %v947, %v947
      %v980 = vpack.c.b16 %v948, %v948
      %v981 = vpack.c.b16 %v949, %v949
      %v982 = vpack.c.b16 %v950, %v950
      %v983 = vpack.c.b16 %v951, %v951
      %v984 = vpack.c.b16 %v952, %v952
      %v985 = vpack.c.b16 %v953, %v953
      %v986 = vpack.c.b16 %v954, %v954
      %v987 = vpack.c.b16 %v955, %v955
      %v988 = vpack.c.b16 %v956, %v956
      %v989 = vpack.c.b16 %v957, %v957
      %v990 = vpack.c.b16 %v958, %v958
      %v991 = vpack.c.b16 %v959, %v959
      %v992 = vpack.c.b16 %v960, %v960
      %v993 = vpack.c.b16 %v961, %v961
      %v994 = vpack.c.b16 %v962, %v962
      %v995 = vpack.c.b16 %v963, %v963
      %v996 = vpack.c.b16 %v964, %v964
      %v997 = vpack.c.b16 %v965, %v965
      %v998 = vpack.c.b16 %v966, %v966
      %v999 = vpack.c.b16 %v967, %v967
      %v1000 = vpack.c.b16 %v968, %v968
      %1033 = vst [vmem:[%s286] sm:$0xf] %v969
      %1034 = vst [vmem:[%s286 + $0x4] sm:$0xf] %v970
      %1035 = vst [vmem:[%s286 + $0x8] sm:$0xf] %v971
      %1036 = vst [vmem:[%s286 + $0xc] sm:$0xf] %v972
      %1037 = vst [vmem:[%s286 + $0x10] sm:$0xf] %v973
      %1038 = vst [vmem:[%s286 + $0x14] sm:$0xf] %v974
      %1039 = vst [vmem:[%s286 + $0x18] sm:$0xf] %v975
      %1040 = vst [vmem:[%s286 + $0x1c] sm:$0xf] %v976
      %1041 = vst [vmem:[%s286 + $0x20] sm:$0xf] %v977
      %1042 = vst [vmem:[%s286 + $0x24] sm:$0xf] %v978
      %1043 = vst [vmem:[%s286 + $0x28] sm:$0xf] %v979
      %1044 = vst [vmem:[%s286 + $0x2c] sm:$0xf] %v980
      %1045 = vst [vmem:[%s286 + $0x30] sm:$0xf] %v981
      %1046 = vst [vmem:[%s286 + $0x34] sm:$0xf] %v982
      %1047 = vst [vmem:[%s286 + $0x38] sm:$0xf] %v983
      %1048 = vst [vmem:[%s286 + $0x3c] sm:$0xf] %v984
      %1049 = vst [vmem:[%s286 + $0x40] sm:$0xf] %v985
      %1050 = vst [vmem:[%s286 + $0x44] sm:$0xf] %v986
      %1051 = vst [vmem:[%s286 + $0x48] sm:$0xf] %v987
      %1052 = vst [vmem:[%s286 + $0x4c] sm:$0xf] %v988
      %1053 = vst [vmem:[%s286 + $0x50] sm:$0xf] %v989
      %1054 = vst [vmem:[%s286 + $0x54] sm:$0xf] %v990
      %1055 = vst [vmem:[%s286 + $0x58] sm:$0xf] %v991
      %1056 = vst [vmem:[%s286 + $0x5c] sm:$0xf] %v992
      %1057 = vst [vmem:[%s286 + $0x60] sm:$0xf] %v993
      %1058 = vst [vmem:[%s286 + $0x64] sm:$0xf] %v994
      %1059 = vst [vmem:[%s286 + $0x68] sm:$0xf] %v995
      %1060 = vst [vmem:[%s286 + $0x6c] sm:$0xf] %v996
      %1061 = vst [vmem:[%s286 + $0x70] sm:$0xf] %v997
      %1062 = vst [vmem:[%s286 + $0x74] sm:$0xf] %v998
      %1063 = vst [vmem:[%s286 + $0x78] sm:$0xf] %v999
      %1064 = vst [vmem:[%s286 + $0x7c] sm:$0xf] %v1000
      %s1065 = smul.u32 32, %s19
      %p1066 = scmp.lt.s32.totalorder %s1065, 63
      %s1067 = scalar_select %p1066, %s1065, 63
      %p1068 = scmp.lt.s32.totalorder %s20, 0
      %s1069 = scalar_select %p1068, %s20, 0
      %s1070 = sadd.s32 %s1069, %s1067
      %s1071 = smul.addr %s1070, 4
      %s1072 = scalar_lea.vmem %s4, %s1071
      // Predicated region
      $region37: #{_lambda_.9} parent=35 // pred_check
        %p1073 = pneg %p153
      $region38: #{_lambda_.9} parent=35 // pred_check_branch
        %1075 = sbr.rel (%p1073) target = $region40
      $region39: #{_lambda_.9} parent=35 // pred_region
        %s1076 = smul.u32 32, %s19
      $region40: #{_lambda_.9} parent=35 // pred_fallthru
        _
    $region36: #{_lambda_.9} parent=5 // pred_fallthru
      _
    %p1077 = scmp.le.s32.totalorder 2, %s10
    // Predicated region
    $region41: #{_lambda_.9} parent=5 // pred_check
      %p1078 = pneg %p1077
    $region42: #{_lambda_.9} parent=5 // pred_check_branch
      %1080 = sbr.rel (%p1078) target = $region44
    $region43: #{_lambda_.9} parent=5 // pred_region
      %s1081 = ssub.s32 %s10, 2
      // Predicated region
      $region45: #{_lambda_.9} parent=43 // pred_check
        %p1082 = pneg %p159
      $region46: #{_lambda_.9} parent=43 // pred_check_branch
        %1084 = sbr.rel (%p1082) target = $region48
      $region47: #{_lambda_.9} parent=43 // pred_region
        %s1085 = smul.u32 32, %s21
        %p1086 = scmp.lt.s32.totalorder %s1085, 63
        %s1087 = scalar_select %p1086, %s1085, 63
        %p1088 = scmp.lt.s32.totalorder %s22, 0
        %s1089 = scalar_select %p1088, %s22, 0
        %s1090 = sadd.s32 %s1089, %s1087
        %s1091 = smul.addr %s1090, 4
        %s1092 = scalar_lea.vmem %s4, %s1091
      $region48: #{_lambda_.9} parent=43 // pred_fallthru
        _
    $region44: #{_lambda_.9} parent=5 // pred_fallthru
      _
  $region6: #{_lambda_.9} parent=0 // loop_footer
    %s14 = sadd.s32 1, %s10
  $region7: #{_lambda_.9} parent=0 // loop_footer_branch
    %9 = sbr.rel target = $region3
  $region8: #{_lambda_.9} parent=0 // loop_exit
    _

// kernel: _lambda_.10
$region0: #{_lambda_.10}
  #allocation0 [shape = 'u32[]', space=smem, size = 0x4, offset = 0x4, fixed_abs, tag = 'smem constant byte address 0x4 - core index']
  #allocation1 [shape = 'u32[144,128]{1,0:T(1,128)}', space=vmem, size = 0x12000, scoped, tag = 'internal scratch']
  %s0 = inlined_call_operand.vmem [shape: bf16[128,256], index: 0, kind: input, shape index: {}]
  %s1 = inlined_call_operand.vmem [shape: bf16[256,128], index: 1, kind: input, shape index: {}]
  %s2 = inlined_call_operand.vmem [shape: f32[1,128], index: 2, kind: input, shape index: {}]
  %s3 = inlined_call_operand.vmem [shape: bf16[128,128], index: 3, kind: output, shape index: {}]
  %s4 = sld [smem:[#allocation0]]
  $region22: #{_lambda_.10} parent=0
    _
  %s6 = ssub.s32 1, %s4
  %s7 = scalar_select 0, %s6, %s4
  // Predicated region
  $region2: #{_lambda_.10} parent=0 // pred_check
    _
  $region3: #{_lambda_.10} parent=0 // pred_check_branch
    %9 = sbr.rel (0) target = $region5
  $region4: #{_lambda_.10} parent=0 // pred_region
    _
  $region5: #{_lambda_.10} parent=0 // pred_fallthru
    _
  // Predicated region
  $region6: #{_lambda_.10} parent=0 // pred_check
    _
  $region7: #{_lambda_.10} parent=0 // pred_check_branch
    %11 = sbr.rel (0) target = $region9
  $region8: #{_lambda_.10} parent=0 // pred_region
    _
  $region9: #{_lambda_.10} parent=0 // pred_fallthru
    _
  // Predicated region
  $region10: #{_lambda_.10} parent=0 // pred_check
    _
  $region11: #{_lambda_.10} parent=0 // pred_check_branch
    %13 = sbr.rel (0) target = $region13
  $region12: #{_lambda_.10} parent=0 // pred_region
    _
  $region13: #{_lambda_.10} parent=0 // pred_fallthru
    _
  %v15 = vld [vmem:[%s0] sm:$0xff]
  %v16 = vld [vmem:[%s0 + $0x8] sm:$0xff]
  %v17 = vld [vmem:[%s0 + $0x10] sm:$0xff]
  %v18 = vld [vmem:[%s0 + $0x18] sm:$0xff]
  %v19 = vld [vmem:[%s0 + $0x20] sm:$0xff]
  %v20 = vld [vmem:[%s0 + $0x28] sm:$0xff]
  %v21 = vld [vmem:[%s0 + $0x30] sm:$0xff]
  %v22 = vld [vmem:[%s0 + $0x38] sm:$0xff]
  %v23 = vld [vmem:[%s0 + $0x40] sm:$0xff]
  %v24 = vld [vmem:[%s0 + $0x48] sm:$0xff]
  %v25 = vld [vmem:[%s0 + $0x50] sm:$0xff]
  %v26 = vld [vmem:[%s0 + $0x58] sm:$0xff]
  %v27 = vld [vmem:[%s0 + $0x60] sm:$0xff]
  %v28 = vld [vmem:[%s0 + $0x68] sm:$0xff]
  %v29 = vld [vmem:[%s0 + $0x70] sm:$0xff]
  %v30 = vld [vmem:[%s0 + $0x78] sm:$0xff]
  %v31 = vld [vmem:[%s1] sm:$0xf]
  %v32 = vld [vmem:[%s1 + $0x4] sm:$0xf]
  %v33 = vld [vmem:[%s1 + $0x8] sm:$0xf]
  %v34 = vld [vmem:[%s1 + $0xc] sm:$0xf]
  %v35 = vld [vmem:[%s1 + $0x10] sm:$0xf]
  %v36 = vld [vmem:[%s1 + $0x14] sm:$0xf]
  %v37 = vld [vmem:[%s1 + $0x18] sm:$0xf]
  %v38 = vld [vmem:[%s1 + $0x1c] sm:$0xf]
  %v39 = vld [vmem:[%s1 + $0x20] sm:$0xf]
  %v40 = vld [vmem:[%s1 + $0x24] sm:$0xf]
  %v41 = vld [vmem:[%s1 + $0x28] sm:$0xf]
  %v42 = vld [vmem:[%s1 + $0x2c] sm:$0xf]
  %v43 = vld [vmem:[%s1 + $0x30] sm:$0xf]
  %v44 = vld [vmem:[%s1 + $0x34] sm:$0xf]
  %v45 = vld [vmem:[%s1 + $0x38] sm:$0xf]
  %v46 = vld [vmem:[%s1 + $0x3c] sm:$0xf]
  %v47 = vld [vmem:[%s1 + $0x40] sm:$0xf]
  %v48 = vld [vmem:[%s1 + $0x44] sm:$0xf]
  %v49 = vld [vmem:[%s1 + $0x48] sm:$0xf]
  %v50 = vld [vmem:[%s1 + $0x4c] sm:$0xf]
  %v51 = vld [vmem:[%s1 + $0x50] sm:$0xf]
  %v52 = vld [vmem:[%s1 + $0x54] sm:$0xf]
  %v53 = vld [vmem:[%s1 + $0x58] sm:$0xf]
  %v54 = vld [vmem:[%s1 + $0x5c] sm:$0xf]
  %v55 = vld [vmem:[%s1 + $0x60] sm:$0xf]
  %v56 = vld [vmem:[%s1 + $0x64] sm:$0xf]
  %v57 = vld [vmem:[%s1 + $0x68] sm:$0xf]
  %v58 = vld [vmem:[%s1 + $0x6c] sm:$0xf]
  %v59 = vld [vmem:[%s1 + $0x70] sm:$0xf]
  %v60 = vld [vmem:[%s1 + $0x74] sm:$0xf]
  %v61 = vld [vmem:[%s1 + $0x78] sm:$0xf]
  %v62 = vld [vmem:[%s1 + $0x7c] sm:$0xf]
  %v63 = vld [vmem:[%s2] sm:$0x1]
  %v65 = vlaneseq
  %v66 = vshrl.u32 %v65, 7
  %v67 = vsub.s32 0, %v66
  %v68 = vrot.slane %v63, %v67
  %v86 = vunpack.c.l.b16 %v15
  %v87 = vunpack.c.h.b16 %v15
  %v88 = vunpack.c.l.b16 %v16
  %v89 = vunpack.c.h.b16 %v16
  %v90 = vunpack.c.l.b16 %v17
  %v91 = vunpack.c.h.b16 %v17
  %v92 = vunpack.c.l.b16 %v18
  %v93 = vunpack.c.h.b16 %v18
  %v94 = vunpack.c.l.b16 %v19
  %v95 = vunpack.c.h.b16 %v19
  %v96 = vunpack.c.l.b16 %v20
  %v97 = vunpack.c.h.b16 %v20
  %v98 = vunpack.c.l.b16 %v21
  %v99 = vunpack.c.h.b16 %v21
  %v100 = vunpack.c.l.b16 %v22
  %v101 = vunpack.c.h.b16 %v22
  %v102 = vunpack.c.l.b16 %v23
  %v103 = vunpack.c.h.b16 %v23
  %v104 = vunpack.c.l.b16 %v24
  %v105 = vunpack.c.h.b16 %v24
  %v106 = vunpack.c.l.b16 %v25
  %v107 = vunpack.c.h.b16 %v25
  %v108 = vunpack.c.l.b16 %v26
  %v109 = vunpack.c.h.b16 %v26
  %v110 = vunpack.c.l.b16 %v27
  %v111 = vunpack.c.h.b16 %v27
  %v112 = vunpack.c.l.b16 %v28
  %v113 = vunpack.c.h.b16 %v28
  %v114 = vunpack.c.l.b16 %v29
  %v115 = vunpack.c.h.b16 %v29
  %v116 = vunpack.c.l.b16 %v30
  %v117 = vunpack.c.h.b16 %v30
  %v118 = vpack.c.b16 %v88, %v86
  %v119 = vpack.c.b16 %v89, %v87
  %v120 = vpack.c.b16 %v92, %v90
  %v121 = vpack.c.b16 %v93, %v91
  %v122 = vpack.c.b16 %v96, %v94
  %v123 = vpack.c.b16 %v97, %v95
  %v124 = vpack.c.b16 %v100, %v98
  %v125 = vpack.c.b16 %v101, %v99
  %v126 = vpack.c.b16 %v104, %v102
  %v127 = vpack.c.b16 %v105, %v103
  %v128 = vpack.c.b16 %v108, %v106
  %v129 = vpack.c.b16 %v109, %v107
  %v130 = vpack.c.b16 %v112, %v110
  %v131 = vpack.c.b16 %v113, %v111
  %v132 = vpack.c.b16 %v116, %v114
  %v133 = vpack.c.b16 %v117, %v115
  %v182 = vunpack.c.l.b16 %v31
  %v183 = vunpack.c.l.b16 %v32
  %v184 = vunpack.c.l.b16 %v33
  %v185 = vunpack.c.l.b16 %v34
  %v186 = vunpack.c.l.b16 %v35
  %v187 = vunpack.c.l.b16 %v36
  %v188 = vunpack.c.l.b16 %v37
  %v189 = vunpack.c.l.b16 %v38
  %v190 = vunpack.c.l.b16 %v39
  %v191 = vunpack.c.l.b16 %v40
  %v192 = vunpack.c.l.b16 %v41
  %v193 = vunpack.c.l.b16 %v42
  %v194 = vunpack.c.l.b16 %v43
  %v195 = vunpack.c.l.b16 %v44
  %v196 = vunpack.c.l.b16 %v45
  %v197 = vunpack.c.l.b16 %v46
  %v198 = vunpack.c.l.b16 %v47
  %v199 = vunpack.c.l.b16 %v48
  %v200 = vunpack.c.l.b16 %v49
  %v201 = vunpack.c.l.b16 %v50
  %v202 = vunpack.c.l.b16 %v51
  %v203 = vunpack.c.l.b16 %v52
  %v204 = vunpack.c.l.b16 %v53
  %v205 = vunpack.c.l.b16 %v54
  %v206 = vunpack.c.l.b16 %v55
  %v207 = vunpack.c.l.b16 %v56
  %v208 = vunpack.c.l.b16 %v57
  %v209 = vunpack.c.l.b16 %v58
  %v210 = vunpack.c.l.b16 %v59
  %v211 = vunpack.c.l.b16 %v60
  %v212 = vunpack.c.l.b16 %v61
  %v213 = vunpack.c.l.b16 %v62
  %v214 = vpack.c.b16 %v183, %v182
  %v215 = vpack.c.b16 %v185, %v184
  %v216 = vpack.c.b16 %v187, %v186
  %v217 = vpack.c.b16 %v189, %v188
  %v218 = vpack.c.b16 %v191, %v190
  %v219 = vpack.c.b16 %v193, %v192
  %v220 = vpack.c.b16 %v195, %v194
  %v221 = vpack.c.b16 %v197, %v196
  %v222 = vpack.c.b16 %v199, %v198
  %v223 = vpack.c.b16 %v201, %v200
  %v224 = vpack.c.b16 %v203, %v202
  %v225 = vpack.c.b16 %v205, %v204
  %v226 = vpack.c.b16 %v207, %v206
  %v227 = vpack.c.b16 %v209, %v208
  %v228 = vpack.c.b16 %v211, %v210
  %v229 = vpack.c.b16 %v213, %v212
  %246 = vmatprep.subr.bf16.mxu0 0
  %247 = vmatpush1.bf16.msra.mxu0 %v214
  %248 = vmatprep.subr.bf16.mxu0 0
  %249 = vmatpush1.bf16.msra.mxu0 %v215
  %250 = vmatprep.subr.bf16.mxu0 0
  %251 = vmatpush1.bf16.msra.mxu0 %v216
  %252 = vmatprep.subr.bf16.mxu0 0
  %253 = vmatpush1.bf16.msra.mxu0 %v217
  %254 = vmatprep.subr.bf16.mxu0 0
  %255 = vmatpush1.bf16.msra.mxu0 %v218
  %256 = vmatprep.subr.bf16.mxu0 0
  %257 = vmatpush1.bf16.msra.mxu0 %v219
  %258 = vmatprep.subr.bf16.mxu0 0
  %259 = vmatpush1.bf16.msra.mxu0 %v220
  %260 = vmatprep.subr.bf16.mxu0 0
  %261 = vmatpush1.bf16.msra.mxu0 %v221
  %262 = vmatprep.subr.bf16.mxu0 0
  %263 = vmatpush1.bf16.msra.mxu0 %v222
  %264 = vmatprep.subr.bf16.mxu0 0
  %265 = vmatpush1.bf16.msra.mxu0 %v223
  %266 = vmatprep.subr.bf16.mxu0 0
  %267 = vmatpush1.bf16.msra.mxu0 %v224
  %268 = vmatprep.subr.bf16.mxu0 0
  %269 = vmatpush1.bf16.msra.mxu0 %v225
  %270 = vmatprep.subr.bf16.mxu0 0
  %271 = vmatpush1.bf16.msra.mxu0 %v226
  %272 = vmatprep.subr.bf16.mxu0 0
  %273 = vmatpush1.bf16.msra.mxu0 %v227
  %274 = vmatprep.subr.bf16.mxu0 0
  %275 = vmatpush1.bf16.msra.mxu0 %v228
  %276 = vmatprep.subr.bf16.mxu0 0
  %277 = vmatpush1.bf16.msra.mxu0 %v229
  %278 = vmatprep.mubr.bf16.mxu0 %v119
  %279 = vmatmul.mubr.bf16.gmra.mrb[0].mxu0 %v118
  %v280 = vpop.f32.mrb[0].mxu0
  %v281 = vadd.f32 %v68, %v280
  %v282 = vpop.f32.mrb[0].mxu0
  %v283 = vpop.f32.mrb[0].mxu0
  %v284 = vadd.f32 %v68, %v283
  %v285 = vpop.f32.mrb[0].mxu0
  %286 = vmatprep.mubr.bf16.mxu0 %v121
  %287 = vmatmul.mubr.bf16.gmra.mrb[0].mxu0 %v120
  %v288 = vpop.f32.mrb[0].mxu0
  %v289 = vadd.f32 %v68, %v288
  %v290 = vpop.f32.mrb[0].mxu0
  %v291 = vpop.f32.mrb[0].mxu0
  %v292 = vadd.f32 %v68, %v291
  %v293 = vpop.f32.mrb[0].mxu0
  %294 = vmatprep.mubr.bf16.mxu0 %v123
  %295 = vmatmul.mubr.bf16.gmra.mrb[0].mxu0 %v122
  %v296 = vpop.f32.mrb[0].mxu0
  %v297 = vadd.f32 %v68, %v296
  %v298 = vpop.f32.mrb[0].mxu0
  %v299 = vpop.f32.mrb[0].mxu0
  %v300 = vadd.f32 %v68, %v299
  %v301 = vpop.f32.mrb[0].mxu0
  %302 = vmatprep.mubr.bf16.mxu0 %v125
  %303 = vmatmul.mubr.bf16.gmra.mrb[0].mxu0 %v124
  %v304 = vpop.f32.mrb[0].mxu0
  %v305 = vadd.f32 %v68, %v304
  %v306 = vpop.f32.mrb[0].mxu0
  %v307 = vpop.f32.mrb[0].mxu0
  %v308 = vadd.f32 %v68, %v307
  %v309 = vpop.f32.mrb[0].mxu0
  %310 = vmatprep.mubr.bf16.mxu0 %v127
  %311 = vmatmul.mubr.bf16.gmra.mrb[0].mxu0 %v126
  %v312 = vpop.f32.mrb[0].mxu0
  %v313 = vadd.f32 %v68, %v312
  %v314 = vpop.f32.mrb[0].mxu0
  %v315 = vpop.f32.mrb[0].mxu0
  %v316 = vadd.f32 %v68, %v315
  %v317 = vpop.f32.mrb[0].mxu0
  %318 = vmatprep.mubr.bf16.mxu0 %v129
  %319 = vmatmul.mubr.bf16.gmra.mrb[0].mxu0 %v128
  %v320 = vpop.f32.mrb[0].mxu0
  %v321 = vadd.f32 %v68, %v320
  %v322 = vpop.f32.mrb[0].mxu0
  %v323 = vpop.f32.mrb[0].mxu0
  %v324 = vadd.f32 %v68, %v323
  %v325 = vpop.f32.mrb[0].mxu0
  %326 = vmatprep.mubr.bf16.mxu0 %v131
  %327 = vmatmul.mubr.bf16.gmra.mrb[0].mxu0 %v130
  %v328 = vpop.f32.mrb[0].mxu0
  %v329 = vadd.f32 %v68, %v328
  %v330 = vpop.f32.mrb[0].mxu0
  %v331 = vpop.f32.mrb[0].mxu0
  %v332 = vadd.f32 %v68, %v331
  %v333 = vpop.f32.mrb[0].mxu0
  %334 = vmatprep.mubr.bf16.mxu0 %v133
  %335 = vmatmul.mubr.bf16.gmra.mrb[0].mxu0 %v132
  %v336 = vpop.f32.mrb[0].mxu0
  %v337 = vadd.f32 %v68, %v336
  %v338 = vpop.f32.mrb[0].mxu0
  %v339 = vpop.f32.mrb[0].mxu0
  %v340 = vadd.f32 %v68, %v339
  %v341 = vpop.f32.mrb[0].mxu0
  %342 = vdwg.mxu0
  %v343 = vmax.f32 %v281, 0.0
  %v344 = vmax.f32 %v284, 0.0
  %v345 = vmax.f32 %v289, 0.0
  %v346 = vmax.f32 %v292, 0.0
  %v347 = vmax.f32 %v297, 0.0
  %v348 = vmax.f32 %v300, 0.0
  %v349 = vmax.f32 %v305, 0.0
  %v350 = vmax.f32 %v308, 0.0
  %v351 = vmax.f32 %v313, 0.0
  %v352 = vmax.f32 %v316, 0.0
  %v353 = vmax.f32 %v321, 0.0
  %v354 = vmax.f32 %v324, 0.0
  %v355 = vmax.f32 %v329, 0.0
  %v356 = vmax.f32 %v332, 0.0
  %v357 = vmax.f32 %v337, 0.0
  %v358 = vmax.f32 %v340, 0.0
  %v359 = vpack.c.bf16 %v344, %v343
  %v360 = vpack.c.bf16 %v346, %v345
  %v361 = vpack.c.bf16 %v348, %v347
  %v362 = vpack.c.bf16 %v350, %v349
  %v363 = vpack.c.bf16 %v352, %v351
  %v364 = vpack.c.bf16 %v354, %v353
  %v365 = vpack.c.bf16 %v356, %v355
  %v366 = vpack.c.bf16 %v358, %v357
  %v375 = vunpack.c.l.b16 %v359
  %v376 = vunpack.c.h.b16 %v359
  %v377 = vunpack.c.l.b16 %v360
  %v378 = vunpack.c.h.b16 %v360
  %v379 = vunpack.c.l.b16 %v361
  %v380 = vunpack.c.h.b16 %v361
  %v381 = vunpack.c.l.b16 %v362
  %v382 = vunpack.c.h.b16 %v362
  %v383 = vunpack.c.l.b16 %v363
  %v384 = vunpack.c.h.b16 %v363
  %v385 = vunpack.c.l.b16 %v364
  %v386 = vunpack.c.h.b16 %v364
  %v387 = vunpack.c.l.b16 %v365
  %v388 = vunpack.c.h.b16 %v365
  %v389 = vunpack.c.l.b16 %v366
  %v390 = vunpack.c.h.b16 %v366
  %v391 = vpack.c.b16 %v375, %v375
  %v392 = vpack.c.b16 %v376, %v376
  %v393 = vpack.c.b16 %v377, %v377
  %v394 = vpack.c.b16 %v378, %v378
  %v395 = vpack.c.b16 %v379, %v379
  %v396 = vpack.c.b16 %v380, %v380
  %v397 = vpack.c.b16 %v381, %v381
  %v398 = vpack.c.b16 %v382, %v382
  %v399 = vpack.c.b16 %v383, %v383
  %v400 = vpack.c.b16 %v384, %v384
  %v401 = vpack.c.b16 %v385, %v385
  %v402 = vpack.c.b16 %v386, %v386
  %v403 = vpack.c.b16 %v387, %v387
  %v404 = vpack.c.b16 %v388, %v388
  %v405 = vpack.c.b16 %v389, %v389
  %v406 = vpack.c.b16 %v390, %v390
  %423 = vst [vmem:[%s3] sm:$0xf] %v391
  %424 = vst [vmem:[%s3 + $0x4] sm:$0xf] %v392
  %425 = vst [vmem:[%s3 + $0x8] sm:$0xf] %v393
  %426 = vst [vmem:[%s3 + $0xc] sm:$0xf] %v394
  %427 = vst [vmem:[%s3 + $0x10] sm:$0xf] %v395
  %428 = vst [vmem:[%s3 + $0x14] sm:$0xf] %v396
  %429 = vst [vmem:[%s3 + $0x18] sm:$0xf] %v397
  %430 = vst [vmem:[%s3 + $0x1c] sm:$0xf] %v398
  %431 = vst [vmem:[%s3 + $0x20] sm:$0xf] %v399
  %432 = vst [vmem:[%s3 + $0x24] sm:$0xf] %v400
  %433 = vst [vmem:[%s3 + $0x28] sm:$0xf] %v401
  %434 = vst [vmem:[%s3 + $0x2c] sm:$0xf] %v402
  %435 = vst [vmem:[%s3 + $0x30] sm:$0xf] %v403
  %436 = vst [vmem:[%s3 + $0x34] sm:$0xf] %v404
  %437 = vst [vmem:[%s3 + $0x38] sm:$0xf] %v405
  %438 = vst [vmem:[%s3 + $0x3c] sm:$0xf] %v406
  // Predicated region
  $region14: #{_lambda_.10} parent=0 // pred_check
    _
  $region15: #{_lambda_.10} parent=0 // pred_check_branch
    %440 = sbr.rel (0) target = $region17
  $region16: #{_lambda_.10} parent=0 // pred_region
    _
  $region17: #{_lambda_.10} parent=0 // pred_fallthru
    _
  // Predicated region
  $region18: #{_lambda_.10} parent=0 // pred_check
    _
  $region19: #{_lambda_.10} parent=0 // pred_check_branch
    %442 = sbr.rel (0) target = $region21
  $region20: #{_lambda_.10} parent=0 // pred_region
    _
  $region21: #{_lambda_.10} parent=0 // pred_fallthru
    _

// kernel: _lambda_.11
$region0: #{_lambda_.11}
  #allocation0 [shape = 'u32[]', space=smem, size = 0x4, offset = 0x4, fixed_abs, tag = 'smem constant byte address 0x4 - core index']
  #allocation1 [shape = 'u32[144,128]{1,0:T(1,128)}', space=vmem, size = 0x12000, scoped, tag = 'internal scratch']
  %s0 = inlined_call_operand.vmem [shape: bf16[128,384], index: 0, kind: input, shape index: {}]
  %s1 = inlined_call_operand.vmem [shape: bf16[384,128], index: 1, kind: input, shape index: {}]
  %s2 = inlined_call_operand.vmem [shape: f32[1,128], index: 2, kind: input, shape index: {}]
  %s3 = inlined_call_operand.vmem [shape: bf16[128,128], index: 3, kind: output, shape index: {}]
  %s4 = sld [smem:[#allocation0]]
  $region22: #{_lambda_.11} parent=0
    _
  %s6 = ssub.s32 1, %s4
  %s7 = scalar_select 0, %s6, %s4
  // Predicated region
  $region2: #{_lambda_.11} parent=0 // pred_check
    _
  $region3: #{_lambda_.11} parent=0 // pred_check_branch
    %9 = sbr.rel (0) target = $region5
  $region4: #{_lambda_.11} parent=0 // pred_region
    _
  $region5: #{_lambda_.11} parent=0 // pred_fallthru
    _
  // Predicated region
  $region6: #{_lambda_.11} parent=0 // pred_check
    _
  $region7: #{_lambda_.11} parent=0 // pred_check_branch
    %11 = sbr.rel (0) target = $region9
  $region8: #{_lambda_.11} parent=0 // pred_region
    _
  $region9: #{_lambda_.11} parent=0 // pred_fallthru
    _
  // Predicated region
  $region10: #{_lambda_.11} parent=0 // pred_check
    _
  $region11: #{_lambda_.11} parent=0 // pred_check_branch
    %13 = sbr.rel (0) target = $region13
  $region12: #{_lambda_.11} parent=0 // pred_region
    _
  $region13: #{_lambda_.11} parent=0 // pred_fallthru
    _
  %v15 = vld [vmem:[%s0] sm:$0xff]
  %v16 = vld [vmem:[%s0 + $0x8] sm:$0xf]
  %v17 = vld [vmem:[%s0 + $0xc] sm:$0xff]
  %v18 = vld [vmem:[%s0 + $0x14] sm:$0xf]
  %v19 = vld [vmem:[%s0 + $0x18] sm:$0xff]
  %v20 = vld [vmem:[%s0 + $0x20] sm:$0xf]
  %v21 = vld [vmem:[%s0 + $0x24] sm:$0xff]
  %v22 = vld [vmem:[%s0 + $0x2c] sm:$0xf]
  %v23 = vld [vmem:[%s0 + $0x30] sm:$0xff]
  %v24 = vld [vmem:[%s0 + $0x38] sm:$0xf]
  %v25 = vld [vmem:[%s0 + $0x3c] sm:$0xff]
  %v26 = vld [vmem:[%s0 + $0x44] sm:$0xf]
  %v27 = vld [vmem:[%s0 + $0x48] sm:$0xff]
  %v28 = vld [vmem:[%s0 + $0x50] sm:$0xf]
  %v29 = vld [vmem:[%s0 + $0x54] sm:$0xff]
  %v30 = vld [vmem:[%s0 + $0x5c] sm:$0xf]
  %v31 = vld [vmem:[%s0 + $0x60] sm:$0xff]
  %v32 = vld [vmem:[%s0 + $0x68] sm:$0xf]
  %v33 = vld [vmem:[%s0 + $0x6c] sm:$0xff]
  %v34 = vld [vmem:[%s0 + $0x74] sm:$0xf]
  %v35 = vld [vmem:[%s0 + $0x78] sm:$0xff]
  %v36 = vld [vmem:[%s0 + $0x80] sm:$0xf]
  %v37 = vld [vmem:[%s0 + $0x84] sm:$0xff]
  %v38 = vld [vmem:[%s0 + $0x8c] sm:$0xf]
  %v39 = vld [vmem:[%s0 + $0x90] sm:$0xff]
  %v40 = vld [vmem:[%s0 + $0x98] sm:$0xf]
  %v41 = vld [vmem:[%s0 + $0x9c] sm:$0xff]
  %v42 = vld [vmem:[%s0 + $0xa4] sm:$0xf]
  %v43 = vld [vmem:[%s0 + $0xa8] sm:$0xff]
  %v44 = vld [vmem:[%s0 + $0xb0] sm:$0xf]
  %v45 = vld [vmem:[%s0 + $0xb4] sm:$0xff]
  %v46 = vld [vmem:[%s0 + $0xbc] sm:$0xf]
  %v47 = vld [vmem:[%s1] sm:$0xf]
  %v48 = vld [vmem:[%s1 + $0x4] sm:$0xf]
  %v49 = vld [vmem:[%s1 + $0x8] sm:$0xf]
  %v50 = vld [vmem:[%s1 + $0xc] sm:$0xf]
  %v51 = vld [vmem:[%s1 + $0x10] sm:$0xf]
  %v52 = vld [vmem:[%s1 + $0x14] sm:$0xf]
  %v53 = vld [vmem:[%s1 + $0x18] sm:$0xf]
  %v54 = vld [vmem:[%s1 + $0x1c] sm:$0xf]
  %v55 = vld [vmem:[%s1 + $0x20] sm:$0xf]
  %v56 = vld [vmem:[%s1 + $0x24] sm:$0xf]
  %v57 = vld [vmem:[%s1 + $0x28] sm:$0xf]
  %v58 = vld [vmem:[%s1 + $0x2c] sm:$0xf]
  %v59 = vld [vmem:[%s1 + $0x30] sm:$0xf]
  %v60 = vld [vmem:[%s1 + $0x34] sm:$0xf]
  %v61 = vld [vmem:[%s1 + $0x38] sm:$0xf]
  %v62 = vld [vmem:[%s1 + $0x3c] sm:$0xf]
  %v63 = vld [vmem:[%s1 + $0x40] sm:$0xf]
  %v64 = vld [vmem:[%s1 + $0x44] sm:$0xf]
  %v65 = vld [vmem:[%s1 + $0x48] sm:$0xf]
  %v66 = vld [vmem:[%s1 + $0x4c] sm:$0xf]
  %v67 = vld [vmem:[%s1 + $0x50] sm:$0xf]
  %v68 = vld [vmem:[%s1 + $0x54] sm:$0xf]
  %v69 = vld [vmem:[%s1 + $0x58] sm:$0xf]
  %v70 = vld [vmem:[%s1 + $0x5c] sm:$0xf]
  %v71 = vld [vmem:[%s1 + $0x60] sm:$0xf]
  %v72 = vld [vmem:[%s1 + $0x64] sm:$0xf]
  %v73 = vld [vmem:[%s1 + $0x68] sm:$0xf]
  %v74 = vld [vmem:[%s1 + $0x6c] sm:$0xf]
  %v75 = vld [vmem:[%s1 + $0x70] sm:$0xf]
  %v76 = vld [vmem:[%s1 + $0x74] sm:$0xf]
  %v77 = vld [vmem:[%s1 + $0x78] sm:$0xf]
  %v78 = vld [vmem:[%s1 + $0x7c] sm:$0xf]
  %v79 = vld [vmem:[%s1 + $0x80] sm:$0xf]
  %v80 = vld [vmem:[%s1 + $0x84] sm:$0xf]
  %v81 = vld [vmem:[%s1 + $0x88] sm:$0xf]
  %v82 = vld [vmem:[%s1 + $0x8c] sm:$0xf]
  %v83 = vld [vmem:[%s1 + $0x90] sm:$0xf]
  %v84 = vld [vmem:[%s1 + $0x94] sm:$0xf]
  %v85 = vld [vmem:[%s1 + $0x98] sm:$0xf]
  %v86 = vld [vmem:[%s1 + $0x9c] sm:$0xf]
  %v87 = vld [vmem:[%s1 + $0xa0] sm:$0xf]
  %v88 = vld [vmem:[%s1 + $0xa4] sm:$0xf]
  %v89 = vld [vmem:[%s1 + $0xa8] sm:$0xf]
  %v90 = vld [vmem:[%s1 + $0xac] sm:$0xf]
  %v91 = vld [vmem:[%s1 + $0xb0] sm:$0xf]
  %v92 = vld [vmem:[%s1 + $0xb4] sm:$0xf]
  %v93 = vld [vmem:[%s1 + $0xb8] sm:$0xf]
  %v94 = vld [vmem:[%s1 + $0xbc] sm:$0xf]
  %v95 = vld [vmem:[%s2] sm:$0x1]
  %v97 = vlaneseq
  %v98 = vshrl.u32 %v97, 7
  %v99 = vsub.s32 0, %v98
  %v100 = vrot.slane %v95, %v99
  %v134 = vunpack.c.l.b16 %v15
  %v135 = vunpack.c.h.b16 %v15
  %v136 = vunpack.c.l.b16 %v16
  %v137 = vunpack.c.l.b16 %v17
  %v138 = vunpack.c.h.b16 %v17
  %v139 = vunpack.c.l.b16 %v18
  %v140 = vunpack.c.l.b16 %v19
  %v141 = vunpack.c.h.b16 %v19
  %v142 = vunpack.c.l.b16 %v20
  %v143 = vunpack.c.l.b16 %v21
  %v144 = vunpack.c.h.b16 %v21
  %v145 = vunpack.c.l.b16 %v22
  %v146 = vunpack.c.l.b16 %v23
  %v147 = vunpack.c.h.b16 %v23
  %v148 = vunpack.c.l.b16 %v24
  %v149 = vunpack.c.l.b16 %v25
  %v150 = vunpack.c.h.b16 %v25
  %v151 = vunpack.c.l.b16 %v26
  %v152 = vunpack.c.l.b16 %v27
  %v153 = vunpack.c.h.b16 %v27
  %v154 = vunpack.c.l.b16 %v28
  %v155 = vunpack.c.l.b16 %v29
  %v156 = vunpack.c.h.b16 %v29
  %v157 = vunpack.c.l.b16 %v30
  %v158 = vunpack.c.l.b16 %v31
  %v159 = vunpack.c.h.b16 %v31
  %v160 = vunpack.c.l.b16 %v32
  %v161 = vunpack.c.l.b16 %v33
  %v162 = vunpack.c.h.b16 %v33
  %v163 = vunpack.c.l.b16 %v34
  %v164 = vunpack.c.l.b16 %v35
  %v165 = vunpack.c.h.b16 %v35
  %v166 = vunpack.c.l.b16 %v36
  %v167 = vunpack.c.l.b16 %v37
  %v168 = vunpack.c.h.b16 %v37
  %v169 = vunpack.c.l.b16 %v38
  %v170 = vunpack.c.l.b16 %v39
  %v171 = vunpack.c.h.b16 %v39
  %v172 = vunpack.c.l.b16 %v40
  %v173 = vunpack.c.l.b16 %v41
  %v174 = vunpack.c.h.b16 %v41
  %v175 = vunpack.c.l.b16 %v42
  %v176 = vunpack.c.l.b16 %v43
  %v177 = vunpack.c.h.b16 %v43
  %v178 = vunpack.c.l.b16 %v44
  %v179 = vunpack.c.l.b16 %v45
  %v180 = vunpack.c.h.b16 %v45
  %v181 = vunpack.c.l.b16 %v46
  %v182 = vpack.c.b16 %v137, %v134
  %v183 = vpack.c.b16 %v138, %v135
  %v184 = vpack.c.b16 %v139, %v136
  %v185 = vpack.c.b16 %v143, %v140
  %v186 = vpack.c.b16 %v144, %v141
  %v187 = vpack.c.b16 %v145, %v142
  %v188 = vpack.c.b16 %v149, %v146
  %v189 = vpack.c.b16 %v150, %v147
  %v190 = vpack.c.b16 %v151, %v148
  %v191 = vpack.c.b16 %v155, %v152
  %v192 = vpack.c.b16 %v156, %v153
  %v193 = vpack.c.b16 %v157, %v154
  %v194 = vpack.c.b16 %v161, %v158
  %v195 = vpack.c.b16 %v162, %v159
  %v196 = vpack.c.b16 %v163, %v160
  %v197 = vpack.c.b16 %v167, %v164
  %v198 = vpack.c.b16 %v168, %v165
  %v199 = vpack.c.b16 %v169, %v166
  %v200 = vpack.c.b16 %v173, %v170
  %v201 = vpack.c.b16 %v174, %v171
  %v202 = vpack.c.b16 %v175, %v172
  %v203 = vpack.c.b16 %v179, %v176
  %v204 = vpack.c.b16 %v180, %v177
  %v205 = vpack.c.b16 %v181, %v178
  %v278 = vunpack.c.l.b16 %v47
  %v279 = vunpack.c.l.b16 %v48
  %v280 = vunpack.c.l.b16 %v49
  %v281 = vunpack.c.l.b16 %v50
  %v282 = vunpack.c.l.b16 %v51
  %v283 = vunpack.c.l.b16 %v52
  %v284 = vunpack.c.l.b16 %v53
  %v285 = vunpack.c.l.b16 %v54
  %v286 = vunpack.c.l.b16 %v55
  %v287 = vunpack.c.l.b16 %v56
  %v288 = vunpack.c.l.b16 %v57
  %v289 = vunpack.c.l.b16 %v58
  %v290 = vunpack.c.l.b16 %v59
  %v291 = vunpack.c.l.b16 %v60
  %v292 = vunpack.c.l.b16 %v61
  %v293 = vunpack.c.l.b16 %v62
  %v294 = vunpack.c.l.b16 %v63
  %v295 = vunpack.c.l.b16 %v64
  %v296 = vunpack.c.l.b16 %v65
  %v297 = vunpack.c.l.b16 %v66
  %v298 = vunpack.c.l.b16 %v67
  %v299 = vunpack.c.l.b16 %v68
  %v300 = vunpack.c.l.b16 %v69
  %v301 = vunpack.c.l.b16 %v70
  %v302 = vunpack.c.l.b16 %v71
  %v303 = vunpack.c.l.b16 %v72
  %v304 = vunpack.c.l.b16 %v73
  %v305 = vunpack.c.l.b16 %v74
  %v306 = vunpack.c.l.b16 %v75
  %v307 = vunpack.c.l.b16 %v76
  %v308 = vunpack.c.l.b16 %v77
  %v309 = vunpack.c.l.b16 %v78
  %v310 = vunpack.c.l.b16 %v79
  %v311 = vunpack.c.l.b16 %v80
  %v312 = vunpack.c.l.b16 %v81
  %v313 = vunpack.c.l.b16 %v82
  %v314 = vunpack.c.l.b16 %v83
  %v315 = vunpack.c.l.b16 %v84
  %v316 = vunpack.c.l.b16 %v85
  %v317 = vunpack.c.l.b16 %v86
  %v318 = vunpack.c.l.b16 %v87
  %v319 = vunpack.c.l.b16 %v88
  %v320 = vunpack.c.l.b16 %v89
  %v321 = vunpack.c.l.b16 %v90
  %v322 = vunpack.c.l.b16 %v91
  %v323 = vunpack.c.l.b16 %v92
  %v324 = vunpack.c.l.b16 %v93
  %v325 = vunpack.c.l.b16 %v94
  %v326 = vpack.c.b16 %v279, %v278
  %v327 = vpack.c.b16 %v281, %v280
  %v328 = vpack.c.b16 %v283, %v282
  %v329 = vpack.c.b16 %v285, %v284
  %v330 = vpack.c.b16 %v287, %v286
  %v331 = vpack.c.b16 %v289, %v288
  %v332 = vpack.c.b16 %v291, %v290
  %v333 = vpack.c.b16 %v293, %v292
  %v334 = vpack.c.b16 %v295, %v294
  %v335 = vpack.c.b16 %v297, %v296
  %v336 = vpack.c.b16 %v299, %v298
  %v337 = vpack.c.b16 %v301, %v300
  %v338 = vpack.c.b16 %v303, %v302
  %v339 = vpack.c.b16 %v305, %v304
  %v340 = vpack.c.b16 %v307, %v306
  %v341 = vpack.c.b16 %v309, %v308
  %v342 = vpack.c.b16 %v311, %v310
  %v343 = vpack.c.b16 %v313, %v312
  %v344 = vpack.c.b16 %v315, %v314
  %v345 = vpack.c.b16 %v317, %v316
  %v346 = vpack.c.b16 %v319, %v318
  %v347 = vpack.c.b16 %v321, %v320
  %v348 = vpack.c.b16 %v323, %v322
  %v349 = vpack.c.b16 %v325, %v324
  %374 = vmatprep.subr.bf16.mxu0 0
  %375 = vmatpush1.bf16.msra.mxu0 %v326
  %376 = vmatprep.subr.bf16.mxu0 0
  %377 = vmatpush1.bf16.msra.mxu0 %v327
  %378 = vmatprep.subr.bf16.mxu0 0
  %379 = vmatpush1.bf16.msra.mxu0 %v328
  %380 = vmatprep.subr.bf16.mxu0 0
  %381 = vmatpush1.bf16.msra.mxu0 %v329
  %382 = vmatprep.subr.bf16.mxu0 0
  %383 = vmatpush1.bf16.msra.mxu0 %v330
  %384 = vmatprep.subr.bf16.mxu0 0
  %385 = vmatpush1.bf16.msra.mxu0 %v331
  %386 = vmatprep.subr.bf16.mxu0 0
  %387 = vmatpush1.bf16.msra.mxu0 %v332
  %388 = vmatprep.subr.bf16.mxu0 0
  %389 = vmatpush1.bf16.msra.mxu0 %v333
  %390 = vmatprep.subr.bf16.mxu0 0
  %391 = vmatpush1.bf16.msra.mxu0 %v334
  %392 = vmatprep.subr.bf16.mxu0 0
  %393 = vmatpush1.bf16.msra.mxu0 %v335
  %394 = vmatprep.subr.bf16.mxu0 0
  %395 = vmatpush1.bf16.msra.mxu0 %v336
  %396 = vmatprep.subr.bf16.mxu0 0
  %397 = vmatpush1.bf16.msra.mxu0 %v337
  %398 = vmatprep.subr.bf16.mxu0 0
  %399 = vmatpush1.bf16.msra.mxu0 %v338
  %400 = vmatprep.subr.bf16.mxu0 0
  %401 = vmatpush1.bf16.msra.mxu0 %v339
  %402 = vmatprep.subr.bf16.mxu0 0
  %403 = vmatpush1.bf16.msra.mxu0 %v340
  %404 = vmatprep.subr.bf16.mxu0 0
  %405 = vmatpush1.bf16.msra.mxu0 %v341
  %406 = vmatprep.mubr.bf16.mxu0 %v183
  %407 = vmatmul.mubr.bf16.gmra.mrb[0].mxu0 %v182
  %v408 = vpop.f32.mrb[0].mxu0
  %v409 = vadd.f32 %v100, %v408
  %v410 = vpop.f32.mrb[0].mxu0
  %v411 = vpop.f32.mrb[0].mxu0
  %v412 = vadd.f32 %v100, %v411
  %v413 = vpop.f32.mrb[0].mxu0
  %414 = vmatprep.mubr.bf16.mxu0 %v186
  %415 = vmatmul.mubr.bf16.gmra.mrb[0].mxu0 %v185
  %v416 = vpop.f32.mrb[0].mxu0
  %v417 = vadd.f32 %v100, %v416
  %v418 = vpop.f32.mrb[0].mxu0
  %v419 = vpop.f32.mrb[0].mxu0
  %v420 = vadd.f32 %v100, %v419
  %v421 = vpop.f32.mrb[0].mxu0
  %422 = vmatprep.mubr.bf16.mxu0 %v189
  %423 = vmatmul.mubr.bf16.gmra.mrb[0].mxu0 %v188
  %v424 = vpop.f32.mrb[0].mxu0
  %v425 = vadd.f32 %v100, %v424
  %v426 = vpop.f32.mrb[0].mxu0
  %v427 = vpop.f32.mrb[0].mxu0
  %v428 = vadd.f32 %v100, %v427
  %v429 = vpop.f32.mrb[0].mxu0
  %430 = vmatprep.mubr.bf16.mxu0 %v192
  %431 = vmatmul.mubr.bf16.gmra.mrb[0].mxu0 %v191
  %v432 = vpop.f32.mrb[0].mxu0
  %v433 = vadd.f32 %v100, %v432
  %v434 = vpop.f32.mrb[0].mxu0
  %v435 = vpop.f32.mrb[0].mxu0
  %v436 = vadd.f32 %v100, %v435
  %v437 = vpop.f32.mrb[0].mxu0
  %438 = vmatprep.mubr.bf16.mxu0 %v195
  %439 = vmatmul.mubr.bf16.gmra.mrb[0].mxu0 %v194
  %v440 = vpop.f32.mrb[0].mxu0
  %v441 = vadd.f32 %v100, %v440
  %v442 = vpop.f32.mrb[0].mxu0
  %v443 = vpop.f32.mrb[0].mxu0
  %v444 = vadd.f32 %v100, %v443
  %v445 = vpop.f32.mrb[0].mxu0
  %446 = vmatprep.mubr.bf16.mxu0 %v198
  %447 = vmatmul.mubr.bf16.gmra.mrb[0].mxu0 %v197
  %v448 = vpop.f32.mrb[0].mxu0
  %v449 = vadd.f32 %v100, %v448
  %v450 = vpop.f32.mrb[0].mxu0
  %v451 = vpop.f32.mrb[0].mxu0
  %v452 = vadd.f32 %v100, %v451
  %v453 = vpop.f32.mrb[0].mxu0
  %454 = vmatprep.mubr.bf16.mxu0 %v201
  %455 = vmatmul.mubr.bf16.gmra.mrb[0].mxu0 %v200
  %v456 = vpop.f32.mrb[0].mxu0
  %v457 = vadd.f32 %v100, %v456
  %v458 = vpop.f32.mrb[0].mxu0
  %v459 = vpop.f32.mrb[0].mxu0
  %v460 = vadd.f32 %v100, %v459
  %v461 = vpop.f32.mrb[0].mxu0
  %462 = vmatprep.mubr.bf16.mxu0 %v204
  %463 = vmatmul.mubr.bf16.gmra.mrb[0].mxu0 %v203
  %v464 = vpop.f32.mrb[0].mxu0
  %v465 = vadd.f32 %v100, %v464
  %v466 = vpop.f32.mrb[0].mxu0
  %v467 = vpop.f32.mrb[0].mxu0
  %v468 = vadd.f32 %v100, %v467
  %v469 = vpop.f32.mrb[0].mxu0
  %470 = vdwg.mxu0
  %471 = vmatprep.subr.bf16.mxu0 0
  %472 = vmatpush1.bf16.msra.mxu0 %v342
  %473 = vmatprep.subr.bf16.mxu0 0
  %474 = vmatpush1.bf16.msra.mxu0 %v343
  %475 = vmatprep.subr.bf16.mxu0 0
  %476 = vmatpush1.bf16.msra.mxu0 %v344
  %477 = vmatprep.subr.bf16.mxu0 0
  %478 = vmatpush1.bf16.msra.mxu0 %v345
  %479 = vmatprep.subr.bf16.mxu0 0
  %480 = vmatpush1.bf16.msra.mxu0 %v346
  %481 = vmatprep.subr.bf16.mxu0 0
  %482 = vmatpush1.bf16.msra.mxu0 %v347
  %483 = vmatprep.subr.bf16.mxu0 0
  %484 = vmatpush1.bf16.msra.mxu0 %v348
  %485 = vmatprep.subr.bf16.mxu0 0
  %486 = vmatpush1.bf16.msra.mxu0 %v349
  %487 = vmatprep.subr.bf16.mxu0 0
  %488 = vmatpush1.bf16.msra.mxu0 0
  %489 = vmatprep.subr.bf16.mxu0 0
  %490 = vmatpush1.bf16.msra.mxu0 0
  %491 = vmatprep.subr.bf16.mxu0 0
  %492 = vmatpush1.bf16.msra.mxu0 0
  %493 = vmatprep.subr.bf16.mxu0 0
  %494 = vmatpush1.bf16.msra.mxu0 0
  %495 = vmatprep.subr.bf16.mxu0 0
  %496 = vmatpush1.bf16.msra.mxu0 0
  %497 = vmatprep.subr.bf16.mxu0 0
  %498 = vmatpush1.bf16.msra.mxu0 0
  %499 = vmatprep.subr.bf16.mxu0 0
  %500 = vmatpush1.bf16.msra.mxu0 0
  %501 = vmatprep.subr.bf16.mxu0 0
  %502 = vmatpush1.bf16.msra.mxu0 0
  %503 = vmatprep.mubr.bf16.mxu0 0
  %504 = vmatmul.mubr.bf16.gmra.mrb[0].mxu0 %v184
  %v505 = vpop.f32.mrb[0].mxu0
  %v506 = vadd.f32 %v409, %v505
  %v507 = vpop.f32.mrb[0].mxu0
  %v508 = vpop.f32.mrb[0].mxu0
  %v509 = vadd.f32 %v412, %v508
  %v510 = vpop.f32.mrb[0].mxu0
  %511 = vmatprep.mubr.bf16.mxu0 0
  %512 = vmatmul.mubr.bf16.gmra.mrb[0].mxu0 %v187
  %v513 = vpop.f32.mrb[0].mxu0
  %v514 = vadd.f32 %v417, %v513
  %v515 = vpop.f32.mrb[0].mxu0
  %v516 = vpop.f32.mrb[0].mxu0
  %v517 = vadd.f32 %v420, %v516
  %v518 = vpop.f32.mrb[0].mxu0
  %519 = vmatprep.mubr.bf16.mxu0 0
  %520 = vmatmul.mubr.bf16.gmra.mrb[0].mxu0 %v190
  %v521 = vpop.f32.mrb[0].mxu0
  %v522 = vadd.f32 %v425, %v521
  %v523 = vpop.f32.mrb[0].mxu0
  %v524 = vpop.f32.mrb[0].mxu0
  %v525 = vadd.f32 %v428, %v524
  %v526 = vpop.f32.mrb[0].mxu0
  %527 = vmatprep.mubr.bf16.mxu0 0
  %528 = vmatmul.mubr.bf16.gmra.mrb[0].mxu0 %v193
  %v529 = vpop.f32.mrb[0].mxu0
  %v530 = vadd.f32 %v433, %v529
  %v531 = vpop.f32.mrb[0].mxu0
  %v532 = vpop.f32.mrb[0].mxu0
  %v533 = vadd.f32 %v436, %v532
  %v534 = vpop.f32.mrb[0].mxu0
  %535 = vmatprep.mubr.bf16.mxu0 0
  %536 = vmatmul.mubr.bf16.gmra.mrb[0].mxu0 %v196
  %v537 = vpop.f32.mrb[0].mxu0
  %v538 = vadd.f32 %v441, %v537
  %v539 = vpop.f32.mrb[0].mxu0
  %v540 = vpop.f32.mrb[0].mxu0
  %v541 = vadd.f32 %v444, %v540
  %v542 = vpop.f32.mrb[0].mxu0
  %543 = vmatprep.mubr.bf16.mxu0 0
  %544 = vmatmul.mubr.bf16.gmra.mrb[0].mxu0 %v199
  %v545 = vpop.f32.mrb[0].mxu0
  %v546 = vadd.f32 %v449, %v545
  %v547 = vpop.f32.mrb[0].mxu0
  %v548 = vpop.f32.mrb[0].mxu0
  %v549 = vadd.f32 %v452, %v548
  %v550 = vpop.f32.mrb[0].mxu0
  %551 = vmatprep.mubr.bf16.mxu0 0
  %552 = vmatmul.mubr.bf16.gmra.mrb[0].mxu0 %v202
  %v553 = vpop.f32.mrb[0].mxu0
  %v554 = vadd.f32 %v457, %v553
  %v555 = vpop.f32.mrb[0].mxu0
  %v556 = vpop.f32.mrb[0].mxu0
  %v557 = vadd.f32 %v460, %v556
  %v558 = vpop.f32.mrb[0].mxu0
  %559 = vmatprep.mubr.bf16.mxu0 0
  %560 = vmatmul.mubr.bf16.gmra.mrb[0].mxu0 %v205
  %v561 = vpop.f32.mrb[0].mxu0
  %v562 = vadd.f32 %v465, %v561
  %v563 = vpop.f32.mrb[0].mxu0
  %v564 = vpop.f32.mrb[0].mxu0
  %v565 = vadd.f32 %v468, %v564
  %v566 = vpop.f32.mrb[0].mxu0
  %567 = vdwg.mxu0
  %v568 = vmax.f32 %v506, 0.0
  %v569 = vmax.f32 %v509, 0.0
  %v570 = vmax.f32 %v514, 0.0
  %v571 = vmax.f32 %v517, 0.0
  %v572 = vmax.f32 %v522, 0.0
  %v573 = vmax.f32 %v525, 0.0
  %v574 = vmax.f32 %v530, 0.0
  %v575 = vmax.f32 %v533, 0.0
  %v576 = vmax.f32 %v538, 0.0
  %v577 = vmax.f32 %v541, 0.0
  %v578 = vmax.f32 %v546, 0.0
  %v579 = vmax.f32 %v549, 0.0
  %v580 = vmax.f32 %v554, 0.0
  %v581 = vmax.f32 %v557, 0.0
  %v582 = vmax.f32 %v562, 0.0
  %v583 = vmax.f32 %v565, 0.0
  %v584 = vpack.c.bf16 %v569, %v568
  %v585 = vpack.c.bf16 %v571, %v570
  %v586 = vpack.c.bf16 %v573, %v572
  %v587 = vpack.c.bf16 %v575, %v574
  %v588 = vpack.c.bf16 %v577, %v576
  %v589 = vpack.c.bf16 %v579, %v578
  %v590 = vpack.c.bf16 %v581, %v580
  %v591 = vpack.c.bf16 %v583, %v582
  %v600 = vunpack.c.l.b16 %v584
  %v601 = vunpack.c.h.b16 %v584
  %v602 = vunpack.c.l.b16 %v585
  %v603 = vunpack.c.h.b16 %v585
  %v604 = vunpack.c.l.b16 %v586
  %v605 = vunpack.c.h.b16 %v586
  %v606 = vunpack.c.l.b16 %v587
  %v607 = vunpack.c.h.b16 %v587
  %v608 = vunpack.c.l.b16 %v588
  %v609 = vunpack.c.h.b16 %v588
  %v610 = vunpack.c.l.b16 %v589
  %v611 = vunpack.c.h.b16 %v589
  %v612 = vunpack.c.l.b16 %v590
  %v613 = vunpack.c.h.b16 %v590
  %v614 = vunpack.c.l.b16 %v591
  %v615 = vunpack.c.h.b16 %v591
  %v616 = vpack.c.b16 %v600, %v600
  %v617 = vpack.c.b16 %v601, %v601
  %v618 = vpack.c.b16 %v602, %v602
  %v619 = vpack.c.b16 %v603, %v603
  %v620 = vpack.c.b16 %v604, %v604
  %v621 = vpack.c.b16 %v605, %v605
  %v622 = vpack.c.b16 %v606, %v606
  %v623 = vpack.c.b16 %v607, %v607
  %v624 = vpack.c.b16 %v608, %v608
  %v625 = vpack.c.b16 %v609, %v609
  %v626 = vpack.c.b16 %v610, %v610
  %v627 = vpack.c.b16 %v611, %v611
  %v628 = vpack.c.b16 %v612, %v612
  %v629 = vpack.c.b16 %v613, %v613
  %v630 = vpack.c.b16 %v614, %v614
  %v631 = vpack.c.b16 %v615, %v615
  %648 = vst [vmem:[%s3] sm:$0xf] %v616
  %649 = vst [vmem:[%s3 + $0x4] sm:$0xf] %v617
  %650 = vst [vmem:[%s3 + $0x8] sm:$0xf] %v618
  %651 = vst [vmem:[%s3 + $0xc] sm:$0xf] %v619
  %652 = vst [vmem:[%s3 + $0x10] sm:$0xf] %v620
  %653 = vst [vmem:[%s3 + $0x14] sm:$0xf] %v621
  %654 = vst [vmem:[%s3 + $0x18] sm:$0xf] %v622
  %655 = vst [vmem:[%s3 + $0x1c] sm:$0xf] %v623
  %656 = vst [vmem:[%s3 + $0x20] sm:$0xf] %v624
  %657 = vst [vmem:[%s3 + $0x24] sm:$0xf] %v625
  %658 = vst [vmem:[%s3 + $0x28] sm:$0xf] %v626
  %659 = vst [vmem:[%s3 + $0x2c] sm:$0xf] %v627
  %660 = vst [vmem:[%s3 + $0x30] sm:$0xf] %v628
  %661 = vst [vmem:[%s3 + $0x34] sm:$0xf] %v629
  %662 = vst [vmem:[%s3 + $0x38] sm:$0xf] %v630
  %663 = vst [vmem:[%s3 + $0x3c] sm:$0xf] %v631
  // Predicated region
  $region14: #{_lambda_.11} parent=0 // pred_check
    _
  $region15: #{_lambda_.11} parent=0 // pred_check_branch
    %665 = sbr.rel (0) target = $region17
  $region16: #{_lambda_.11} parent=0 // pred_region
    _
  $region17: #{_lambda_.11} parent=0 // pred_fallthru
    _
  // Predicated region
  $region18: #{_lambda_.11} parent=0 // pred_check
    _
  $region19: #{_lambda_.11} parent=0 // pred_check_branch
    %667 = sbr.rel (0) target = $region21
  $region20: #{_lambda_.11} parent=0 // pred_region
    _
  $region21: #{_lambda_.11} parent=0 // pred_fallthru
    _

// kernel: _lambda_.13
$region0: #{_lambda_.13}
  #allocation0 [shape = 'u32[]', space=smem, size = 0x4, offset = 0x4, fixed_abs, tag = 'smem constant byte address 0x4 - core index']
  #allocation1 [shape = 'u32[144,128]{1,0:T(1,128)}', space=vmem, size = 0x12000, scoped, tag = 'internal scratch']
  %s0 = inlined_call_operand.vmem [shape: bf16[128,640], index: 0, kind: input, shape index: {}]
  %s1 = inlined_call_operand.vmem [shape: bf16[640,128], index: 1, kind: input, shape index: {}]
  %s2 = inlined_call_operand.vmem [shape: f32[1,128], index: 2, kind: input, shape index: {}]
  %s3 = inlined_call_operand.vmem [shape: bf16[128,128], index: 3, kind: output, shape index: {}]
  %s4 = sld [smem:[#allocation0]]
  $region22: #{_lambda_.13} parent=0
    _
  %s6 = ssub.s32 1, %s4
  %s7 = scalar_select 0, %s6, %s4
  // Predicated region
  $region2: #{_lambda_.13} parent=0 // pred_check
    _
  $region3: #{_lambda_.13} parent=0 // pred_check_branch
    %9 = sbr.rel (0) target = $region5
  $region4: #{_lambda_.13} parent=0 // pred_region
    _
  $region5: #{_lambda_.13} parent=0 // pred_fallthru
    _
  // Predicated region
  $region6: #{_lambda_.13} parent=0 // pred_check
    _
  $region7: #{_lambda_.13} parent=0 // pred_check_branch
    %11 = sbr.rel (0) target = $region9
  $region8: #{_lambda_.13} parent=0 // pred_region
    _
  $region9: #{_lambda_.13} parent=0 // pred_fallthru
    _
  // Predicated region
  $region10: #{_lambda_.13} parent=0 // pred_check
    _
  $region11: #{_lambda_.13} parent=0 // pred_check_branch
    %13 = sbr.rel (0) target = $region13
  $region12: #{_lambda_.13} parent=0 // pred_region
    _
  $region13: #{_lambda_.13} parent=0 // pred_fallthru
    _
  %v15 = vld [vmem:[%s0] sm:$0xff]
  %v16 = vld [vmem:[%s0 + $0x8] sm:$0xff]
  %v17 = vld [vmem:[%s0 + $0x10] sm:$0xf]
  %v18 = vld [vmem:[%s0 + $0x14] sm:$0xff]
  %v19 = vld [vmem:[%s0 + $0x1c] sm:$0xff]
  %v20 = vld [vmem:[%s0 + $0x24] sm:$0xf]
  %v21 = vld [vmem:[%s0 + $0x28] sm:$0xff]
  %v22 = vld [vmem:[%s0 + $0x30] sm:$0xff]
  %v23 = vld [vmem:[%s0 + $0x38] sm:$0xf]
  %v24 = vld [vmem:[%s0 + $0x3c] sm:$0xff]
  %v25 = vld [vmem:[%s0 + $0x44] sm:$0xff]
  %v26 = vld [vmem:[%s0 + $0x4c] sm:$0xf]
  %v27 = vld [vmem:[%s0 + $0x50] sm:$0xff]
  %v28 = vld [vmem:[%s0 + $0x58] sm:$0xff]
  %v29 = vld [vmem:[%s0 + $0x60] sm:$0xf]
  %v30 = vld [vmem:[%s0 + $0x64] sm:$0xff]
  %v31 = vld [vmem:[%s0 + $0x6c] sm:$0xff]
  %v32 = vld [vmem:[%s0 + $0x74] sm:$0xf]
  %v33 = vld [vmem:[%s0 + $0x78] sm:$0xff]
  %v34 = vld [vmem:[%s0 + $0x80] sm:$0xff]
  %v35 = vld [vmem:[%s0 + $0x88] sm:$0xf]
  %v36 = vld [vmem:[%s0 + $0x8c] sm:$0xff]
  %v37 = vld [vmem:[%s0 + $0x94] sm:$0xff]
  %v38 = vld [vmem:[%s0 + $0x9c] sm:$0xf]
  %v39 = vld [vmem:[%s0 + $0xa0] sm:$0xff]
  %v40 = vld [vmem:[%s0 + $0xa8] sm:$0xff]
  %v41 = vld [vmem:[%s0 + $0xb0] sm:$0xf]
  %v42 = vld [vmem:[%s0 + $0xb4] sm:$0xff]
  %v43 = vld [vmem:[%s0 + $0xbc] sm:$0xff]
  %v44 = vld [vmem:[%s0 + $0xc4] sm:$0xf]
  %v45 = vld [vmem:[%s0 + $0xc8] sm:$0xff]
  %v46 = vld [vmem:[%s0 + $0xd0] sm:$0xff]
  %v47 = vld [vmem:[%s0 + $0xd8] sm:$0xf]
  %v48 = vld [vmem:[%s0 + $0xdc] sm:$0xff]
  %v49 = vld [vmem:[%s0 + $0xe4] sm:$0xff]
  %v50 = vld [vmem:[%s0 + $0xec] sm:$0xf]
  %v51 = vld [vmem:[%s0 + $0xf0] sm:$0xff]
  %v52 = vld [vmem:[%s0 + $0xf8] sm:$0xff]
  %v53 = vld [vmem:[%s0 + $0x100] sm:$0xf]
  %v54 = vld [vmem:[%s0 + $0x104] sm:$0xff]
  %v55 = vld [vmem:[%s0 + $0x10c] sm:$0xff]
  %v56 = vld [vmem:[%s0 + $0x114] sm:$0xf]
  %v57 = vld [vmem:[%s0 + $0x118] sm:$0xff]
  %v58 = vld [vmem:[%s0 + $0x120] sm:$0xff]
  %v59 = vld [vmem:[%s0 + $0x128] sm:$0xf]
  %v60 = vld [vmem:[%s0 + $0x12c] sm:$0xff]
  %v61 = vld [vmem:[%s0 + $0x134] sm:$0xff]
  %v62 = vld [vmem:[%s0 + $0x13c] sm:$0xf]
  %v63 = vld [vmem:[%s1] sm:$0xf]
  %v64 = vld [vmem:[%s1 + $0x4] sm:$0xf]
  %v65 = vld [vmem:[%s1 + $0x8] sm:$0xf]
  %v66 = vld [vmem:[%s1 + $0xc] sm:$0xf]
  %v67 = vld [vmem:[%s1 + $0x10] sm:$0xf]
  %v68 = vld [vmem:[%s1 + $0x14] sm:$0xf]
  %v69 = vld [vmem:[%s1 + $0x18] sm:$0xf]
  %v70 = vld [vmem:[%s1 + $0x1c] sm:$0xf]
  %v71 = vld [vmem:[%s1 + $0x20] sm:$0xf]
  %v72 = vld [vmem:[%s1 + $0x24] sm:$0xf]
  %v73 = vld [vmem:[%s1 + $0x28] sm:$0xf]
  %v74 = vld [vmem:[%s1 + $0x2c] sm:$0xf]
  %v75 = vld [vmem:[%s1 + $0x30] sm:$0xf]
  %v76 = vld [vmem:[%s1 + $0x34] sm:$0xf]
  %v77 = vld [vmem:[%s1 + $0x38] sm:$0xf]
  %v78 = vld [vmem:[%s1 + $0x3c] sm:$0xf]
  %v79 = vld [vmem:[%s1 + $0x40] sm:$0xf]
  %v80 = vld [vmem:[%s1 + $0x44] sm:$0xf]
  %v81 = vld [vmem:[%s1 + $0x48] sm:$0xf]
  %v82 = vld [vmem:[%s1 + $0x4c] sm:$0xf]
  %v83 = vld [vmem:[%s1 + $0x50] sm:$0xf]
  %v84 = vld [vmem:[%s1 + $0x54] sm:$0xf]
  %v85 = vld [vmem:[%s1 + $0x58] sm:$0xf]
  %v86 = vld [vmem:[%s1 + $0x5c] sm:$0xf]
  %v87 = vld [vmem:[%s1 + $0x60] sm:$0xf]
  %v88 = vld [vmem:[%s1 + $0x64] sm:$0xf]
  %v89 = vld [vmem:[%s1 + $0x68] sm:$0xf]
  %v90 = vld [vmem:[%s1 + $0x6c] sm:$0xf]
  %v91 = vld [vmem:[%s1 + $0x70] sm:$0xf]
  %v92 = vld [vmem:[%s1 + $0x74] sm:$0xf]
  %v93 = vld [vmem:[%s1 + $0x78] sm:$0xf]
  %v94 = vld [vmem:[%s1 + $0x7c] sm:$0xf]
  %v95 = vld [vmem:[%s1 + $0x80] sm:$0xf]
  %v96 = vld [vmem:[%s1 + $0x84] sm:$0xf]
  %v97 = vld [vmem:[%s1 + $0x88] sm:$0xf]
  %v98 = vld [vmem:[%s1 + $0x8c] sm:$0xf]
  %v99 = vld [vmem:[%s1 + $0x90] sm:$0xf]
  %v100 = vld [vmem:[%s1 + $0x94] sm:$0xf]
  %v101 = vld [vmem:[%s1 + $0x98] sm:$0xf]
  %v102 = vld [vmem:[%s1 + $0x9c] sm:$0xf]
  %v103 = vld [vmem:[%s1 + $0xa0] sm:$0xf]
  %v104 = vld [vmem:[%s1 + $0xa4] sm:$0xf]
  %v105 = vld [vmem:[%s1 + $0xa8] sm:$0xf]
  %v106 = vld [vmem:[%s1 + $0xac] sm:$0xf]
  %v107 = vld [vmem:[%s1 + $0xb0] sm:$0xf]
  %v108 = vld [vmem:[%s1 + $0xb4] sm:$0xf]
  %v109 = vld [vmem:[%s1 + $0xb8] sm:$0xf]
  %v110 = vld [vmem:[%s1 + $0xbc] sm:$0xf]
  %v111 = vld [vmem:[%s1 + $0xc0] sm:$0xf]
  %v112 = vld [vmem:[%s1 + $0xc4] sm:$0xf]
  %v113 = vld [vmem:[%s1 + $0xc8] sm:$0xf]
  %v114 = vld [vmem:[%s1 + $0xcc] sm:$0xf]
  %v115 = vld [vmem:[%s1 + $0xd0] sm:$0xf]
  %v116 = vld [vmem:[%s1 + $0xd4] sm:$0xf]
  %v117 = vld [vmem:[%s1 + $0xd8] sm:$0xf]
  %v118 = vld [vmem:[%s1 + $0xdc] sm:$0xf]
  %v119 = vld [vmem:[%s1 + $0xe0] sm:$0xf]
  %v120 = vld [vmem:[%s1 + $0xe4] sm:$0xf]
  %v121 = vld [vmem:[%s1 + $0xe8] sm:$0xf]
  %v122 = vld [vmem:[%s1 + $0xec] sm:$0xf]
  %v123 = vld [vmem:[%s1 + $0xf0] sm:$0xf]
  %v124 = vld [vmem:[%s1 + $0xf4] sm:$0xf]
  %v125 = vld [vmem:[%s1 + $0xf8] sm:$0xf]
  %v126 = vld [vmem:[%s1 + $0xfc] sm:$0xf]
  %v127 = vld [vmem:[%s1 + $0x100] sm:$0xf]
  %v128 = vld [vmem:[%s1 + $0x104] sm:$0xf]
  %v129 = vld [vmem:[%s1 + $0x108] sm:$0xf]
  %v130 = vld [vmem:[%s1 + $0x10c] sm:$0xf]
  %v131 = vld [vmem:[%s1 + $0x110] sm:$0xf]
  %v132 = vld [vmem:[%s1 + $0x114] sm:$0xf]
  %v133 = vld [vmem:[%s1 + $0x118] sm:$0xf]
  %v134 = vld [vmem:[%s1 + $0x11c] sm:$0xf]
  %v135 = vld [vmem:[%s1 + $0x120] sm:$0xf]
  %v136 = vld [vmem:[%s1 + $0x124] sm:$0xf]
  %v137 = vld [vmem:[%s1 + $0x128] sm:$0xf]
  %v138 = vld [vmem:[%s1 + $0x12c] sm:$0xf]
  %v139 = vld [vmem:[%s1 + $0x130] sm:$0xf]
  %v140 = vld [vmem:[%s1 + $0x134] sm:$0xf]
  %v141 = vld [vmem:[%s1 + $0x138] sm:$0xf]
  %v142 = vld [vmem:[%s1 + $0x13c] sm:$0xf]
  %v143 = vld [vmem:[%s2] sm:$0x1]
  %v145 = vlaneseq
  %v146 = vshrl.u32 %v145, 7
  %v147 = vsub.s32 0, %v146
  %v148 = vrot.slane %v143, %v147
  %v198 = vunpack.c.l.b16 %v15
  %v199 = vunpack.c.h.b16 %v15
  %v200 = vunpack.c.l.b16 %v16
  %v201 = vunpack.c.h.b16 %v16
  %v202 = vunpack.c.l.b16 %v17
  %v203 = vunpack.c.l.b16 %v18
  %v204 = vunpack.c.h.b16 %v18
  %v205 = vunpack.c.l.b16 %v19
  %v206 = vunpack.c.h.b16 %v19
  %v207 = vunpack.c.l.b16 %v20
  %v208 = vunpack.c.l.b16 %v21
  %v209 = vunpack.c.h.b16 %v21
  %v210 = vunpack.c.l.b16 %v22
  %v211 = vunpack.c.h.b16 %v22
  %v212 = vunpack.c.l.b16 %v23
  %v213 = vunpack.c.l.b16 %v24
  %v214 = vunpack.c.h.b16 %v24
  %v215 = vunpack.c.l.b16 %v25
  %v216 = vunpack.c.h.b16 %v25
  %v217 = vunpack.c.l.b16 %v26
  %v218 = vunpack.c.l.b16 %v27
  %v219 = vunpack.c.h.b16 %v27
  %v220 = vunpack.c.l.b16 %v28
  %v221 = vunpack.c.h.b16 %v28
  %v222 = vunpack.c.l.b16 %v29
  %v223 = vunpack.c.l.b16 %v30
  %v224 = vunpack.c.h.b16 %v30
  %v225 = vunpack.c.l.b16 %v31
  %v226 = vunpack.c.h.b16 %v31
  %v227 = vunpack.c.l.b16 %v32
  %v228 = vunpack.c.l.b16 %v33
  %v229 = vunpack.c.h.b16 %v33
  %v230 = vunpack.c.l.b16 %v34
  %v231 = vunpack.c.h.b16 %v34
  %v232 = vunpack.c.l.b16 %v35
  %v233 = vunpack.c.l.b16 %v36
  %v234 = vunpack.c.h.b16 %v36
  %v235 = vunpack.c.l.b16 %v37
  %v236 = vunpack.c.h.b16 %v37
  %v237 = vunpack.c.l.b16 %v38
  %v238 = vunpack.c.l.b16 %v39
  %v239 = vunpack.c.h.b16 %v39
  %v240 = vunpack.c.l.b16 %v40
  %v241 = vunpack.c.h.b16 %v40
  %v242 = vunpack.c.l.b16 %v41
  %v243 = vunpack.c.l.b16 %v42
  %v244 = vunpack.c.h.b16 %v42
  %v245 = vunpack.c.l.b16 %v43
  %v246 = vunpack.c.h.b16 %v43
  %v247 = vunpack.c.l.b16 %v44
  %v248 = vunpack.c.l.b16 %v45
  %v249 = vunpack.c.h.b16 %v45
  %v250 = vunpack.c.l.b16 %v46
  %v251 = vunpack.c.h.b16 %v46
  %v252 = vunpack.c.l.b16 %v47
  %v253 = vunpack.c.l.b16 %v48
  %v254 = vunpack.c.h.b16 %v48
  %v255 = vunpack.c.l.b16 %v49
  %v256 = vunpack.c.h.b16 %v49
  %v257 = vunpack.c.l.b16 %v50
  %v258 = vunpack.c.l.b16 %v51
  %v259 = vunpack.c.h.b16 %v51
  %v260 = vunpack.c.l.b16 %v52
  %v261 = vunpack.c.h.b16 %v52
  %v262 = vunpack.c.l.b16 %v53
  %v263 = vunpack.c.l.b16 %v54
  %v264 = vunpack.c.h.b16 %v54
  %v265 = vunpack.c.l.b16 %v55
  %v266 = vunpack.c.h.b16 %v55
  %v267 = vunpack.c.l.b16 %v56
  %v268 = vunpack.c.l.b16 %v57
  %v269 = vunpack.c.h.b16 %v57
  %v270 = vunpack.c.l.b16 %v58
  %v271 = vunpack.c.h.b16 %v58
  %v272 = vunpack.c.l.b16 %v59
  %v273 = vunpack.c.l.b16 %v60
  %v274 = vunpack.c.h.b16 %v60
  %v275 = vunpack.c.l.b16 %v61
  %v276 = vunpack.c.h.b16 %v61
  %v277 = vunpack.c.l.b16 %v62
  %v278 = vpack.c.b16 %v203, %v198
  %v279 = vpack.c.b16 %v204, %v199
  %v280 = vpack.c.b16 %v205, %v200
  %v281 = vpack.c.b16 %v206, %v201
  %v282 = vpack.c.b16 %v207, %v202
  %v283 = vpack.c.b16 %v213, %v208
  %v284 = vpack.c.b16 %v214, %v209
  %v285 = vpack.c.b16 %v215, %v210
  %v286 = vpack.c.b16 %v216, %v211
  %v287 = vpack.c.b16 %v217, %v212
  %v288 = vpack.c.b16 %v223, %v218
  %v289 = vpack.c.b16 %v224, %v219
  %v290 = vpack.c.b16 %v225, %v220
  %v291 = vpack.c.b16 %v226, %v221
  %v292 = vpack.c.b16 %v227, %v222
  %v293 = vpack.c.b16 %v233, %v228
  %v294 = vpack.c.b16 %v234, %v229
  %v295 = vpack.c.b16 %v235, %v230
  %v296 = vpack.c.b16 %v236, %v231
  %v297 = vpack.c.b16 %v237, %v232
  %v298 = vpack.c.b16 %v243, %v238
  %v299 = vpack.c.b16 %v244, %v239
  %v300 = vpack.c.b16 %v245, %v240
  %v301 = vpack.c.b16 %v246, %v241
  %v302 = vpack.c.b16 %v247, %v242
  %v303 = vpack.c.b16 %v253, %v248
  %v304 = vpack.c.b16 %v254, %v249
  %v305 = vpack.c.b16 %v255, %v250
  %v306 = vpack.c.b16 %v256, %v251
  %v307 = vpack.c.b16 %v257, %v252
  %v308 = vpack.c.b16 %v263, %v258
  %v309 = vpack.c.b16 %v264, %v259
  %v310 = vpack.c.b16 %v265, %v260
  %v311 = vpack.c.b16 %v266, %v261
  %v312 = vpack.c.b16 %v267, %v262
  %v313 = vpack.c.b16 %v273, %v268
  %v314 = vpack.c.b16 %v274, %v269
  %v315 = vpack.c.b16 %v275, %v270
  %v316 = vpack.c.b16 %v276, %v271
  %v317 = vpack.c.b16 %v277, %v272
  %v438 = vunpack.c.l.b16 %v63
  %v439 = vunpack.c.l.b16 %v64
  %v440 = vunpack.c.l.b16 %v65
  %v441 = vunpack.c.l.b16 %v66
  %v442 = vunpack.c.l.b16 %v67
  %v443 = vunpack.c.l.b16 %v68
  %v444 = vunpack.c.l.b16 %v69
  %v445 = vunpack.c.l.b16 %v70
  %v446 = vunpack.c.l.b16 %v71
  %v447 = vunpack.c.l.b16 %v72
  %v448 = vunpack.c.l.b16 %v73
  %v449 = vunpack.c.l.b16 %v74
  %v450 = vunpack.c.l.b16 %v75
  %v451 = vunpack.c.l.b16 %v76
  %v452 = vunpack.c.l.b16 %v77
  %v453 = vunpack.c.l.b16 %v78
  %v454 = vunpack.c.l.b16 %v79
  %v455 = vunpack.c.l.b16 %v80
  %v456 = vunpack.c.l.b16 %v81
  %v457 = vunpack.c.l.b16 %v82
  %v458 = vunpack.c.l.b16 %v83
  %v459 = vunpack.c.l.b16 %v84
  %v460 = vunpack.c.l.b16 %v85
  %v461 = vunpack.c.l.b16 %v86
  %v462 = vunpack.c.l.b16 %v87
  %v463 = vunpack.c.l.b16 %v88
  %v464 = vunpack.c.l.b16 %v89
  %v465 = vunpack.c.l.b16 %v90
  %v466 = vunpack.c.l.b16 %v91
  %v467 = vunpack.c.l.b16 %v92
  %v468 = vunpack.c.l.b16 %v93
  %v469 = vunpack.c.l.b16 %v94
  %v470 = vunpack.c.l.b16 %v95
  %v471 = vunpack.c.l.b16 %v96
  %v472 = vunpack.c.l.b16 %v97
  %v473 = vunpack.c.l.b16 %v98
  %v474 = vunpack.c.l.b16 %v99
  %v475 = vunpack.c.l.b16 %v100
  %v476 = vunpack.c.l.b16 %v101
  %v477 = vunpack.c.l.b16 %v102
  %v478 = vunpack.c.l.b16 %v103
  %v479 = vunpack.c.l.b16 %v104
  %v480 = vunpack.c.l.b16 %v105
  %v481 = vunpack.c.l.b16 %v106
  %v482 = vunpack.c.l.b16 %v107
  %v483 = vunpack.c.l.b16 %v108
  %v484 = vunpack.c.l.b16 %v109
  %v485 = vunpack.c.l.b16 %v110
  %v486 = vunpack.c.l.b16 %v111
  %v487 = vunpack.c.l.b16 %v112
  %v488 = vunpack.c.l.b16 %v113
  %v489 = vunpack.c.l.b16 %v114
  %v490 = vunpack.c.l.b16 %v115
  %v491 = vunpack.c.l.b16 %v116
  %v492 = vunpack.c.l.b16 %v117
  %v493 = vunpack.c.l.b16 %v118
  %v494 = vunpack.c.l.b16 %v119
  %v495 = vunpack.c.l.b16 %v120
  %v496 = vunpack.c.l.b16 %v121
  %v497 = vunpack.c.l.b16 %v122
  %v498 = vunpack.c.l.b16 %v123
  %v499 = vunpack.c.l.b16 %v124
  %v500 = vunpack.c.l.b16 %v125
  %v501 = vunpack.c.l.b16 %v126
  %v502 = vunpack.c.l.b16 %v127
  %v503 = vunpack.c.l.b16 %v128
  %v504 = vunpack.c.l.b16 %v129
  %v505 = vunpack.c.l.b16 %v130
  %v506 = vunpack.c.l.b16 %v131
  %v507 = vunpack.c.l.b16 %v132
  %v508 = vunpack.c.l.b16 %v133
  %v509 = vunpack.c.l.b16 %v134
  %v510 = vunpack.c.l.b16 %v135
  %v511 = vunpack.c.l.b16 %v136
  %v512 = vunpack.c.l.b16 %v137
  %v513 = vunpack.c.l.b16 %v138
  %v514 = vunpack.c.l.b16 %v139
  %v515 = vunpack.c.l.b16 %v140
  %v516 = vunpack.c.l.b16 %v141
  %v517 = vunpack.c.l.b16 %v142
  %v518 = vpack.c.b16 %v439, %v438
  %v519 = vpack.c.b16 %v441, %v440
  %v520 = vpack.c.b16 %v443, %v442
  %v521 = vpack.c.b16 %v445, %v444
  %v522 = vpack.c.b16 %v447, %v446
  %v523 = vpack.c.b16 %v449, %v448
  %v524 = vpack.c.b16 %v451, %v450
  %v525 = vpack.c.b16 %v453, %v452
  %v526 = vpack.c.b16 %v455, %v454
  %v527 = vpack.c.b16 %v457, %v456
  %v528 = vpack.c.b16 %v459, %v458
  %v529 = vpack.c.b16 %v461, %v460
  %v530 = vpack.c.b16 %v463, %v462
  %v531 = vpack.c.b16 %v465, %v464
  %v532 = vpack.c.b16 %v467, %v466
  %v533 = vpack.c.b16 %v469, %v468
  %v534 = vpack.c.b16 %v471, %v470
  %v535 = vpack.c.b16 %v473, %v472
  %v536 = vpack.c.b16 %v475, %v474
  %v537 = vpack.c.b16 %v477, %v476
  %v538 = vpack.c.b16 %v479, %v478
  %v539 = vpack.c.b16 %v481, %v480
  %v540 = vpack.c.b16 %v483, %v482
  %v541 = vpack.c.b16 %v485, %v484
  %v542 = vpack.c.b16 %v487, %v486
  %v543 = vpack.c.b16 %v489, %v488
  %v544 = vpack.c.b16 %v491, %v490
  %v545 = vpack.c.b16 %v493, %v492
  %v546 = vpack.c.b16 %v495, %v494
  %v547 = vpack.c.b16 %v497, %v496
  %v548 = vpack.c.b16 %v499, %v498
  %v549 = vpack.c.b16 %v501, %v500
  %v550 = vpack.c.b16 %v503, %v502
  %v551 = vpack.c.b16 %v505, %v504
  %v552 = vpack.c.b16 %v507, %v506
  %v553 = vpack.c.b16 %v509, %v508
  %v554 = vpack.c.b16 %v511, %v510
  %v555 = vpack.c.b16 %v513, %v512
  %v556 = vpack.c.b16 %v515, %v514
  %v557 = vpack.c.b16 %v517, %v516
  %598 = vmatprep.subr.bf16.mxu0 0
  %599 = vmatpush1.bf16.msra.mxu0 %v518
  %600 = vmatprep.subr.bf16.mxu0 0
  %601 = vmatpush1.bf16.msra.mxu0 %v519
  %602 = vmatprep.subr.bf16.mxu0 0
  %603 = vmatpush1.bf16.msra.mxu0 %v520
  %604 = vmatprep.subr.bf16.mxu0 0
  %605 = vmatpush1.bf16.msra.mxu0 %v521
  %606 = vmatprep.subr.bf16.mxu0 0
  %607 = vmatpush1.bf16.msra.mxu0 %v522
  %608 = vmatprep.subr.bf16.mxu0 0
  %609 = vmatpush1.bf16.msra.mxu0 %v523
  %610 = vmatprep.subr.bf16.mxu0 0
  %611 = vmatpush1.bf16.msra.mxu0 %v524
  %612 = vmatprep.subr.bf16.mxu0 0
  %613 = vmatpush1.bf16.msra.mxu0 %v525
  %614 = vmatprep.subr.bf16.mxu0 0
  %615 = vmatpush1.bf16.msra.mxu0 %v526
  %616 = vmatprep.subr.bf16.mxu0 0
  %617 = vmatpush1.bf16.msra.mxu0 %v527
  %618 = vmatprep.subr.bf16.mxu0 0
  %619 = vmatpush1.bf16.msra.mxu0 %v528
  %620 = vmatprep.subr.bf16.mxu0 0
  %621 = vmatpush1.bf16.msra.mxu0 %v529
  %622 = vmatprep.subr.bf16.mxu0 0
  %623 = vmatpush1.bf16.msra.mxu0 %v530
  %624 = vmatprep.subr.bf16.mxu0 0
  %625 = vmatpush1.bf16.msra.mxu0 %v531
  %626 = vmatprep.subr.bf16.mxu0 0
  %627 = vmatpush1.bf16.msra.mxu0 %v532
  %628 = vmatprep.subr.bf16.mxu0 0
  %629 = vmatpush1.bf16.msra.mxu0 %v533
  %630 = vmatprep.mubr.bf16.mxu0 %v279
  %631 = vmatmul.mubr.bf16.gmra.mrb[0].mxu0 %v278
  %v632 = vpop.f32.mrb[0].mxu0
  %v633 = vadd.f32 %v148, %v632
  %v634 = vpop.f32.mrb[0].mxu0
  %v635 = vpop.f32.mrb[0].mxu0
  %v636 = vadd.f32 %v148, %v635
  %v637 = vpop.f32.mrb[0].mxu0
  %638 = vmatprep.mubr.bf16.mxu0 %v284
  %639 = vmatmul.mubr.bf16.gmra.mrb[0].mxu0 %v283
  %v640 = vpop.f32.mrb[0].mxu0
  %v641 = vadd.f32 %v148, %v640
  %v642 = vpop.f32.mrb[0].mxu0
  %v643 = vpop.f32.mrb[0].mxu0
  %v644 = vadd.f32 %v148, %v643
  %v645 = vpop.f32.mrb[0].mxu0
  %646 = vmatprep.mubr.bf16.mxu0 %v289
  %647 = vmatmul.mubr.bf16.gmra.mrb[0].mxu0 %v288
  %v648 = vpop.f32.mrb[0].mxu0
  %v649 = vadd.f32 %v148, %v648
  %v650 = vpop.f32.mrb[0].mxu0
  %v651 = vpop.f32.mrb[0].mxu0
  %v652 = vadd.f32 %v148, %v651
  %v653 = vpop.f32.mrb[0].mxu0
  %654 = vmatprep.mubr.bf16.mxu0 %v294
  %655 = vmatmul.mubr.bf16.gmra.mrb[0].mxu0 %v293
  %v656 = vpop.f32.mrb[0].mxu0
  %v657 = vadd.f32 %v148, %v656
  %v658 = vpop.f32.mrb[0].mxu0
  %v659 = vpop.f32.mrb[0].mxu0
  %v660 = vadd.f32 %v148, %v659
  %v661 = vpop.f32.mrb[0].mxu0
  %662 = vmatprep.mubr.bf16.mxu0 %v299
  %663 = vmatmul.mubr.bf16.gmra.mrb[0].mxu0 %v298
  %v664 = vpop.f32.mrb[0].mxu0
  %v665 = vadd.f32 %v148, %v664
  %v666 = vpop.f32.mrb[0].mxu0
  %v667 = vpop.f32.mrb[0].mxu0
  %v668 = vadd.f32 %v148, %v667
  %v669 = vpop.f32.mrb[0].mxu0
  %670 = vmatprep.mubr.bf16.mxu0 %v304
  %671 = vmatmul.mubr.bf16.gmra.mrb[0].mxu0 %v303
  %v672 = vpop.f32.mrb[0].mxu0
  %v673 = vadd.f32 %v148, %v672
  %v674 = vpop.f32.mrb[0].mxu0
  %v675 = vpop.f32.mrb[0].mxu0
  %v676 = vadd.f32 %v148, %v675
  %v677 = vpop.f32.mrb[0].mxu0
  %678 = vmatprep.mubr.bf16.mxu0 %v309
  %679 = vmatmul.mubr.bf16.gmra.mrb[0].mxu0 %v308
  %v680 = vpop.f32.mrb[0].mxu0
  %v681 = vadd.f32 %v148, %v680
  %v682 = vpop.f32.mrb[0].mxu0
  %v683 = vpop.f32.mrb[0].mxu0
  %v684 = vadd.f32 %v148, %v683
  %v685 = vpop.f32.mrb[0].mxu0
  %686 = vmatprep.mubr.bf16.mxu0 %v314
  %687 = vmatmul.mubr.bf16.gmra.mrb[0].mxu0 %v313
  %v688 = vpop.f32.mrb[0].mxu0
  %v689 = vadd.f32 %v148, %v688
  %v690 = vpop.f32.mrb[0].mxu0
  %v691 = vpop.f32.mrb[0].mxu0
  %v692 = vadd.f32 %v148, %v691
  %v693 = vpop.f32.mrb[0].mxu0
  %694 = vdwg.mxu0
  %695 = vmatprep.subr.bf16.mxu0 0
  %696 = vmatpush1.bf16.msra.mxu0 %v534
  %697 = vmatprep.subr.bf16.mxu0 0
  %698 = vmatpush1.bf16.msra.mxu0 %v535
  %699 = vmatprep.subr.bf16.mxu0 0
  %700 = vmatpush1.bf16.msra.mxu0 %v536
  %701 = vmatprep.subr.bf16.mxu0 0
  %702 = vmatpush1.bf16.msra.mxu0 %v537
  %703 = vmatprep.subr.bf16.mxu0 0
  %704 = vmatpush1.bf16.msra.mxu0 %v538
  %705 = vmatprep.subr.bf16.mxu0 0
  %706 = vmatpush1.bf16.msra.mxu0 %v539
  %707 = vmatprep.subr.bf16.mxu0 0
  %708 = vmatpush1.bf16.msra.mxu0 %v540
  %709 = vmatprep.subr.bf16.mxu0 0
  %710 = vmatpush1.bf16.msra.mxu0 %v541
  %711 = vmatprep.subr.bf16.mxu0 0
  %712 = vmatpush1.bf16.msra.mxu0 %v542
  %713 = vmatprep.subr.bf16.mxu0 0
  %714 = vmatpush1.bf16.msra.mxu0 %v543
  %715 = vmatprep.subr.bf16.mxu0 0
  %716 = vmatpush1.bf16.msra.mxu0 %v544
  %717 = vmatprep.subr.bf16.mxu0 0
  %718 = vmatpush1.bf16.msra.mxu0 %v545
  %719 = vmatprep.subr.bf16.mxu0 0
  %720 = vmatpush1.bf16.msra.mxu0 %v546
  %721 = vmatprep.subr.bf16.mxu0 0
  %722 = vmatpush1.bf16.msra.mxu0 %v547
  %723 = vmatprep.subr.bf16.mxu0 0
  %724 = vmatpush1.bf16.msra.mxu0 %v548
  %725 = vmatprep.subr.bf16.mxu0 0
  %726 = vmatpush1.bf16.msra.mxu0 %v549
  %727 = vmatprep.mubr.bf16.mxu0 %v281
  %728 = vmatmul.mubr.bf16.gmra.mrb[0].mxu0 %v280
  %v729 = vpop.f32.mrb[0].mxu0
  %v730 = vadd.f32 %v633, %v729
  %v731 = vpop.f32.mrb[0].mxu0
  %v732 = vpop.f32.mrb[0].mxu0
  %v733 = vadd.f32 %v636, %v732
  %v734 = vpop.f32.mrb[0].mxu0
  %735 = vmatprep.mubr.bf16.mxu0 %v286
  %736 = vmatmul.mubr.bf16.gmra.mrb[0].mxu0 %v285
  %v737 = vpop.f32.mrb[0].mxu0
  %v738 = vadd.f32 %v641, %v737
  %v739 = vpop.f32.mrb[0].mxu0
  %v740 = vpop.f32.mrb[0].mxu0
  %v741 = vadd.f32 %v644, %v740
  %v742 = vpop.f32.mrb[0].mxu0
  %743 = vmatprep.mubr.bf16.mxu0 %v291
  %744 = vmatmul.mubr.bf16.gmra.mrb[0].mxu0 %v290
  %v745 = vpop.f32.mrb[0].mxu0
  %v746 = vadd.f32 %v649, %v745
  %v747 = vpop.f32.mrb[0].mxu0
  %v748 = vpop.f32.mrb[0].mxu0
  %v749 = vadd.f32 %v652, %v748
  %v750 = vpop.f32.mrb[0].mxu0
  %751 = vmatprep.mubr.bf16.mxu0 %v296
  %752 = vmatmul.mubr.bf16.gmra.mrb[0].mxu0 %v295
  %v753 = vpop.f32.mrb[0].mxu0
  %v754 = vadd.f32 %v657, %v753
  %v755 = vpop.f32.mrb[0].mxu0
  %v756 = vpop.f32.mrb[0].mxu0
  %v757 = vadd.f32 %v660, %v756
  %v758 = vpop.f32.mrb[0].mxu0
  %759 = vmatprep.mubr.bf16.mxu0 %v301
  %760 = vmatmul.mubr.bf16.gmra.mrb[0].mxu0 %v300
  %v761 = vpop.f32.mrb[0].mxu0
  %v762 = vadd.f32 %v665, %v761
  %v763 = vpop.f32.mrb[0].mxu0
  %v764 = vpop.f32.mrb[0].mxu0
  %v765 = vadd.f32 %v668, %v764
  %v766 = vpop.f32.mrb[0].mxu0
  %767 = vmatprep.mubr.bf16.mxu0 %v306
  %768 = vmatmul.mubr.bf16.gmra.mrb[0].mxu0 %v305
  %v769 = vpop.f32.mrb[0].mxu0
  %v770 = vadd.f32 %v673, %v769
  %v771 = vpop.f32.mrb[0].mxu0
  %v772 = vpop.f32.mrb[0].mxu0
  %v773 = vadd.f32 %v676, %v772
  %v774 = vpop.f32.mrb[0].mxu0
  %775 = vmatprep.mubr.bf16.mxu0 %v311
  %776 = vmatmul.mubr.bf16.gmra.mrb[0].mxu0 %v310
  %v777 = vpop.f32.mrb[0].mxu0
  %v778 = vadd.f32 %v681, %v777
  %v779 = vpop.f32.mrb[0].mxu0
  %v780 = vpop.f32.mrb[0].mxu0
  %v781 = vadd.f32 %v684, %v780
  %v782 = vpop.f32.mrb[0].mxu0
  %783 = vmatprep.mubr.bf16.mxu0 %v316
  %784 = vmatmul.mubr.bf16.gmra.mrb[0].mxu0 %v315
  %v785 = vpop.f32.mrb[0].mxu0
  %v786 = vadd.f32 %v689, %v785
  %v787 = vpop.f32.mrb[0].mxu0
  %v788 = vpop.f32.mrb[0].mxu0
  %v789 = vadd.f32 %v692, %v788
  %v790 = vpop.f32.mrb[0].mxu0
  %791 = vdwg.mxu0
  %792 = vmatprep.subr.bf16.mxu0 0
  %793 = vmatpush1.bf16.msra.mxu0 %v550
  %794 = vmatprep.subr.bf16.mxu0 0
  %795 = vmatpush1.bf16.msra.mxu0 %v551
  %796 = vmatprep.subr.bf16.mxu0 0
  %797 = vmatpush1.bf16.msra.mxu0 %v552
  %798 = vmatprep.subr.bf16.mxu0 0
  %799 = vmatpush1.bf16.msra.mxu0 %v553
  %800 = vmatprep.subr.bf16.mxu0 0
  %801 = vmatpush1.bf16.msra.mxu0 %v554
  %802 = vmatprep.subr.bf16.mxu0 0
  %803 = vmatpush1.bf16.msra.mxu0 %v555
  %804 = vmatprep.subr.bf16.mxu0 0
  %805 = vmatpush1.bf16.msra.mxu0 %v556
  %806 = vmatprep.subr.bf16.mxu0 0
  %807 = vmatpush1.bf16.msra.mxu0 %v557
  %808 = vmatprep.subr.bf16.mxu0 0
  %809 = vmatpush1.bf16.msra.mxu0 0
  %810 = vmatprep.subr.bf16.mxu0 0
  %811 = vmatpush1.bf16.msra.mxu0 0
  %812 = vmatprep.subr.bf16.mxu0 0
  %813 = vmatpush1.bf16.msra.mxu0 0
  %814 = vmatprep.subr.bf16.mxu0 0
  %815 = vmatpush1.bf16.msra.mxu0 0
  %816 = vmatprep.subr.bf16.mxu0 0
  %817 = vmatpush1.bf16.msra.mxu0 0
  %818 = vmatprep.subr.bf16.mxu0 0
  %819 = vmatpush1.bf16.msra.mxu0 0
  %820 = vmatprep.subr.bf16.mxu0 0
  %821 = vmatpush1.bf16.msra.mxu0 0
  %822 = vmatprep.subr.bf16.mxu0 0
  %823 = vmatpush1.bf16.msra.mxu0 0
  %824 = vmatprep.mubr.bf16.mxu0 0
  %825 = vmatmul.mubr.bf16.gmra.mrb[0].mxu0 %v282
  %v826 = vpop.f32.mrb[0].mxu0
  %v827 = vadd.f32 %v730, %v826
  %v828 = vpop.f32.mrb[0].mxu0
  %v829 = vpop.f32.mrb[0].mxu0
  %v830 = vadd.f32 %v733, %v829
  %v831 = vpop.f32.mrb[0].mxu0
  %832 = vmatprep.mubr.bf16.mxu0 0
  %833 = vmatmul.mubr.bf16.gmra.mrb[0].mxu0 %v287
  %v834 = vpop.f32.mrb[0].mxu0
  %v835 = vadd.f32 %v738, %v834
  %v836 = vpop.f32.mrb[0].mxu0
  %v837 = vpop.f32.mrb[0].mxu0
  %v838 = vadd.f32 %v741, %v837
  %v839 = vpop.f32.mrb[0].mxu0
  %840 = vmatprep.mubr.bf16.mxu0 0
  %841 = vmatmul.mubr.bf16.gmra.mrb[0].mxu0 %v292
  %v842 = vpop.f32.mrb[0].mxu0
  %v843 = vadd.f32 %v746, %v842
  %v844 = vpop.f32.mrb[0].mxu0
  %v845 = vpop.f32.mrb[0].mxu0
  %v846 = vadd.f32 %v749, %v845
  %v847 = vpop.f32.mrb[0].mxu0
  %848 = vmatprep.mubr.bf16.mxu0 0
  %849 = vmatmul.mubr.bf16.gmra.mrb[0].mxu0 %v297
  %v850 = vpop.f32.mrb[0].mxu0
  %v851 = vadd.f32 %v754, %v850
  %v852 = vpop.f32.mrb[0].mxu0
  %v853 = vpop.f32.mrb[0].mxu0
  %v854 = vadd.f32 %v757, %v853
  %v855 = vpop.f32.mrb[0].mxu0
  %856 = vmatprep.mubr.bf16.mxu0 0
  %857 = vmatmul.mubr.bf16.gmra.mrb[0].mxu0 %v302
  %v858 = vpop.f32.mrb[0].mxu0
  %v859 = vadd.f32 %v762, %v858
  %v860 = vpop.f32.mrb[0].mxu0
  %v861 = vpop.f32.mrb[0].mxu0
  %v862 = vadd.f32 %v765, %v861
  %v863 = vpop.f32.mrb[0].mxu0
  %864 = vmatprep.mubr.bf16.mxu0 0
  %865 = vmatmul.mubr.bf16.gmra.mrb[0].mxu0 %v307
  %v866 = vpop.f32.mrb[0].mxu0
  %v867 = vadd.f32 %v770, %v866
  %v868 = vpop.f32.mrb[0].mxu0
  %v869 = vpop.f32.mrb[0].mxu0
  %v870 = vadd.f32 %v773, %v869
  %v871 = vpop.f32.mrb[0].mxu0
  %872 = vmatprep.mubr.bf16.mxu0 0
  %873 = vmatmul.mubr.bf16.gmra.mrb[0].mxu0 %v312
  %v874 = vpop.f32.mrb[0].mxu0
  %v875 = vadd.f32 %v778, %v874
  %v876 = vpop.f32.mrb[0].mxu0
  %v877 = vpop.f32.mrb[0].mxu0
  %v878 = vadd.f32 %v781, %v877
  %v879 = vpop.f32.mrb[0].mxu0
  %880 = vmatprep.mubr.bf16.mxu0 0
  %881 = vmatmul.mubr.bf16.gmra.mrb[0].mxu0 %v317
  %v882 = vpop.f32.mrb[0].mxu0
  %v883 = vadd.f32 %v786, %v882
  %v884 = vpop.f32.mrb[0].mxu0
  %v885 = vpop.f32.mrb[0].mxu0
  %v886 = vadd.f32 %v789, %v885
  %v887 = vpop.f32.mrb[0].mxu0
  %888 = vdwg.mxu0
  %v889 = vmax.f32 %v827, 0.0
  %v890 = vmax.f32 %v830, 0.0
  %v891 = vmax.f32 %v835, 0.0
  %v892 = vmax.f32 %v838, 0.0
  %v893 = vmax.f32 %v843, 0.0
  %v894 = vmax.f32 %v846, 0.0
  %v895 = vmax.f32 %v851, 0.0
  %v896 = vmax.f32 %v854, 0.0
  %v897 = vmax.f32 %v859, 0.0
  %v898 = vmax.f32 %v862, 0.0
  %v899 = vmax.f32 %v867, 0.0
  %v900 = vmax.f32 %v870, 0.0
  %v901 = vmax.f32 %v875, 0.0
  %v902 = vmax.f32 %v878, 0.0
  %v903 = vmax.f32 %v883, 0.0
  %v904 = vmax.f32 %v886, 0.0
  %v905 = vpack.c.bf16 %v890, %v889
  %v906 = vpack.c.bf16 %v892, %v891
  %v907 = vpack.c.bf16 %v894, %v893
  %v908 = vpack.c.bf16 %v896, %v895
  %v909 = vpack.c.bf16 %v898, %v897
  %v910 = vpack.c.bf16 %v900, %v899
  %v911 = vpack.c.bf16 %v902, %v901
  %v912 = vpack.c.bf16 %v904, %v903
  %v921 = vunpack.c.l.b16 %v905
  %v922 = vunpack.c.h.b16 %v905
  %v923 = vunpack.c.l.b16 %v906
  %v924 = vunpack.c.h.b16 %v906
  %v925 = vunpack.c.l.b16 %v907
  %v926 = vunpack.c.h.b16 %v907
  %v927 = vunpack.c.l.b16 %v908
  %v928 = vunpack.c.h.b16 %v908
  %v929 = vunpack.c.l.b16 %v909
  %v930 = vunpack.c.h.b16 %v909
  %v931 = vunpack.c.l.b16 %v910
  %v932 = vunpack.c.h.b16 %v910
  %v933 = vunpack.c.l.b16 %v911
  %v934 = vunpack.c.h.b16 %v911
  %v935 = vunpack.c.l.b16 %v912
  %v936 = vunpack.c.h.b16 %v912
  %v937 = vpack.c.b16 %v921, %v921
  %v938 = vpack.c.b16 %v922, %v922
  %v939 = vpack.c.b16 %v923, %v923
  %v940 = vpack.c.b16 %v924, %v924
  %v941 = vpack.c.b16 %v925, %v925
  %v942 = vpack.c.b16 %v926, %v926
  %v943 = vpack.c.b16 %v927, %v927
  %v944 = vpack.c.b16 %v928, %v928
  %v945 = vpack.c.b16 %v929, %v929
  %v946 = vpack.c.b16 %v930, %v930
  %v947 = vpack.c.b16 %v931, %v931
  %v948 = vpack.c.b16 %v932, %v932
  %v949 = vpack.c.b16 %v933, %v933
  %v950 = vpack.c.b16 %v934, %v934
  %v951 = vpack.c.b16 %v935, %v935
  %v952 = vpack.c.b16 %v936, %v936
  %969 = vst [vmem:[%s3] sm:$0xf] %v937
  %970 = vst [vmem:[%s3 + $0x4] sm:$0xf] %v938
  %971 = vst [vmem:[%s3 + $0x8] sm:$0xf] %v939
  %972 = vst [vmem:[%s3 + $0xc] sm:$0xf] %v940
  %973 = vst [vmem:[%s3 + $0x10] sm:$0xf] %v941
  %974 = vst [vmem:[%s3 + $0x14] sm:$0xf] %v942
  %975 = vst [vmem:[%s3 + $0x18] sm:$0xf] %v943
  %976 = vst [vmem:[%s3 + $0x1c] sm:$0xf] %v944
  %977 = vst [vmem:[%s3 + $0x20] sm:$0xf] %v945
  %978 = vst [vmem:[%s3 + $0x24] sm:$0xf] %v946
  %979 = vst [vmem:[%s3 + $0x28] sm:$0xf] %v947
  %980 = vst [vmem:[%s3 + $0x2c] sm:$0xf] %v948
  %981 = vst [vmem:[%s3 + $0x30] sm:$0xf] %v949
  %982 = vst [vmem:[%s3 + $0x34] sm:$0xf] %v950
  %983 = vst [vmem:[%s3 + $0x38] sm:$0xf] %v951
  %984 = vst [vmem:[%s3 + $0x3c] sm:$0xf] %v952
  // Predicated region
  $region14: #{_lambda_.13} parent=0 // pred_check
    _
  $region15: #{_lambda_.13} parent=0 // pred_check_branch
    %986 = sbr.rel (0) target = $region17
  $region16: #{_lambda_.13} parent=0 // pred_region
    _
  $region17: #{_lambda_.13} parent=0 // pred_fallthru
    _
  // Predicated region
  $region18: #{_lambda_.13} parent=0 // pred_check
    _
  $region19: #{_lambda_.13} parent=0 // pred_check_branch
    %988 = sbr.rel (0) target = $region21
  $region20: #{_lambda_.13} parent=0 // pred_region
    _
  $region21: #{_lambda_.13} parent=0 // pred_fallthru
    _

</llo_original>
